<compile_context>
chip_gen: v7x
topology: tpu7x:2x2x1
jax: 0.10.0
libtpu: 0.0.40
codegen_flags: <defaults>
</compile_context>

<pallas_src>
import jax
import jax.numpy as jnp
from jax import lax
from jax.experimental import pallas as pl
from jax.experimental.pallas import tpu as pltpu

LANES = 128  # pad all output channel / feature dims to full vreg lane width


def _round_up(x, m):
    return (x + m - 1) // m * m


# ---------------------------------------------------------------------------
# Kernel 1: fused conv GEMM + bias + ReLU + 2x2/2 max-pool (over 4 phases)
# ---------------------------------------------------------------------------
def _conv_pool_kernel(p_ref, w_ref, b_ref, o_ref):
    # p_ref: (4, m_blk, Kp) bf16 im2col patches; leading dim = pooling phase
    #        (h-parity * 2 + w-parity), rows ordered (n, ph, pw).
    # w_ref: (Kp, 128) bf16.  b_ref: (1, 128) f32.  o_ref: (m_blk, 128) bf16.
    w = w_ref[...]
    b = b_ref[...]
    acc = None
    for phase in range(4):
        g = jnp.dot(p_ref[phase], w, preferred_element_type=jnp.float32) + b
        g = jnp.maximum(g, 0.0)                              # ReLU
        acc = g if acc is None else jnp.maximum(acc, g)      # 2x2 max-pool
    o_ref[...] = acc.astype(o_ref.dtype)


def conv_relu_pool(patches, w, b, *, m_block=256):
    # patches: (4, M, K) bf16 with M = N*PH*PW (pooled rows); w: (Kp, 128) bf16
    _, m, k = patches.shape
    kp = w.shape[0]
    m_blk = min(m_block, _round_up(m, 32))
    m_pad = _round_up(m, m_blk)
    patches = jnp.pad(patches, ((0, 0), (0, m_pad - m), (0, kp - k)))
    out = pl.pallas_call(
        _conv_pool_kernel,
        out_shape=jax.ShapeDtypeStruct((m_pad, LANES), jnp.bfloat16),
        grid_spec=pltpu.PrefetchScalarGridSpec(
            num_scalar_prefetch=0,
            grid=(m_pad // m_blk,),
            in_specs=[
                pl.BlockSpec((4, m_blk, kp), lambda i: (0, i, 0)),
                pl.BlockSpec((kp, LANES), lambda i: (0, 0)),
                pl.BlockSpec((1, LANES), lambda i: (0, 0)),
            ],
            out_specs=pl.BlockSpec((m_blk, LANES), lambda i: (i, 0)),
        ),
        compiler_params=pltpu.CompilerParams(
            dimension_semantics=("parallel",)),
    )(patches, w, b)
    return out[:m]


# ---------------------------------------------------------------------------
# Kernel 2: fused fc1 -> ReLU -> fc2 -> ReLU -> fc3
# ---------------------------------------------------------------------------
def _fc_stack_kernel(x_ref, w1_ref, b1_ref, w2_ref, b2_ref, w3_ref, b3_ref,
                     o_ref):
    h = jnp.dot(x_ref[...], w1_ref[...],
                preferred_element_type=jnp.float32) + b1_ref[...]
    h = jnp.maximum(h, 0.0).astype(jnp.bfloat16)
    h = jnp.dot(h, w2_ref[...],
                preferred_element_type=jnp.float32) + b2_ref[...]
    h = jnp.maximum(h, 0.0).astype(jnp.bfloat16)
    h = jnp.dot(h, w3_ref[...],
                preferred_element_type=jnp.float32) + b3_ref[...]
    o_ref[...] = h


def fc_stack(xf, w1, b1, w2, b2, w3, b3, *, m_block=256):
    n, k = xf.shape
    m_blk = min(m_block, _round_up(n, 32))
    m_pad = _round_up(n, m_blk)
    xf = jnp.pad(xf, ((0, m_pad - n), (0, 0)))
    out = pl.pallas_call(
        _fc_stack_kernel,
        out_shape=jax.ShapeDtypeStruct((m_pad, LANES), jnp.float32),
        grid_spec=pltpu.PrefetchScalarGridSpec(
            num_scalar_prefetch=0,
            grid=(m_pad // m_blk,),
            in_specs=[
                pl.BlockSpec((m_blk, k), lambda i: (i, 0)),
                pl.BlockSpec(w1.shape, lambda i: (0, 0)),
                pl.BlockSpec((1, LANES), lambda i: (0, 0)),
                pl.BlockSpec(w2.shape, lambda i: (0, 0)),
                pl.BlockSpec((1, LANES), lambda i: (0, 0)),
                pl.BlockSpec(w3.shape, lambda i: (0, 0)),
                pl.BlockSpec((1, LANES), lambda i: (0, 0)),
            ],
            out_specs=pl.BlockSpec((m_blk, LANES), lambda i: (i, 0)),
        ),
        compiler_params=pltpu.CompilerParams(
            dimension_semantics=("parallel",)),
    )(xf, w1, b1, w2, b2, w3, b3)
    return out[:n]


# ---------------------------------------------------------------------------
# Host-side patch extraction (single fused XLA op) + one-time weight prep
# ---------------------------------------------------------------------------
def _phase_patches(x_nchw, ksize):
    # x: (N, C, H, W) -> (4, N*PH*PW, C*k*k) im2col patches split by pooling
    # phase: out[hp*2+wp, n*PH*PW + ph*PW + pw, :] feeds conv output pixel
    # (n, 2*ph+hp, 2*pw+wp).
    n, c, h, w = x_nchw.shape
    oh, ow = h - ksize + 1, w - ksize + 1
    assert oh % 2 == 0 and ow % 2 == 0
    ph, pw = oh // 2, ow // 2
    f = c * ksize * ksize
    pat = lax.conv_general_dilated_patches(x_nchw, (ksize, ksize), (1, 1),
                                           "VALID")        # (N, F, OH, OW)
    pat = pat.transpose(0, 2, 3, 1)                         # (N, OH, OW, F)
    pat = pat.reshape(n, ph, 2, pw, 2, f)
    pat = pat.transpose(2, 4, 0, 1, 3, 5)                   # (hp, wp, N, PH, PW, F)
    return pat.reshape(4, n * ph * pw, f)


def _flatten_conv_weight(w):
    # (OC, IC, KH, KW) -> (IC*KH*KW, OC), rows in the SAME feature order as
    # lax.conv_general_dilated_patches (guaranteed by using the same op).
    oc, ic, kh, kw = w.shape
    wf = lax.conv_general_dilated_patches(w, (kh, kw), (1, 1), "VALID")
    return wf.reshape(oc, ic * kh * kw).T


def prepare_params(p):
    bf16, f32 = jnp.bfloat16, jnp.float32

    def pad_to(a, rows, cols):
        return jnp.pad(a, ((0, rows - a.shape[0]), (0, cols - a.shape[1])))

    w1 = _flatten_conv_weight(p["conv1_w"])          # (75, 6)
    w2 = _flatten_conv_weight(p["conv2_w"])          # (150, 16)

    # fc1: PyTorch feature order is (c, ph, pw); our flattened conv2/pool
    # output is ordered (s = ph*5+pw, c padded to 128) -> permute + pad once.
    wf1 = p["fc1_w"].T.reshape(16, 25, 120)          # [c, s, o]
    wf1 = wf1.transpose(1, 0, 2)                     # [s, c, o]
    wf1 = jnp.pad(wf1, ((0, 0), (0, LANES - 16), (0, LANES - 120)))
    wf1 = wf1.reshape(25 * LANES, LANES)             # row = s*128 + c

    return {
        "conv1_w": pad_to(w1, 128, LANES).astype(bf16),
        "conv1_b": jnp.pad(p["conv1_b"], (0, LANES - 6)).reshape(1, LANES).astype(f32),
        "conv2_w": pad_to(w2, 256, LANES).astype(bf16),
        "conv2_b": jnp.pad(p["conv2_b"], (0, LANES - 16)).reshape(1, LANES).astype(f32),
        "fc1_w": wf1.astype(bf16),
        "fc1_b": jnp.pad(p["fc1_b"], (0, LANES - 120)).reshape(1, LANES).astype(f32),
        "fc2_w": pad_to(p["fc2_w"].T, LANES, LANES).astype(bf16),
        "fc2_b": jnp.pad(p["fc2_b"], (0, LANES - 84)).reshape(1, LANES).astype(f32),
        "fc3_w": pad_to(p["fc3_w"].T, LANES, LANES).astype(bf16),
        "fc3_b": jnp.pad(p["fc3_b"], (0, LANES - 10)).reshape(1, LANES).astype(f32),
    }


# ---------------------------------------------------------------------------
# Forward pass (mirrors Net.forward)
# ---------------------------------------------------------------------------
def net_forward(prep, x):
    # x: (N, 3, 32, 32) f32 NCHW (PyTorch layout)
    n = x.shape[0]
    xb = x.astype(jnp.bfloat16)

    # conv1 + ReLU + pool -> rows (n, ph, pw) of a 14x14 map, 128 lanes (6 valid)
    p1 = _phase_patches(xb, 5)                                   # (4, N*196, 75)
    a1 = conv_relu_pool(p1, prep["conv1_w"], prep["conv1_b"])    # (N*196, 128)

    # conv2 + ReLU + pool -> rows (n, ph, pw) of a 5x5 map, 128 lanes (16 valid)
    a1_img = a1.reshape(n, 14, 14, LANES)[..., :6].transpose(0, 3, 1, 2)
    p2 = _phase_patches(a1_img, 5)                               # (4, N*25, 150)
    a2 = conv_relu_pool(p2, prep["conv2_w"], prep["conv2_b"])    # (N*25, 128)

    # fc1 -> fc2 -> fc3 fused; flatten is a free reshape (features ordered
    # (s, c_padded); fc1_w was permuted/padded at prep time to match).
    xf = a2.reshape(n, 25 * LANES)                               # (N, 3200) bf16
    logits = fc_stack(xf, prep["fc1_w"], prep["fc1_b"],
                      prep["fc2_w"], prep["fc2_b"],
                      prep["fc3_w"], prep["fc3_b"])              # (N, 128) f32
    return logits[:, :10]


# ---------------------------------------------------------------------------
# Pure-JAX reference (same bf16 operand rounding) for a runtime self-check
# ---------------------------------------------------------------------------
def _ref_forward(params, x):
    f32 = jnp.float32

    def rb(a):  # round to bf16 and back (same rounding points as the kernels)
        return a.astype(jnp.bfloat16).astype(f32)

    dn = ("NCHW", "OIHW", "NCHW")

    def block(y, w, b):
        y = lax.conv_general_dilated(y, rb(w), (1, 1), "VALID",
                                     dimension_numbers=dn,
                                     preferred_element_type=f32)
        y = jnp.maximum(y + b[None, :, None, None], 0.0)
        y = lax.reduce_window(y, -jnp.inf, lax.max,
                              (1, 1, 2, 2), (1, 1, 2, 2), "VALID")
        return rb(y)

    y = block(rb(x), params["conv1_w"], params["conv1_b"])
    y = block(y, params["conv2_w"], params["conv2_b"])
    y = y.reshape(y.shape[0], 16 * 5 * 5)
    y = rb(jnp.maximum(y @ rb(params["fc1_w"]).T + params["fc1_b"], 0.0))
    y = rb(jnp.maximum(y @ rb(params["fc2_w"]).T + params["fc2_b"], 0.0))
    return y @ rb(params["fc3_w"]).T + params["fc3_b"]


# ---------------------------------------------------------------------------
# Parameters (deterministic, PyTorch-default-style uniform init)
# ---------------------------------------------------------------------------
def init_params(key):
    def uni(k, shape, fan_in):
        bound = 1.0 / (fan_in ** 0.5)
        return jax.random.uniform(k, shape, jnp.float32, -bound, bound)

    ks = jax.random.split(key, 10)
    return {
        "conv1_w": uni(ks[0], (6, 3, 5, 5), 3 * 5 * 5),
        "conv1_b": uni(ks[1], (6,), 3 * 5 * 5),
        "conv2_w": uni(ks[2], (16, 6, 5, 5), 6 * 5 * 5),
        "conv2_b": uni(ks[3], (16,), 6 * 5 * 5),
        "fc1_w": uni(ks[4], (120, 400), 400),   # PyTorch Linear: (out, in)
        "fc1_b": uni(ks[5], (120,), 400),
        "fc2_w": uni(ks[6], (84, 120), 120),
        "fc2_b": uni(ks[7], (84,), 120),
        "fc3_w": uni(ks[8], (10, 84), 84),
        "fc3_b": uni(ks[9], (10,), 84),
    }


if __name__ == "__main__":
    key = jax.random.PRNGKey(0)
    pkey, xkey = jax.random.split(key)
    params = init_params(pkey)
    prep = prepare_params(params)
    # 32x32 spatial input so 16*5*5 = 400 features reach fc1 (as in Net).
    x = jax.random.normal(xkey, (2, 3, 32, 32), dtype=jnp.float32)

    out = jax.jit(net_forward)(prep, x)
    out = jax.block_until_ready(out)
    assert out.shape == (2, 10), out.shape
    assert out.dtype == jnp.float32

    ref = jax.block_until_ready(jax.jit(_ref_forward)(params, x))
    max_err = float(jnp.max(jnp.abs(out - ref)))
    assert max_err < 5e-2, f"mismatch vs reference: {max_err}"

    print("KERNEL_OK")
</pallas_src>

<mosaic_0001>
module attributes {stable_mosaic.version = 11 : i64} {
  func.func @_conv_pool_kernel(%arg0: i32, %arg1: memref<4x256x128xbf16, #tpu.memory_space<vmem>>, %arg2: memref<128x128xbf16, #tpu.memory_space<vmem>>, %arg3: memref<1x128xf32, #tpu.memory_space<vmem>>, %arg4: memref<256x128xbf16, #tpu.memory_space<vmem>>) attributes {dimension_semantics = [#tpu.dimension_semantics<parallel>], iteration_bounds = array<i64: 2>, scalar_prefetch = 0 : i64, scratch_operands = 0 : i64, tpu.core_type = #tpu.core_type<tc>, window_params = [{transform_indices = @transform_0, window_bounds = array<i64: 4, 256, 128>}, {pipeline_mode = #tpu.pipeline_mode<synchronous>, transform_indices = @transform_1, window_bounds = array<i64: 128, 128>}, {pipeline_mode = #tpu.pipeline_mode<synchronous>, transform_indices = @transform_2, window_bounds = array<i64: 1, 128>}, {transform_indices = @transform_3, window_bounds = array<i64: 256, 128>}]} {
    %c0 = arith.constant 0 : index
    %c0_0 = arith.constant 0 : index
    %0 = vector.load %arg2[%c0, %c0_0] : memref<128x128xbf16, #tpu.memory_space<vmem>>, vector<128x128xbf16>
    %c0_1 = arith.constant 0 : index
    %c0_2 = arith.constant 0 : index
    %1 = vector.load %arg3[%c0_1, %c0_2] : memref<1x128xf32, #tpu.memory_space<vmem>>, vector<1x128xf32>
    %c0_3 = arith.constant 0 : index
    %c0_4 = arith.constant 0 : index
    %c0_5 = arith.constant 0 : index
    %2 = vector.load %arg1[%c0_3, %c0_4, %c0_5] : memref<4x256x128xbf16, #tpu.memory_space<vmem>>, vector<1x256x128xbf16>
    %3 = vector.shape_cast %2 : vector<1x256x128xbf16> to vector<256x128xbf16>
    %cst = arith.constant dense<0.000000e+00> : vector<256x128xf32>
    %4 = tpu.matmul %3, %0, %cst {dimension_numbers = #tpu.dot_dimension_numbers<[1], [0], [0], [1], [0, 0, 1, 1], [], []>} : vector<256x128xbf16>, vector<128x128xbf16>, vector<256x128xf32> -> vector<256x128xf32>
    %5 = vector.broadcast %1 : vector<1x128xf32> to vector<256x128xf32>
    %6 = arith.addf %4, %5 : vector<256x128xf32>
    %cst_6 = arith.constant 0.000000e+00 : f32
    %7 = vector.broadcast %cst_6 : f32 to vector<256x128xf32>
    %8 = arith.maximumf %6, %7 : vector<256x128xf32>
    %c1 = arith.constant 1 : index
    %c0_7 = arith.constant 0 : index
    %c0_8 = arith.constant 0 : index
    %9 = vector.load %arg1[%c1, %c0_7, %c0_8] : memref<4x256x128xbf16, #tpu.memory_space<vmem>>, vector<1x256x128xbf16>
    %10 = vector.shape_cast %9 : vector<1x256x128xbf16> to vector<256x128xbf16>
    %cst_9 = arith.constant dense<0.000000e+00> : vector<256x128xf32>
    %11 = tpu.matmul %10, %0, %cst_9 {dimension_numbers = #tpu.dot_dimension_numbers<[1], [0], [0], [1], [0, 0, 1, 1], [], []>} : vector<256x128xbf16>, vector<128x128xbf16>, vector<256x128xf32> -> vector<256x128xf32>
    %12 = vector.broadcast %1 : vector<1x128xf32> to vector<256x128xf32>
    %13 = arith.addf %11, %12 : vector<256x128xf32>
    %cst_10 = arith.constant 0.000000e+00 : f32
    %14 = vector.broadcast %cst_10 : f32 to vector<256x128xf32>
    %15 = arith.maximumf %13, %14 : vector<256x128xf32>
    %16 = arith.maximumf %8, %15 : vector<256x128xf32>
    %c2 = arith.constant 2 : index
    %c0_11 = arith.constant 0 : index
    %c0_12 = arith.constant 0 : index
    %17 = vector.load %arg1[%c2, %c0_11, %c0_12] : memref<4x256x128xbf16, #tpu.memory_space<vmem>>, vector<1x256x128xbf16>
    %18 = vector.shape_cast %17 : vector<1x256x128xbf16> to vector<256x128xbf16>
    %cst_13 = arith.constant dense<0.000000e+00> : vector<256x128xf32>
    %19 = tpu.matmul %18, %0, %cst_13 {dimension_numbers = #tpu.dot_dimension_numbers<[1], [0], [0], [1], [0, 0, 1, 1], [], []>} : vector<256x128xbf16>, vector<128x128xbf16>, vector<256x128xf32> -> vector<256x128xf32>
    %20 = vector.broadcast %1 : vector<1x128xf32> to vector<256x128xf32>
    %21 = arith.addf %19, %20 : vector<256x128xf32>
    %cst_14 = arith.constant 0.000000e+00 : f32
    %22 = vector.broadcast %cst_14 : f32 to vector<256x128xf32>
    %23 = arith.maximumf %21, %22 : vector<256x128xf32>
    %24 = arith.maximumf %16, %23 : vector<256x128xf32>
    %c3 = arith.constant 3 : index
    %c0_15 = arith.constant 0 : index
    %c0_16 = arith.constant 0 : index
    %25 = vector.load %arg1[%c3, %c0_15, %c0_16] : memref<4x256x128xbf16, #tpu.memory_space<vmem>>, vector<1x256x128xbf16>
    %26 = vector.shape_cast %25 : vector<1x256x128xbf16> to vector<256x128xbf16>
    %cst_17 = arith.constant dense<0.000000e+00> : vector<256x128xf32>
    %27 = tpu.matmul %26, %0, %cst_17 {dimension_numbers = #tpu.dot_dimension_numbers<[1], [0], [0], [1], [0, 0, 1, 1], [], []>} : vector<256x128xbf16>, vector<128x128xbf16>, vector<256x128xf32> -> vector<256x128xf32>
    %28 = vector.broadcast %1 : vector<1x128xf32> to vector<256x128xf32>
    %29 = arith.addf %27, %28 : vector<256x128xf32>
    %cst_18 = arith.constant 0.000000e+00 : f32
    %30 = vector.broadcast %cst_18 : f32 to vector<256x128xf32>
    %31 = arith.maximumf %29, %30 : vector<256x128xf32>
    %32 = arith.maximumf %24, %31 : vector<256x128xf32>
    %33 = arith.truncf %32 : vector<256x128xf32> to vector<256x128xbf16>
    %c0_19 = arith.constant 0 : index
    %c0_20 = arith.constant 0 : index
    %34 = vector.load %arg4[%c0_19, %c0_20] : memref<256x128xbf16, #tpu.memory_space<vmem>>, vector<256x128xbf16>
    tpu.vector_store %arg4[%c0_19, %c0_20], %33 {strides = array<i32>} : memref<256x128xbf16, #tpu.memory_space<vmem>>, vector<256x128xbf16>,
    return
  }
  func.func @transform_0(%arg0: i32) -> (i32, i32, i32) {
    %c0_i32 = arith.constant 0 : i32
    %c0_i32_0 = arith.constant 0 : i32
    %c0_i32_1 = arith.constant 0 : i32
    return %c0_i32, %arg0, %c0_i32_0 : i32, i32, i32
  }
  func.func @transform_1(%arg0: i32) -> (i32, i32) {
    %c0_i32 = arith.constant 0 : i32
    %c0_i32_0 = arith.constant 0 : i32
    %c0_i32_1 = arith.constant 0 : i32
    return %c0_i32, %c0_i32_0 : i32, i32
  }
  func.func @transform_2(%arg0: i32) -> (i32, i32) {
    %c0_i32 = arith.constant 0 : i32
    %c0_i32_0 = arith.constant 0 : i32
    %c0_i32_1 = arith.constant 0 : i32
    return %c0_i32, %c0_i32_0 : i32, i32
  }
  func.func @transform_3(%arg0: i32) -> (i32, i32) {
    %c0_i32 = arith.constant 0 : i32
    %c0_i32_0 = arith.constant 0 : i32
    return %arg0, %c0_i32 : i32, i32
  }
}

module attributes {stable_mosaic.version = 11 : i64} {
  func.func @_conv_pool_kernel(%arg0: i32, %arg1: memref<4x64x256xbf16, #tpu.memory_space<vmem>>, %arg2: memref<256x128xbf16, #tpu.memory_space<vmem>>, %arg3: memref<1x128xf32, #tpu.memory_space<vmem>>, %arg4: memref<64x128xbf16, #tpu.memory_space<vmem>>) attributes {dimension_semantics = [#tpu.dimension_semantics<parallel>], iteration_bounds = array<i64: 1>, scalar_prefetch = 0 : i64, scratch_operands = 0 : i64, tpu.core_type = #tpu.core_type<tc>, window_params = [{transform_indices = @transform_0, window_bounds = array<i64: 4, 64, 256>}, {pipeline_mode = #tpu.pipeline_mode<synchronous>, transform_indices = @transform_1, window_bounds = array<i64: 256, 128>}, {pipeline_mode = #tpu.pipeline_mode<synchronous>, transform_indices = @transform_2, window_bounds = array<i64: 1, 128>}, {transform_indices = @transform_3, window_bounds = array<i64: 64, 128>}]} {
    %c0 = arith.constant 0 : index
    %c0_0 = arith.constant 0 : index
    %0 = vector.load %arg2[%c0, %c0_0] : memref<256x128xbf16, #tpu.memory_space<vmem>>, vector<256x128xbf16>
    %c0_1 = arith.constant 0 : index
    %c0_2 = arith.constant 0 : index
    %1 = vector.load %arg3[%c0_1, %c0_2] : memref<1x128xf32, #tpu.memory_space<vmem>>, vector<1x128xf32>
    %c0_3 = arith.constant 0 : index
    %c0_4 = arith.constant 0 : index
    %c0_5 = arith.constant 0 : index
    %2 = vector.load %arg1[%c0_3, %c0_4, %c0_5] : memref<4x64x256xbf16, #tpu.memory_space<vmem>>, vector<1x64x256xbf16>
    %3 = vector.shape_cast %2 : vector<1x64x256xbf16> to vector<64x256xbf16>
    %cst = arith.constant dense<0.000000e+00> : vector<64x128xf32>
    %4 = tpu.matmul %3, %0, %cst {dimension_numbers = #tpu.dot_dimension_numbers<[1], [0], [0], [1], [0, 0, 1, 1], [], []>} : vector<64x256xbf16>, vector<256x128xbf16>, vector<64x128xf32> -> vector<64x128xf32>
    %5 = vector.broadcast %1 : vector<1x128xf32> to vector<64x128xf32>
    %6 = arith.addf %4, %5 : vector<64x128xf32>
    %cst_6 = arith.constant 0.000000e+00 : f32
    %7 = vector.broadcast %cst_6 : f32 to vector<64x128xf32>
    %8 = arith.maximumf %6, %7 : vector<64x128xf32>
    %c1 = arith.constant 1 : index
    %c0_7 = arith.constant 0 : index
    %c0_8 = arith.constant 0 : index
    %9 = vector.load %arg1[%c1, %c0_7, %c0_8] : memref<4x64x256xbf16, #tpu.memory_space<vmem>>, vector<1x64x256xbf16>
    %10 = vector.shape_cast %9 : vector<1x64x256xbf16> to vector<64x256xbf16>
    %cst_9 = arith.constant dense<0.000000e+00> : vector<64x128xf32>
    %11 = tpu.matmul %10, %0, %cst_9 {dimension_numbers = #tpu.dot_dimension_numbers<[1], [0], [0], [1], [0, 0, 1, 1], [], []>} : vector<64x256xbf16>, vector<256x128xbf16>, vector<64x128xf32> -> vector<64x128xf32>
    %12 = vector.broadcast %1 : vector<1x128xf32> to vector<64x128xf32>
    %13 = arith.addf %11, %12 : vector<64x128xf32>
    %cst_10 = arith.constant 0.000000e+00 : f32
    %14 = vector.broadcast %cst_10 : f32 to vector<64x128xf32>
    %15 = arith.maximumf %13, %14 : vector<64x128xf32>
    %16 = arith.maximumf %8, %15 : vector<64x128xf32>
    %c2 = arith.constant 2 : index
    %c0_11 = arith.constant 0 : index
    %c0_12 = arith.constant 0 : index
    %17 = vector.load %arg1[%c2, %c0_11, %c0_12] : memref<4x64x256xbf16, #tpu.memory_space<vmem>>, vector<1x64x256xbf16>
    %18 = vector.shape_cast %17 : vector<1x64x256xbf16> to vector<64x256xbf16>
    %cst_13 = arith.constant dense<0.000000e+00> : vector<64x128xf32>
    %19 = tpu.matmul %18, %0, %cst_13 {dimension_numbers = #tpu.dot_dimension_numbers<[1], [0], [0], [1], [0, 0, 1, 1], [], []>} : vector<64x256xbf16>, vector<256x128xbf16>, vector<64x128xf32> -> vector<64x128xf32>
    %20 = vector.broadcast %1 : vector<1x128xf32> to vector<64x128xf32>
    %21 = arith.addf %19, %20 : vector<64x128xf32>
    %cst_14 = arith.constant 0.000000e+00 : f32
    %22 = vector.broadcast %cst_14 : f32 to vector<64x128xf32>
    %23 = arith.maximumf %21, %22 : vector<64x128xf32>
    %24 = arith.maximumf %16, %23 : vector<64x128xf32>
    %c3 = arith.constant 3 : index
    %c0_15 = arith.constant 0 : index
    %c0_16 = arith.constant 0 : index
    %25 = vector.load %arg1[%c3, %c0_15, %c0_16] : memref<4x64x256xbf16, #tpu.memory_space<vmem>>, vector<1x64x256xbf16>
    %26 = vector.shape_cast %25 : vector<1x64x256xbf16> to vector<64x256xbf16>
    %cst_17 = arith.constant dense<0.000000e+00> : vector<64x128xf32>
    %27 = tpu.matmul %26, %0, %cst_17 {dimension_numbers = #tpu.dot_dimension_numbers<[1], [0], [0], [1], [0, 0, 1, 1], [], []>} : vector<64x256xbf16>, vector<256x128xbf16>, vector<64x128xf32> -> vector<64x128xf32>
    %28 = vector.broadcast %1 : vector<1x128xf32> to vector<64x128xf32>
    %29 = arith.addf %27, %28 : vector<64x128xf32>
    %cst_18 = arith.constant 0.000000e+00 : f32
    %30 = vector.broadcast %cst_18 : f32 to vector<64x128xf32>
    %31 = arith.maximumf %29, %30 : vector<64x128xf32>
    %32 = arith.maximumf %24, %31 : vector<64x128xf32>
    %33 = arith.truncf %32 : vector<64x128xf32> to vector<64x128xbf16>
    %c0_19 = arith.constant 0 : index
    %c0_20 = arith.constant 0 : index
    %34 = vector.load %arg4[%c0_19, %c0_20] : memref<64x128xbf16, #tpu.memory_space<vmem>>, vector<64x128xbf16>
    tpu.vector_store %arg4[%c0_19, %c0_20], %33 {strides = array<i32>} : memref<64x128xbf16, #tpu.memory_space<vmem>>, vector<64x128xbf16>,
    return
  }
  func.func @transform_0(%arg0: i32) -> (i32, i32, i32) {
    %c0_i32 = arith.constant 0 : i32
    %c0_i32_0 = arith.constant 0 : i32
    %c0_i32_1 = arith.constant 0 : i32
    return %c0_i32, %arg0, %c0_i32_0 : i32, i32, i32
  }
  func.func @transform_1(%arg0: i32) -> (i32, i32) {
    %c0_i32 = arith.constant 0 : i32
    %c0_i32_0 = arith.constant 0 : i32
    %c0_i32_1 = arith.constant 0 : i32
    return %c0_i32, %c0_i32_0 : i32, i32
  }
  func.func @transform_2(%arg0: i32) -> (i32, i32) {
    %c0_i32 = arith.constant 0 : i32
    %c0_i32_0 = arith.constant 0 : i32
    %c0_i32_1 = arith.constant 0 : i32
    return %c0_i32, %c0_i32_0 : i32, i32
  }
  func.func @transform_3(%arg0: i32) -> (i32, i32) {
    %c0_i32 = arith.constant 0 : i32
    %c0_i32_0 = arith.constant 0 : i32
    return %arg0, %c0_i32 : i32, i32
  }
}

module attributes {stable_mosaic.version = 11 : i64} {
  func.func @_fc_stack_kernel(%arg0: i32, %arg1: memref<32x3200xbf16, #tpu.memory_space<vmem>>, %arg2: memref<3200x128xbf16, #tpu.memory_space<vmem>>, %arg3: memref<1x128xf32, #tpu.memory_space<vmem>>, %arg4: memref<128x128xbf16, #tpu.memory_space<vmem>>, %arg5: memref<1x128xf32, #tpu.memory_space<vmem>>, %arg6: memref<128x128xbf16, #tpu.memory_space<vmem>>, %arg7: memref<1x128xf32, #tpu.memory_space<vmem>>, %arg8: memref<32x128xf32, #tpu.memory_space<vmem>>) attributes {dimension_semantics = [#tpu.dimension_semantics<parallel>], iteration_bounds = array<i64: 1>, scalar_prefetch = 0 : i64, scratch_operands = 0 : i64, tpu.core_type = #tpu.core_type<tc>, window_params = [{transform_indices = @transform_0, window_bounds = array<i64: 32, 3200>}, {pipeline_mode = #tpu.pipeline_mode<synchronous>, transform_indices = @transform_1, window_bounds = array<i64: 3200, 128>}, {pipeline_mode = #tpu.pipeline_mode<synchronous>, transform_indices = @transform_2, window_bounds = array<i64: 1, 128>}, {pipeline_mode = #tpu.pipeline_mode<synchronous>, transform_indices = @transform_3, window_bounds = array<i64: 128, 128>}, {pipeline_mode = #tpu.pipeline_mode<synchronous>, transform_indices = @transform_4, window_bounds = array<i64: 1, 128>}, {pipeline_mode = #tpu.pipeline_mode<synchronous>, transform_indices = @transform_5, window_bounds = array<i64: 128, 128>}, {pipeline_mode = #tpu.pipeline_mode<synchronous>, transform_indices = @transform_6, window_bounds = array<i64: 1, 128>}, {transform_indices = @transform_7, window_bounds = array<i64: 32, 128>}]} {
    %c0 = arith.constant 0 : index
    %c0_0 = arith.constant 0 : index
    %0 = vector.load %arg1[%c0, %c0_0] : memref<32x3200xbf16, #tpu.memory_space<vmem>>, vector<32x3200xbf16>
    %c0_1 = arith.constant 0 : index
    %c0_2 = arith.constant 0 : index
    %1 = vector.load %arg2[%c0_1, %c0_2] : memref<3200x128xbf16, #tpu.memory_space<vmem>>, vector<3200x128xbf16>
    %cst = arith.constant dense<0.000000e+00> : vector<32x128xf32>
    %2 = tpu.matmul %0, %1, %cst {dimension_numbers = #tpu.dot_dimension_numbers<[1], [0], [0], [1], [0, 0, 1, 1], [], []>} : vector<32x3200xbf16>, vector<3200x128xbf16>, vector<32x128xf32> -> vector<32x128xf32>
    %c0_3 = arith.constant 0 : index
    %c0_4 = arith.constant 0 : index
    %3 = vector.load %arg3[%c0_3, %c0_4] : memref<1x128xf32, #tpu.memory_space<vmem>>, vector<1x128xf32>
    %4 = vector.broadcast %3 : vector<1x128xf32> to vector<32x128xf32>
    %5 = arith.addf %2, %4 : vector<32x128xf32>
    %cst_5 = arith.constant 0.000000e+00 : f32
    %6 = vector.broadcast %cst_5 : f32 to vector<32x128xf32>
    %7 = arith.maximumf %5, %6 : vector<32x128xf32>
    %8 = arith.truncf %7 : vector<32x128xf32> to vector<32x128xbf16>
    %c0_6 = arith.constant 0 : index
    %c0_7 = arith.constant 0 : index
    %9 = vector.load %arg4[%c0_6, %c0_7] : memref<128x128xbf16, #tpu.memory_space<vmem>>, vector<128x128xbf16>
    %cst_8 = arith.constant dense<0.000000e+00> : vector<32x128xf32>
    %10 = tpu.matmul %8, %9, %cst_8 {dimension_numbers = #tpu.dot_dimension_numbers<[1], [0], [0], [1], [0, 0, 1, 1], [], []>} : vector<32x128xbf16>, vector<128x128xbf16>, vector<32x128xf32> -> vector<32x128xf32>
    %c0_9 = arith.constant 0 : index
    %c0_10 = arith.constant 0 : index
    %11 = vector.load %arg5[%c0_9, %c0_10] : memref<1x128xf32, #tpu.memory_space<vmem>>, vector<1x128xf32>
    %12 = vector.broadcast %11 : vector<1x128xf32> to vector<32x128xf32>
    %13 = arith.addf %10, %12 : vector<32x128xf32>
    %cst_11 = arith.constant 0.000000e+00 : f32
    %14 = vector.broadcast %cst_11 : f32 to vector<32x128xf32>
    %15 = arith.maximumf %13, %14 : vector<32x128xf32>
    %16 = arith.truncf %15 : vector<32x128xf32> to vector<32x128xbf16>
    %c0_12 = arith.constant 0 : index
    %c0_13 = arith.constant 0 : index
    %17 = vector.load %arg6[%c0_12, %c0_13] : memref<128x128xbf16, #tpu.memory_space<vmem>>, vector<128x128xbf16>
    %cst_14 = arith.constant dense<0.000000e+00> : vector<32x128xf32>
    %18 = tpu.matmul %16, %17, %cst_14 {dimension_numbers = #tpu.dot_dimension_numbers<[1], [0], [0], [1], [0, 0, 1, 1], [], []>} : vector<32x128xbf16>, vector<128x128xbf16>, vector<32x128xf32> -> vector<32x128xf32>
    %c0_15 = arith.constant 0 : index
    %c0_16 = arith.constant 0 : index
    %19 = vector.load %arg7[%c0_15, %c0_16] : memref<1x128xf32, #tpu.memory_space<vmem>>, vector<1x128xf32>
    %20 = vector.broadcast %19 : vector<1x128xf32> to vector<32x128xf32>
    %21 = arith.addf %18, %20 : vector<32x128xf32>
    %c0_17 = arith.constant 0 : index
    %c0_18 = arith.constant 0 : index
    %22 = vector.load %arg8[%c0_17, %c0_18] : memref<32x128xf32, #tpu.memory_space<vmem>>, vector<32x128xf32>
    tpu.vector_store %arg8[%c0_17, %c0_18], %21 {strides = array<i32>} : memref<32x128xf32, #tpu.memory_space<vmem>>, vector<32x128xf32>,
    return
  }
  func.func @transform_0(%arg0: i32) -> (i32, i32) {
    %c0_i32 = arith.constant 0 : i32
    %c0_i32_0 = arith.constant 0 : i32
    return %arg0, %c0_i32 : i32, i32
  }
  func.func @transform_1(%arg0: i32) -> (i32, i32) {
    %c0_i32 = arith.constant 0 : i32
    %c0_i32_0 = arith.constant 0 : i32
    %c0_i32_1 = arith.constant 0 : i32
    return %c0_i32, %c0_i32_0 : i32, i32
  }
  func.func @transform_2(%arg0: i32) -> (i32, i32) {
    %c0_i32 = arith.constant 0 : i32
    %c0_i32_0 = arith.constant 0 : i32
    %c0_i32_1 = arith.constant 0 : i32
    return %c0_i32, %c0_i32_0 : i32, i32
  }
  func.func @transform_3(%arg0: i32) -> (i32, i32) {
    %c0_i32 = arith.constant 0 : i32
    %c0_i32_0 = arith.constant 0 : i32
    %c0_i32_1 = arith.constant 0 : i32
    return %c0_i32, %c0_i32_0 : i32, i32
  }
  func.func @transform_4(%arg0: i32) -> (i32, i32) {
    %c0_i32 = arith.constant 0 : i32
    %c0_i32_0 = arith.constant 0 : i32
    %c0_i32_1 = arith.constant 0 : i32
    return %c0_i32, %c0_i32_0 : i32, i32
  }
  func.func @transform_5(%arg0: i32) -> (i32, i32) {
    %c0_i32 = arith.constant 0 : i32
    %c0_i32_0 = arith.constant 0 : i32
    %c0_i32_1 = arith.constant 0 : i32
    return %c0_i32, %c0_i32_0 : i32, i32
  }
  func.func @transform_6(%arg0: i32) -> (i32, i32) {
    %c0_i32 = arith.constant 0 : i32
    %c0_i32_0 = arith.constant 0 : i32
    %c0_i32_1 = arith.constant 0 : i32
    return %c0_i32, %c0_i32_0 : i32, i32
  }
  func.func @transform_7(%arg0: i32) -> (i32, i32) {
    %c0_i32 = arith.constant 0 : i32
    %c0_i32_0 = arith.constant 0 : i32
    return %arg0, %c0_i32 : i32, i32
  }
}

</mosaic_0001>

<llo_original>
// kernel: net_forward.3
$region0: #{net_forward.3}
  #allocation0 [shape = 'u32[]', space=smem, size = 0x4, offset = 0x4, fixed_abs, tag = 'smem constant byte address 0x4 - core index']
  #allocation1 [shape = 'u32[144,128]{1,0:T(1,128)}', space=vmem, size = 0x12000, scoped, tag = 'internal scratch']
  %s0 = inlined_call_operand.vmem [shape: bf16[4,512,128], index: 0, kind: input, shape index: {}]
  %s1 = inlined_call_operand.vmem [shape: bf16[128,128], index: 1, kind: input, shape index: {}]
  %s2 = inlined_call_operand.vmem [shape: f32[1,128], index: 2, kind: input, shape index: {}]
  %s3 = inlined_call_operand.vmem [shape: bf16[512,128], index: 3, kind: output, shape index: {}]
  %s4 = sld [smem:[#allocation0]]
  $region86: #{net_forward.3} parent=0
    _
  %s6 = ssub.s32 1, %s4
  %s7 = scalar_select 0, %s6, %s4
  $region1: #{net_forward.3} parent=0
    #allocation2 [shape = 'u8[524288]{0}', space=vmem, size = 0x80000, scoped, tag = 'input window, operand 0']
    loop: start=0, step=1, limit=4
    $region2: #{net_forward.3} parent=1 // loop_pre_header
      _
    $region3: #{net_forward.3} parent=1 // loop_header
      %s9 = sphi 0, %s13
      %p10 = scmp.ge.s32.totalorder %s9, 4
      %s19 = sphi 0, %s21
      %s22 = sphi 0, %s19
      %s23 = sphi 0, %s22
      %s39 = sphi 0, %s23
      %s43 = sphi 0, %s43
      %s45 = sphi 0, %s43
      %s46 = sphi 0, %s45
      %s60 = sphi 0, %s46
      %s64 = sphi 0, %s64
      %s66 = sphi 0, %s64
      %s67 = sphi 0, %s66
      %s81 = sphi 0, %s67
      %s87 = sphi 0, %s89
      %s90 = sphi 0, %s87
      %s91 = sphi 0, %s90
      %s107 = sphi 0, %s91
    $region4: #{net_forward.3} parent=1 // loop_header_branch
      %12 = sbr.rel (%p10) target = $region8
    $region5: #{net_forward.3} parent=1 // loop_body
      %s14 = ssub.s32 %s9, 1
      %s15 = ssub.s32 %s9, 2
      %s16 = sadd.s32 %s9, 1
      %s17 = ssub.s32 %s9, %s16
      %p18 = scmp.eq.s32.totalorder %s17, 0
      %s20 = sadd.s32 %s19, 1
      %s21 = scalar_select %p18, %s19, %s20
      %p24 = pneg %p18
      %p25 = scmp.eq.s32.totalorder %s9, 1
      %p26 = por %p24, %p25
      %p27 = scmp.ne.s32.totalorder %s19, %s22
      %p28 = scmp.eq.s32.totalorder %s9, 0
      %p29 = por %p27, %p28
      %p30 = scmp.ne.s32.totalorder %s19, %s22
      %p31 = scmp.eq.s32.totalorder %s14, 1
      %p32 = por %p30, %p31
      %p33 = scmp.ne.s32.totalorder %s22, %s23
      %p34 = scmp.eq.s32.totalorder %s14, 0
      %p35 = por %p33, %p34
      %p36 = scmp.ne.s32.totalorder %s22, %s23
      %p37 = scmp.eq.s32.totalorder %s15, 1
      %p38 = por %p36, %p37
      %p40 = scmp.ne.s32.totalorder %s23, %s39
      %p41 = scmp.eq.s32.totalorder %s15, 0
      %p42 = por %p40, %p41
      %s44 = sadd.s32 %s43, 1
      %p47 = scmp.eq.s32.totalorder %s9, 1
      %p48 = scmp.ne.s32.totalorder %s43, %s45
      %p49 = scmp.eq.s32.totalorder %s9, 0
      %p50 = por %p48, %p49
      %p51 = scmp.ne.s32.totalorder %s43, %s45
      %p52 = scmp.eq.s32.totalorder %s14, 1
      %p53 = por %p51, %p52
      %p54 = scmp.ne.s32.totalorder %s45, %s46
      %p55 = scmp.eq.s32.totalorder %s14, 0
      %p56 = por %p54, %p55
      %p57 = scmp.ne.s32.totalorder %s45, %s46
      %p58 = scmp.eq.s32.totalorder %s15, 1
      %p59 = por %p57, %p58
      %p61 = scmp.ne.s32.totalorder %s46, %s60
      %p62 = scmp.eq.s32.totalorder %s15, 0
      %p63 = por %p61, %p62
      %s65 = sadd.s32 %s64, 1
      %p68 = scmp.eq.s32.totalorder %s9, 1
      %p69 = scmp.ne.s32.totalorder %s64, %s66
      %p70 = scmp.eq.s32.totalorder %s9, 0
      %p71 = por %p69, %p70
      %p72 = scmp.ne.s32.totalorder %s64, %s66
      %p73 = scmp.eq.s32.totalorder %s14, 1
      %p74 = por %p72, %p73
      %p75 = scmp.ne.s32.totalorder %s66, %s67
      %p76 = scmp.eq.s32.totalorder %s14, 0
      %p77 = por %p75, %p76
      %p78 = scmp.ne.s32.totalorder %s66, %s67
      %p79 = scmp.eq.s32.totalorder %s15, 1
      %p80 = por %p78, %p79
      %p82 = scmp.ne.s32.totalorder %s67, %s81
      %p83 = scmp.eq.s32.totalorder %s15, 0
      %p84 = por %p82, %p83
      %s85 = ssub.s32 %s9, %s16
      %p86 = scmp.eq.s32.totalorder %s85, 0
      %s88 = sadd.s32 %s87, 1
      %s89 = scalar_select %p86, %s87, %s88
      %p92 = pneg %p86
      %p93 = scmp.eq.s32.totalorder %s9, 1
      %p94 = por %p92, %p93
      %p95 = scmp.ne.s32.totalorder %s87, %s90
      %p96 = scmp.eq.s32.totalorder %s9, 0
      %p97 = por %p95, %p96
      %p98 = scmp.ne.s32.totalorder %s87, %s90
      %p99 = scmp.eq.s32.totalorder %s14, 1
      %p100 = por %p98, %p99
      %p101 = scmp.ne.s32.totalorder %s90, %s91
      %p102 = scmp.eq.s32.totalorder %s14, 0
      %p103 = por %p101, %p102
      %p104 = scmp.ne.s32.totalorder %s90, %s91
      %p105 = scmp.eq.s32.totalorder %s15, 1
      %p106 = por %p104, %p105
      %p108 = scmp.ne.s32.totalorder %s91, %s107
      %p109 = scmp.eq.s32.totalorder %s15, 0
      %p110 = por %p108, %p109
      %p111 = scmp.le.s32.totalorder 1, %s9
      %p112 = scmp.lt.s32.totalorder %s9, 3
      %p113 = pnand %p111, %p112
      %p114 = pneg %p113
      // Predicated region
      $region9: #{net_forward.3} parent=5 // pred_check
        _
      $region10: #{net_forward.3} parent=5 // pred_check_branch
        %116 = sbr.rel (%p113) target = $region12
      $region11: #{net_forward.3} parent=5 // pred_region
        %s117 = ssub.s32 %s9, 1
        // Predicated region
        $region13: #{net_forward.3} parent=11 // pred_check
          %p118 = pneg %p56
        $region14: #{net_forward.3} parent=11 // pred_check_branch
          %120 = sbr.rel (%p118) target = $region16
        $region15: #{net_forward.3} parent=11 // pred_region
          _
        $region16: #{net_forward.3} parent=11 // pred_fallthru
          _
        // Predicated region
        $region17: #{net_forward.3} parent=11 // pred_check
          %p121 = pneg %p77
        $region18: #{net_forward.3} parent=11 // pred_check_branch
          %123 = sbr.rel (%p121) target = $region20
        $region19: #{net_forward.3} parent=11 // pred_region
          _
        $region20: #{net_forward.3} parent=11 // pred_fallthru
          _
      $region12: #{net_forward.3} parent=5 // pred_fallthru
        _
      %p124 = scmp.lt.s32.totalorder %s9, 2
      // Predicated region
      $region21: #{net_forward.3} parent=5 // pred_check
        %p125 = pneg %p124
      $region22: #{net_forward.3} parent=5 // pred_check_branch
        %127 = sbr.rel (%p125) target = $region24
      $region23: #{net_forward.3} parent=5 // pred_region
        // Predicated region
        $region25: #{net_forward.3} parent=23 // pred_check
          %p128 = pneg %p29
        $region26: #{net_forward.3} parent=23 // pred_check_branch
          %130 = sbr.rel (%p128) target = $region28
        $region27: #{net_forward.3} parent=23 // pred_region
          %s131 = sand.u32 %s19, 1
          %s132 = sand.u32 %s19, 1
          %s133 = smul.addr %s132, 512
          %s134 = scalar_lea.vmem [#allocation2], %s133
          %s135 = smul.u32 32, %s9
          %s136 = smul.addr %s135, 4
          %s137 = scalar_lea.vmem %s0, %s136
          // Predicated region
          $region29: #{net_forward.3} parent=27 // pred_check
            _
          $region30: #{net_forward.3} parent=27 // pred_check_branch
            %139 = sbr.rel (0) target = $region32
          $region31: #{net_forward.3} parent=27 // pred_region
            // Predicated region
            $region33: #{net_forward.3} parent=31 // pred_check
              _
            $region34: #{net_forward.3} parent=31 // pred_check_branch
              %141 = sbr.rel target = $region36
            $region35: #{net_forward.3} parent=31 // pred_region
              // Predicated region
              $region48: #{net_forward.3} parent=35 // pred_check
                _
              $region49: #{net_forward.3} parent=35 // pred_check_branch
                %410 = sbr.rel (0) target = $region51
              $region50: #{net_forward.3} parent=35 // pred_region
                loop: start=0, step=1, limit=1
                $region52: #{net_forward.3} parent=50 // loop_pre_header
                  _
                $region53: #{net_forward.3} parent=50 // loop_header
                  %s412 = sphi 0, %s416
                  %p413 = scmp.ge.s32.totalorder %s412, 1
                  %s417 = sphi %s137, %s137
                  %s418 = sphi %s134, %s134
                $region54: #{net_forward.3} parent=50 // loop_header_branch
                  %415 = sbr.rel (%p413) target = $region58
                $region55: #{net_forward.3} parent=50 // loop_body
                  _
                $region56: #{net_forward.3} parent=50 // loop_footer
                  %s416 = sadd.s32 1, %s412
                $region57: #{net_forward.3} parent=50 // loop_footer_branch
                  %411 = sbr.rel target = $region53
                $region58: #{net_forward.3} parent=50 // loop_exit
                  _
                loop: start=0, step=1, limit=1
                $region59: #{net_forward.3} parent=50 // loop_pre_header
                  _
                $region60: #{net_forward.3} parent=50 // loop_header
                  %s421 = sphi 0, %s425
                  %p422 = scmp.ge.s32.totalorder %s421, 1
                  %s426 = sphi %s137, %s137
                  %s427 = sphi %s134, %s134
                $region61: #{net_forward.3} parent=50 // loop_header_branch
                  %424 = sbr.rel (%p422) target = $region65
                $region62: #{net_forward.3} parent=50 // loop_body
                  %v428 = vld [vmem:[%s426] sm:$0xf]
                  %429 = vst [vmem:[%s427] sm:$0xf] %v428
                  %v430 = vld [vmem:[%s426 + $0x4] sm:$0xf]
                  %431 = vst [vmem:[%s427 + $0x4] sm:$0xf] %v430
                  %v432 = vld [vmem:[%s426 + $0x8] sm:$0xf]
                  %433 = vst [vmem:[%s427 + $0x8] sm:$0xf] %v432
                  %v434 = vld [vmem:[%s426 + $0xc] sm:$0xf]
                  %435 = vst [vmem:[%s427 + $0xc] sm:$0xf] %v434
                  %v436 = vld [vmem:[%s426 + $0x10] sm:$0xf]
                  %437 = vst [vmem:[%s427 + $0x10] sm:$0xf] %v436
                  %v438 = vld [vmem:[%s426 + $0x14] sm:$0xf]
                  %439 = vst [vmem:[%s427 + $0x14] sm:$0xf] %v438
                  %v440 = vld [vmem:[%s426 + $0x18] sm:$0xf]
                  %441 = vst [vmem:[%s427 + $0x18] sm:$0xf] %v440
                  %v442 = vld [vmem:[%s426 + $0x1c] sm:$0xf]
                  %443 = vst [vmem:[%s427 + $0x1c] sm:$0xf] %v442
                  %v444 = vld [vmem:[%s426 + $0x20] sm:$0xf]
                  %445 = vst [vmem:[%s427 + $0x20] sm:$0xf] %v444
                  %v446 = vld [vmem:[%s426 + $0x24] sm:$0xf]
                  %447 = vst [vmem:[%s427 + $0x24] sm:$0xf] %v446
                  %v448 = vld [vmem:[%s426 + $0x28] sm:$0xf]
                  %449 = vst [vmem:[%s427 + $0x28] sm:$0xf] %v448
                  %v450 = vld [vmem:[%s426 + $0x2c] sm:$0xf]
                  %451 = vst [vmem:[%s427 + $0x2c] sm:$0xf] %v450
                  %v452 = vld [vmem:[%s426 + $0x30] sm:$0xf]
                  %453 = vst [vmem:[%s427 + $0x30] sm:$0xf] %v452
                  %v454 = vld [vmem:[%s426 + $0x34] sm:$0xf]
                  %455 = vst [vmem:[%s427 + $0x34] sm:$0xf] %v454
                  %v456 = vld [vmem:[%s426 + $0x38] sm:$0xf]
                  %457 = vst [vmem:[%s427 + $0x38] sm:$0xf] %v456
                  %v458 = vld [vmem:[%s426 + $0x3c] sm:$0xf]
                  %459 = vst [vmem:[%s427 + $0x3c] sm:$0xf] %v458
                  %v460 = vld [vmem:[%s426 + $0x40] sm:$0xf]
                  %461 = vst [vmem:[%s427 + $0x40] sm:$0xf] %v460
                  %v462 = vld [vmem:[%s426 + $0x44] sm:$0xf]
                  %463 = vst [vmem:[%s427 + $0x44] sm:$0xf] %v462
                  %v464 = vld [vmem:[%s426 + $0x48] sm:$0xf]
                  %465 = vst [vmem:[%s427 + $0x48] sm:$0xf] %v464
                  %v466 = vld [vmem:[%s426 + $0x4c] sm:$0xf]
                  %467 = vst [vmem:[%s427 + $0x4c] sm:$0xf] %v466
                  %v468 = vld [vmem:[%s426 + $0x50] sm:$0xf]
                  %469 = vst [vmem:[%s427 + $0x50] sm:$0xf] %v468
                  %v470 = vld [vmem:[%s426 + $0x54] sm:$0xf]
                  %471 = vst [vmem:[%s427 + $0x54] sm:$0xf] %v470
                  %v472 = vld [vmem:[%s426 + $0x58] sm:$0xf]
                  %473 = vst [vmem:[%s427 + $0x58] sm:$0xf] %v472
                  %v474 = vld [vmem:[%s426 + $0x5c] sm:$0xf]
                  %475 = vst [vmem:[%s427 + $0x5c] sm:$0xf] %v474
                  %v476 = vld [vmem:[%s426 + $0x60] sm:$0xf]
                  %477 = vst [vmem:[%s427 + $0x60] sm:$0xf] %v476
                  %v478 = vld [vmem:[%s426 + $0x64] sm:$0xf]
                  %479 = vst [vmem:[%s427 + $0x64] sm:$0xf] %v478
                  %v480 = vld [vmem:[%s426 + $0x68] sm:$0xf]
                  %481 = vst [vmem:[%s427 + $0x68] sm:$0xf] %v480
                  %v482 = vld [vmem:[%s426 + $0x6c] sm:$0xf]
                  %483 = vst [vmem:[%s427 + $0x6c] sm:$0xf] %v482
                  %v484 = vld [vmem:[%s426 + $0x70] sm:$0xf]
                  %485 = vst [vmem:[%s427 + $0x70] sm:$0xf] %v484
                  %v486 = vld [vmem:[%s426 + $0x74] sm:$0xf]
                  %487 = vst [vmem:[%s427 + $0x74] sm:$0xf] %v486
                  %v488 = vld [vmem:[%s426 + $0x78] sm:$0xf]
                  %489 = vst [vmem:[%s427 + $0x78] sm:$0xf] %v488
                  %v490 = vld [vmem:[%s426 + $0x7c] sm:$0xf]
                  %491 = vst [vmem:[%s427 + $0x7c] sm:$0xf] %v490
                  %v492 = vld [vmem:[%s426 + $0x100] sm:$0xf]
                  %493 = vst [vmem:[%s427 + $0x80] sm:$0xf] %v492
                  %v494 = vld [vmem:[%s426 + $0x104] sm:$0xf]
                  %495 = vst [vmem:[%s427 + $0x84] sm:$0xf] %v494
                  %v496 = vld [vmem:[%s426 + $0x108] sm:$0xf]
                  %497 = vst [vmem:[%s427 + $0x88] sm:$0xf] %v496
                  %v498 = vld [vmem:[%s426 + $0x10c] sm:$0xf]
                  %499 = vst [vmem:[%s427 + $0x8c] sm:$0xf] %v498
                  %v500 = vld [vmem:[%s426 + $0x110] sm:$0xf]
                  %501 = vst [vmem:[%s427 + $0x90] sm:$0xf] %v500
                  %v502 = vld [vmem:[%s426 + $0x114] sm:$0xf]
                  %503 = vst [vmem:[%s427 + $0x94] sm:$0xf] %v502
                  %v504 = vld [vmem:[%s426 + $0x118] sm:$0xf]
                  %505 = vst [vmem:[%s427 + $0x98] sm:$0xf] %v504
                  %v506 = vld [vmem:[%s426 + $0x11c] sm:$0xf]
                  %507 = vst [vmem:[%s427 + $0x9c] sm:$0xf] %v506
                  %v508 = vld [vmem:[%s426 + $0x120] sm:$0xf]
                  %509 = vst [vmem:[%s427 + $0xa0] sm:$0xf] %v508
                  %v510 = vld [vmem:[%s426 + $0x124] sm:$0xf]
                  %511 = vst [vmem:[%s427 + $0xa4] sm:$0xf] %v510
                  %v512 = vld [vmem:[%s426 + $0x128] sm:$0xf]
                  %513 = vst [vmem:[%s427 + $0xa8] sm:$0xf] %v512
                  %v514 = vld [vmem:[%s426 + $0x12c] sm:$0xf]
                  %515 = vst [vmem:[%s427 + $0xac] sm:$0xf] %v514
                  %v516 = vld [vmem:[%s426 + $0x130] sm:$0xf]
                  %517 = vst [vmem:[%s427 + $0xb0] sm:$0xf] %v516
                  %v518 = vld [vmem:[%s426 + $0x134] sm:$0xf]
                  %519 = vst [vmem:[%s427 + $0xb4] sm:$0xf] %v518
                  %v520 = vld [vmem:[%s426 + $0x138] sm:$0xf]
                  %521 = vst [vmem:[%s427 + $0xb8] sm:$0xf] %v520
                  %v522 = vld [vmem:[%s426 + $0x13c] sm:$0xf]
                  %523 = vst [vmem:[%s427 + $0xbc] sm:$0xf] %v522
                  %v524 = vld [vmem:[%s426 + $0x140] sm:$0xf]
                  %525 = vst [vmem:[%s427 + $0xc0] sm:$0xf] %v524
                  %v526 = vld [vmem:[%s426 + $0x144] sm:$0xf]
                  %527 = vst [vmem:[%s427 + $0xc4] sm:$0xf] %v526
                  %v528 = vld [vmem:[%s426 + $0x148] sm:$0xf]
                  %529 = vst [vmem:[%s427 + $0xc8] sm:$0xf] %v528
                  %v530 = vld [vmem:[%s426 + $0x14c] sm:$0xf]
                  %531 = vst [vmem:[%s427 + $0xcc] sm:$0xf] %v530
                  %v532 = vld [vmem:[%s426 + $0x150] sm:$0xf]
                  %533 = vst [vmem:[%s427 + $0xd0] sm:$0xf] %v532
                  %v534 = vld [vmem:[%s426 + $0x154] sm:$0xf]
                  %535 = vst [vmem:[%s427 + $0xd4] sm:$0xf] %v534
                  %v536 = vld [vmem:[%s426 + $0x158] sm:$0xf]
                  %537 = vst [vmem:[%s427 + $0xd8] sm:$0xf] %v536
                  %v538 = vld [vmem:[%s426 + $0x15c] sm:$0xf]
                  %539 = vst [vmem:[%s427 + $0xdc] sm:$0xf] %v538
                  %v540 = vld [vmem:[%s426 + $0x160] sm:$0xf]
                  %541 = vst [vmem:[%s427 + $0xe0] sm:$0xf] %v540
                  %v542 = vld [vmem:[%s426 + $0x164] sm:$0xf]
                  %543 = vst [vmem:[%s427 + $0xe4] sm:$0xf] %v542
                  %v544 = vld [vmem:[%s426 + $0x168] sm:$0xf]
                  %545 = vst [vmem:[%s427 + $0xe8] sm:$0xf] %v544
                  %v546 = vld [vmem:[%s426 + $0x16c] sm:$0xf]
                  %547 = vst [vmem:[%s427 + $0xec] sm:$0xf] %v546
                  %v548 = vld [vmem:[%s426 + $0x170] sm:$0xf]
                  %549 = vst [vmem:[%s427 + $0xf0] sm:$0xf] %v548
                  %v550 = vld [vmem:[%s426 + $0x174] sm:$0xf]
                  %551 = vst [vmem:[%s427 + $0xf4] sm:$0xf] %v550
                  %v552 = vld [vmem:[%s426 + $0x178] sm:$0xf]
                  %553 = vst [vmem:[%s427 + $0xf8] sm:$0xf] %v552
                  %v554 = vld [vmem:[%s426 + $0x17c] sm:$0xf]
                  %555 = vst [vmem:[%s427 + $0xfc] sm:$0xf] %v554
                  %v556 = vld [vmem:[%s426 + $0x200] sm:$0xf]
                  %557 = vst [vmem:[%s427 + $0x100] sm:$0xf] %v556
                  %v558 = vld [vmem:[%s426 + $0x204] sm:$0xf]
                  %559 = vst [vmem:[%s427 + $0x104] sm:$0xf] %v558
                  %v560 = vld [vmem:[%s426 + $0x208] sm:$0xf]
                  %561 = vst [vmem:[%s427 + $0x108] sm:$0xf] %v560
                  %v562 = vld [vmem:[%s426 + $0x20c] sm:$0xf]
                  %563 = vst [vmem:[%s427 + $0x10c] sm:$0xf] %v562
                  %v564 = vld [vmem:[%s426 + $0x210] sm:$0xf]
                  %565 = vst [vmem:[%s427 + $0x110] sm:$0xf] %v564
                  %v566 = vld [vmem:[%s426 + $0x214] sm:$0xf]
                  %567 = vst [vmem:[%s427 + $0x114] sm:$0xf] %v566
                  %v568 = vld [vmem:[%s426 + $0x218] sm:$0xf]
                  %569 = vst [vmem:[%s427 + $0x118] sm:$0xf] %v568
                  %v570 = vld [vmem:[%s426 + $0x21c] sm:$0xf]
                  %571 = vst [vmem:[%s427 + $0x11c] sm:$0xf] %v570
                  %v572 = vld [vmem:[%s426 + $0x220] sm:$0xf]
                  %573 = vst [vmem:[%s427 + $0x120] sm:$0xf] %v572
                  %v574 = vld [vmem:[%s426 + $0x224] sm:$0xf]
                  %575 = vst [vmem:[%s427 + $0x124] sm:$0xf] %v574
                  %v576 = vld [vmem:[%s426 + $0x228] sm:$0xf]
                  %577 = vst [vmem:[%s427 + $0x128] sm:$0xf] %v576
                  %v578 = vld [vmem:[%s426 + $0x22c] sm:$0xf]
                  %579 = vst [vmem:[%s427 + $0x12c] sm:$0xf] %v578
                  %v580 = vld [vmem:[%s426 + $0x230] sm:$0xf]
                  %581 = vst [vmem:[%s427 + $0x130] sm:$0xf] %v580
                  %v582 = vld [vmem:[%s426 + $0x234] sm:$0xf]
                  %583 = vst [vmem:[%s427 + $0x134] sm:$0xf] %v582
                  %v584 = vld [vmem:[%s426 + $0x238] sm:$0xf]
                  %585 = vst [vmem:[%s427 + $0x138] sm:$0xf] %v584
                  %v586 = vld [vmem:[%s426 + $0x23c] sm:$0xf]
                  %587 = vst [vmem:[%s427 + $0x13c] sm:$0xf] %v586
                  %v588 = vld [vmem:[%s426 + $0x240] sm:$0xf]
                  %589 = vst [vmem:[%s427 + $0x140] sm:$0xf] %v588
                  %v590 = vld [vmem:[%s426 + $0x244] sm:$0xf]
                  %591 = vst [vmem:[%s427 + $0x144] sm:$0xf] %v590
                  %v592 = vld [vmem:[%s426 + $0x248] sm:$0xf]
                  %593 = vst [vmem:[%s427 + $0x148] sm:$0xf] %v592
                  %v594 = vld [vmem:[%s426 + $0x24c] sm:$0xf]
                  %595 = vst [vmem:[%s427 + $0x14c] sm:$0xf] %v594
                  %v596 = vld [vmem:[%s426 + $0x250] sm:$0xf]
                  %597 = vst [vmem:[%s427 + $0x150] sm:$0xf] %v596
                  %v598 = vld [vmem:[%s426 + $0x254] sm:$0xf]
                  %599 = vst [vmem:[%s427 + $0x154] sm:$0xf] %v598
                  %v600 = vld [vmem:[%s426 + $0x258] sm:$0xf]
                  %601 = vst [vmem:[%s427 + $0x158] sm:$0xf] %v600
                  %v602 = vld [vmem:[%s426 + $0x25c] sm:$0xf]
                  %603 = vst [vmem:[%s427 + $0x15c] sm:$0xf] %v602
                  %v604 = vld [vmem:[%s426 + $0x260] sm:$0xf]
                  %605 = vst [vmem:[%s427 + $0x160] sm:$0xf] %v604
                  %v606 = vld [vmem:[%s426 + $0x264] sm:$0xf]
                  %607 = vst [vmem:[%s427 + $0x164] sm:$0xf] %v606
                  %v608 = vld [vmem:[%s426 + $0x268] sm:$0xf]
                  %609 = vst [vmem:[%s427 + $0x168] sm:$0xf] %v608
                  %v610 = vld [vmem:[%s426 + $0x26c] sm:$0xf]
                  %611 = vst [vmem:[%s427 + $0x16c] sm:$0xf] %v610
                  %v612 = vld [vmem:[%s426 + $0x270] sm:$0xf]
                  %613 = vst [vmem:[%s427 + $0x170] sm:$0xf] %v612
                  %v614 = vld [vmem:[%s426 + $0x274] sm:$0xf]
                  %615 = vst [vmem:[%s427 + $0x174] sm:$0xf] %v614
                  %v616 = vld [vmem:[%s426 + $0x278] sm:$0xf]
                  %617 = vst [vmem:[%s427 + $0x178] sm:$0xf] %v616
                  %v618 = vld [vmem:[%s426 + $0x27c] sm:$0xf]
                  %619 = vst [vmem:[%s427 + $0x17c] sm:$0xf] %v618
                  %v620 = vld [vmem:[%s426 + $0x300] sm:$0xf]
                  %621 = vst [vmem:[%s427 + $0x180] sm:$0xf] %v620
                  %v622 = vld [vmem:[%s426 + $0x304] sm:$0xf]
                  %623 = vst [vmem:[%s427 + $0x184] sm:$0xf] %v622
                  %v624 = vld [vmem:[%s426 + $0x308] sm:$0xf]
                  %625 = vst [vmem:[%s427 + $0x188] sm:$0xf] %v624
                  %v626 = vld [vmem:[%s426 + $0x30c] sm:$0xf]
                  %627 = vst [vmem:[%s427 + $0x18c] sm:$0xf] %v626
                  %v628 = vld [vmem:[%s426 + $0x310] sm:$0xf]
                  %629 = vst [vmem:[%s427 + $0x190] sm:$0xf] %v628
                  %v630 = vld [vmem:[%s426 + $0x314] sm:$0xf]
                  %631 = vst [vmem:[%s427 + $0x194] sm:$0xf] %v630
                  %v632 = vld [vmem:[%s426 + $0x318] sm:$0xf]
                  %633 = vst [vmem:[%s427 + $0x198] sm:$0xf] %v632
                  %v634 = vld [vmem:[%s426 + $0x31c] sm:$0xf]
                  %635 = vst [vmem:[%s427 + $0x19c] sm:$0xf] %v634
                  %v636 = vld [vmem:[%s426 + $0x320] sm:$0xf]
                  %637 = vst [vmem:[%s427 + $0x1a0] sm:$0xf] %v636
                  %v638 = vld [vmem:[%s426 + $0x324] sm:$0xf]
                  %639 = vst [vmem:[%s427 + $0x1a4] sm:$0xf] %v638
                  %v640 = vld [vmem:[%s426 + $0x328] sm:$0xf]
                  %641 = vst [vmem:[%s427 + $0x1a8] sm:$0xf] %v640
                  %v642 = vld [vmem:[%s426 + $0x32c] sm:$0xf]
                  %643 = vst [vmem:[%s427 + $0x1ac] sm:$0xf] %v642
                  %v644 = vld [vmem:[%s426 + $0x330] sm:$0xf]
                  %645 = vst [vmem:[%s427 + $0x1b0] sm:$0xf] %v644
                  %v646 = vld [vmem:[%s426 + $0x334] sm:$0xf]
                  %647 = vst [vmem:[%s427 + $0x1b4] sm:$0xf] %v646
                  %v648 = vld [vmem:[%s426 + $0x338] sm:$0xf]
                  %649 = vst [vmem:[%s427 + $0x1b8] sm:$0xf] %v648
                  %v650 = vld [vmem:[%s426 + $0x33c] sm:$0xf]
                  %651 = vst [vmem:[%s427 + $0x1bc] sm:$0xf] %v650
                  %v652 = vld [vmem:[%s426 + $0x340] sm:$0xf]
                  %653 = vst [vmem:[%s427 + $0x1c0] sm:$0xf] %v652
                  %v654 = vld [vmem:[%s426 + $0x344] sm:$0xf]
                  %655 = vst [vmem:[%s427 + $0x1c4] sm:$0xf] %v654
                  %v656 = vld [vmem:[%s426 + $0x348] sm:$0xf]
                  %657 = vst [vmem:[%s427 + $0x1c8] sm:$0xf] %v656
                  %v658 = vld [vmem:[%s426 + $0x34c] sm:$0xf]
                  %659 = vst [vmem:[%s427 + $0x1cc] sm:$0xf] %v658
                  %v660 = vld [vmem:[%s426 + $0x350] sm:$0xf]
                  %661 = vst [vmem:[%s427 + $0x1d0] sm:$0xf] %v660
                  %v662 = vld [vmem:[%s426 + $0x354] sm:$0xf]
                  %663 = vst [vmem:[%s427 + $0x1d4] sm:$0xf] %v662
                  %v664 = vld [vmem:[%s426 + $0x358] sm:$0xf]
                  %665 = vst [vmem:[%s427 + $0x1d8] sm:$0xf] %v664
                  %v666 = vld [vmem:[%s426 + $0x35c] sm:$0xf]
                  %667 = vst [vmem:[%s427 + $0x1dc] sm:$0xf] %v666
                  %v668 = vld [vmem:[%s426 + $0x360] sm:$0xf]
                  %669 = vst [vmem:[%s427 + $0x1e0] sm:$0xf] %v668
                  %v670 = vld [vmem:[%s426 + $0x364] sm:$0xf]
                  %671 = vst [vmem:[%s427 + $0x1e4] sm:$0xf] %v670
                  %v672 = vld [vmem:[%s426 + $0x368] sm:$0xf]
                  %673 = vst [vmem:[%s427 + $0x1e8] sm:$0xf] %v672
                  %v674 = vld [vmem:[%s426 + $0x36c] sm:$0xf]
                  %675 = vst [vmem:[%s427 + $0x1ec] sm:$0xf] %v674
                  %v676 = vld [vmem:[%s426 + $0x370] sm:$0xf]
                  %677 = vst [vmem:[%s427 + $0x1f0] sm:$0xf] %v676
                  %v678 = vld [vmem:[%s426 + $0x374] sm:$0xf]
                  %679 = vst [vmem:[%s427 + $0x1f4] sm:$0xf] %v678
                  %v680 = vld [vmem:[%s426 + $0x378] sm:$0xf]
                  %681 = vst [vmem:[%s427 + $0x1f8] sm:$0xf] %v680
                  %v682 = vld [vmem:[%s426 + $0x37c] sm:$0xf]
                  %683 = vst [vmem:[%s427 + $0x1fc] sm:$0xf] %v682
                $region63: #{net_forward.3} parent=50 // loop_footer
                  %s425 = sadd.s32 1, %s421
                $region64: #{net_forward.3} parent=50 // loop_footer_branch
                  %420 = sbr.rel target = $region60
                $region65: #{net_forward.3} parent=50 // loop_exit
                  _
              $region51: #{net_forward.3} parent=35 // pred_fallthru
                _
            $region36: #{net_forward.3} parent=31 // pred_fallthru
              _
            // Predicated region
            $region37: #{net_forward.3} parent=31 // pred_check
              _
            $region38: #{net_forward.3} parent=31 // pred_check_branch
              %143 = sbr.rel (0) target = $region40
            $region39: #{net_forward.3} parent=31 // pred_region
              loop: start=0, step=1, limit=1
              $region41: #{net_forward.3} parent=39 // loop_pre_header
                _
              $region42: #{net_forward.3} parent=39 // loop_header
                %s146 = sphi 0, %s150
                %p147 = scmp.ge.s32.totalorder %s146, 1
                %s151 = sphi %s137, %s137
                %s152 = sphi %s134, %s134
              $region43: #{net_forward.3} parent=39 // loop_header_branch
                %149 = sbr.rel (%p147) target = $region47
              $region44: #{net_forward.3} parent=39 // loop_body
                %v153 = vld [vmem:[%s151] sm:$0xf]
                %154 = vst [vmem:[%s152] sm:$0xf] %v153
                %v155 = vld [vmem:[%s151 + $0x4] sm:$0xf]
                %156 = vst [vmem:[%s152 + $0x4] sm:$0xf] %v155
                %v157 = vld [vmem:[%s151 + $0x8] sm:$0xf]
                %158 = vst [vmem:[%s152 + $0x8] sm:$0xf] %v157
                %v159 = vld [vmem:[%s151 + $0xc] sm:$0xf]
                %160 = vst [vmem:[%s152 + $0xc] sm:$0xf] %v159
                %v161 = vld [vmem:[%s151 + $0x10] sm:$0xf]
                %162 = vst [vmem:[%s152 + $0x10] sm:$0xf] %v161
                %v163 = vld [vmem:[%s151 + $0x14] sm:$0xf]
                %164 = vst [vmem:[%s152 + $0x14] sm:$0xf] %v163
                %v165 = vld [vmem:[%s151 + $0x18] sm:$0xf]
                %166 = vst [vmem:[%s152 + $0x18] sm:$0xf] %v165
                %v167 = vld [vmem:[%s151 + $0x1c] sm:$0xf]
                %168 = vst [vmem:[%s152 + $0x1c] sm:$0xf] %v167
                %v169 = vld [vmem:[%s151 + $0x20] sm:$0xf]
                %170 = vst [vmem:[%s152 + $0x20] sm:$0xf] %v169
                %v171 = vld [vmem:[%s151 + $0x24] sm:$0xf]
                %172 = vst [vmem:[%s152 + $0x24] sm:$0xf] %v171
                %v173 = vld [vmem:[%s151 + $0x28] sm:$0xf]
                %174 = vst [vmem:[%s152 + $0x28] sm:$0xf] %v173
                %v175 = vld [vmem:[%s151 + $0x2c] sm:$0xf]
                %176 = vst [vmem:[%s152 + $0x2c] sm:$0xf] %v175
                %v177 = vld [vmem:[%s151 + $0x30] sm:$0xf]
                %178 = vst [vmem:[%s152 + $0x30] sm:$0xf] %v177
                %v179 = vld [vmem:[%s151 + $0x34] sm:$0xf]
                %180 = vst [vmem:[%s152 + $0x34] sm:$0xf] %v179
                %v181 = vld [vmem:[%s151 + $0x38] sm:$0xf]
                %182 = vst [vmem:[%s152 + $0x38] sm:$0xf] %v181
                %v183 = vld [vmem:[%s151 + $0x3c] sm:$0xf]
                %184 = vst [vmem:[%s152 + $0x3c] sm:$0xf] %v183
                %v185 = vld [vmem:[%s151 + $0x40] sm:$0xf]
                %186 = vst [vmem:[%s152 + $0x40] sm:$0xf] %v185
                %v187 = vld [vmem:[%s151 + $0x44] sm:$0xf]
                %188 = vst [vmem:[%s152 + $0x44] sm:$0xf] %v187
                %v189 = vld [vmem:[%s151 + $0x48] sm:$0xf]
                %190 = vst [vmem:[%s152 + $0x48] sm:$0xf] %v189
                %v191 = vld [vmem:[%s151 + $0x4c] sm:$0xf]
                %192 = vst [vmem:[%s152 + $0x4c] sm:$0xf] %v191
                %v193 = vld [vmem:[%s151 + $0x50] sm:$0xf]
                %194 = vst [vmem:[%s152 + $0x50] sm:$0xf] %v193
                %v195 = vld [vmem:[%s151 + $0x54] sm:$0xf]
                %196 = vst [vmem:[%s152 + $0x54] sm:$0xf] %v195
                %v197 = vld [vmem:[%s151 + $0x58] sm:$0xf]
                %198 = vst [vmem:[%s152 + $0x58] sm:$0xf] %v197
                %v199 = vld [vmem:[%s151 + $0x5c] sm:$0xf]
                %200 = vst [vmem:[%s152 + $0x5c] sm:$0xf] %v199
                %v201 = vld [vmem:[%s151 + $0x60] sm:$0xf]
                %202 = vst [vmem:[%s152 + $0x60] sm:$0xf] %v201
                %v203 = vld [vmem:[%s151 + $0x64] sm:$0xf]
                %204 = vst [vmem:[%s152 + $0x64] sm:$0xf] %v203
                %v205 = vld [vmem:[%s151 + $0x68] sm:$0xf]
                %206 = vst [vmem:[%s152 + $0x68] sm:$0xf] %v205
                %v207 = vld [vmem:[%s151 + $0x6c] sm:$0xf]
                %208 = vst [vmem:[%s152 + $0x6c] sm:$0xf] %v207
                %v209 = vld [vmem:[%s151 + $0x70] sm:$0xf]
                %210 = vst [vmem:[%s152 + $0x70] sm:$0xf] %v209
                %v211 = vld [vmem:[%s151 + $0x74] sm:$0xf]
                %212 = vst [vmem:[%s152 + $0x74] sm:$0xf] %v211
                %v213 = vld [vmem:[%s151 + $0x78] sm:$0xf]
                %214 = vst [vmem:[%s152 + $0x78] sm:$0xf] %v213
                %v215 = vld [vmem:[%s151 + $0x7c] sm:$0xf]
                %216 = vst [vmem:[%s152 + $0x7c] sm:$0xf] %v215
                %v217 = vld [vmem:[%s151 + $0x100] sm:$0xf]
                %218 = vst [vmem:[%s152 + $0x80] sm:$0xf] %v217
                %v219 = vld [vmem:[%s151 + $0x104] sm:$0xf]
                %220 = vst [vmem:[%s152 + $0x84] sm:$0xf] %v219
                %v221 = vld [vmem:[%s151 + $0x108] sm:$0xf]
                %222 = vst [vmem:[%s152 + $0x88] sm:$0xf] %v221
                %v223 = vld [vmem:[%s151 + $0x10c] sm:$0xf]
                %224 = vst [vmem:[%s152 + $0x8c] sm:$0xf] %v223
                %v225 = vld [vmem:[%s151 + $0x110] sm:$0xf]
                %226 = vst [vmem:[%s152 + $0x90] sm:$0xf] %v225
                %v227 = vld [vmem:[%s151 + $0x114] sm:$0xf]
                %228 = vst [vmem:[%s152 + $0x94] sm:$0xf] %v227
                %v229 = vld [vmem:[%s151 + $0x118] sm:$0xf]
                %230 = vst [vmem:[%s152 + $0x98] sm:$0xf] %v229
                %v231 = vld [vmem:[%s151 + $0x11c] sm:$0xf]
                %232 = vst [vmem:[%s152 + $0x9c] sm:$0xf] %v231
                %v233 = vld [vmem:[%s151 + $0x120] sm:$0xf]
                %234 = vst [vmem:[%s152 + $0xa0] sm:$0xf] %v233
                %v235 = vld [vmem:[%s151 + $0x124] sm:$0xf]
                %236 = vst [vmem:[%s152 + $0xa4] sm:$0xf] %v235
                %v237 = vld [vmem:[%s151 + $0x128] sm:$0xf]
                %238 = vst [vmem:[%s152 + $0xa8] sm:$0xf] %v237
                %v239 = vld [vmem:[%s151 + $0x12c] sm:$0xf]
                %240 = vst [vmem:[%s152 + $0xac] sm:$0xf] %v239
                %v241 = vld [vmem:[%s151 + $0x130] sm:$0xf]
                %242 = vst [vmem:[%s152 + $0xb0] sm:$0xf] %v241
                %v243 = vld [vmem:[%s151 + $0x134] sm:$0xf]
                %244 = vst [vmem:[%s152 + $0xb4] sm:$0xf] %v243
                %v245 = vld [vmem:[%s151 + $0x138] sm:$0xf]
                %246 = vst [vmem:[%s152 + $0xb8] sm:$0xf] %v245
                %v247 = vld [vmem:[%s151 + $0x13c] sm:$0xf]
                %248 = vst [vmem:[%s152 + $0xbc] sm:$0xf] %v247
                %v249 = vld [vmem:[%s151 + $0x140] sm:$0xf]
                %250 = vst [vmem:[%s152 + $0xc0] sm:$0xf] %v249
                %v251 = vld [vmem:[%s151 + $0x144] sm:$0xf]
                %252 = vst [vmem:[%s152 + $0xc4] sm:$0xf] %v251
                %v253 = vld [vmem:[%s151 + $0x148] sm:$0xf]
                %254 = vst [vmem:[%s152 + $0xc8] sm:$0xf] %v253
                %v255 = vld [vmem:[%s151 + $0x14c] sm:$0xf]
                %256 = vst [vmem:[%s152 + $0xcc] sm:$0xf] %v255
                %v257 = vld [vmem:[%s151 + $0x150] sm:$0xf]
                %258 = vst [vmem:[%s152 + $0xd0] sm:$0xf] %v257
                %v259 = vld [vmem:[%s151 + $0x154] sm:$0xf]
                %260 = vst [vmem:[%s152 + $0xd4] sm:$0xf] %v259
                %v261 = vld [vmem:[%s151 + $0x158] sm:$0xf]
                %262 = vst [vmem:[%s152 + $0xd8] sm:$0xf] %v261
                %v263 = vld [vmem:[%s151 + $0x15c] sm:$0xf]
                %264 = vst [vmem:[%s152 + $0xdc] sm:$0xf] %v263
                %v265 = vld [vmem:[%s151 + $0x160] sm:$0xf]
                %266 = vst [vmem:[%s152 + $0xe0] sm:$0xf] %v265
                %v267 = vld [vmem:[%s151 + $0x164] sm:$0xf]
                %268 = vst [vmem:[%s152 + $0xe4] sm:$0xf] %v267
                %v269 = vld [vmem:[%s151 + $0x168] sm:$0xf]
                %270 = vst [vmem:[%s152 + $0xe8] sm:$0xf] %v269
                %v271 = vld [vmem:[%s151 + $0x16c] sm:$0xf]
                %272 = vst [vmem:[%s152 + $0xec] sm:$0xf] %v271
                %v273 = vld [vmem:[%s151 + $0x170] sm:$0xf]
                %274 = vst [vmem:[%s152 + $0xf0] sm:$0xf] %v273
                %v275 = vld [vmem:[%s151 + $0x174] sm:$0xf]
                %276 = vst [vmem:[%s152 + $0xf4] sm:$0xf] %v275
                %v277 = vld [vmem:[%s151 + $0x178] sm:$0xf]
                %278 = vst [vmem:[%s152 + $0xf8] sm:$0xf] %v277
                %v279 = vld [vmem:[%s151 + $0x17c] sm:$0xf]
                %280 = vst [vmem:[%s152 + $0xfc] sm:$0xf] %v279
                %v281 = vld [vmem:[%s151 + $0x200] sm:$0xf]
                %282 = vst [vmem:[%s152 + $0x100] sm:$0xf] %v281
                %v283 = vld [vmem:[%s151 + $0x204] sm:$0xf]
                %284 = vst [vmem:[%s152 + $0x104] sm:$0xf] %v283
                %v285 = vld [vmem:[%s151 + $0x208] sm:$0xf]
                %286 = vst [vmem:[%s152 + $0x108] sm:$0xf] %v285
                %v287 = vld [vmem:[%s151 + $0x20c] sm:$0xf]
                %288 = vst [vmem:[%s152 + $0x10c] sm:$0xf] %v287
                %v289 = vld [vmem:[%s151 + $0x210] sm:$0xf]
                %290 = vst [vmem:[%s152 + $0x110] sm:$0xf] %v289
                %v291 = vld [vmem:[%s151 + $0x214] sm:$0xf]
                %292 = vst [vmem:[%s152 + $0x114] sm:$0xf] %v291
                %v293 = vld [vmem:[%s151 + $0x218] sm:$0xf]
                %294 = vst [vmem:[%s152 + $0x118] sm:$0xf] %v293
                %v295 = vld [vmem:[%s151 + $0x21c] sm:$0xf]
                %296 = vst [vmem:[%s152 + $0x11c] sm:$0xf] %v295
                %v297 = vld [vmem:[%s151 + $0x220] sm:$0xf]
                %298 = vst [vmem:[%s152 + $0x120] sm:$0xf] %v297
                %v299 = vld [vmem:[%s151 + $0x224] sm:$0xf]
                %300 = vst [vmem:[%s152 + $0x124] sm:$0xf] %v299
                %v301 = vld [vmem:[%s151 + $0x228] sm:$0xf]
                %302 = vst [vmem:[%s152 + $0x128] sm:$0xf] %v301
                %v303 = vld [vmem:[%s151 + $0x22c] sm:$0xf]
                %304 = vst [vmem:[%s152 + $0x12c] sm:$0xf] %v303
                %v305 = vld [vmem:[%s151 + $0x230] sm:$0xf]
                %306 = vst [vmem:[%s152 + $0x130] sm:$0xf] %v305
                %v307 = vld [vmem:[%s151 + $0x234] sm:$0xf]
                %308 = vst [vmem:[%s152 + $0x134] sm:$0xf] %v307
                %v309 = vld [vmem:[%s151 + $0x238] sm:$0xf]
                %310 = vst [vmem:[%s152 + $0x138] sm:$0xf] %v309
                %v311 = vld [vmem:[%s151 + $0x23c] sm:$0xf]
                %312 = vst [vmem:[%s152 + $0x13c] sm:$0xf] %v311
                %v313 = vld [vmem:[%s151 + $0x240] sm:$0xf]
                %314 = vst [vmem:[%s152 + $0x140] sm:$0xf] %v313
                %v315 = vld [vmem:[%s151 + $0x244] sm:$0xf]
                %316 = vst [vmem:[%s152 + $0x144] sm:$0xf] %v315
                %v317 = vld [vmem:[%s151 + $0x248] sm:$0xf]
                %318 = vst [vmem:[%s152 + $0x148] sm:$0xf] %v317
                %v319 = vld [vmem:[%s151 + $0x24c] sm:$0xf]
                %320 = vst [vmem:[%s152 + $0x14c] sm:$0xf] %v319
                %v321 = vld [vmem:[%s151 + $0x250] sm:$0xf]
                %322 = vst [vmem:[%s152 + $0x150] sm:$0xf] %v321
                %v323 = vld [vmem:[%s151 + $0x254] sm:$0xf]
                %324 = vst [vmem:[%s152 + $0x154] sm:$0xf] %v323
                %v325 = vld [vmem:[%s151 + $0x258] sm:$0xf]
                %326 = vst [vmem:[%s152 + $0x158] sm:$0xf] %v325
                %v327 = vld [vmem:[%s151 + $0x25c] sm:$0xf]
                %328 = vst [vmem:[%s152 + $0x15c] sm:$0xf] %v327
                %v329 = vld [vmem:[%s151 + $0x260] sm:$0xf]
                %330 = vst [vmem:[%s152 + $0x160] sm:$0xf] %v329
                %v331 = vld [vmem:[%s151 + $0x264] sm:$0xf]
                %332 = vst [vmem:[%s152 + $0x164] sm:$0xf] %v331
                %v333 = vld [vmem:[%s151 + $0x268] sm:$0xf]
                %334 = vst [vmem:[%s152 + $0x168] sm:$0xf] %v333
                %v335 = vld [vmem:[%s151 + $0x26c] sm:$0xf]
                %336 = vst [vmem:[%s152 + $0x16c] sm:$0xf] %v335
                %v337 = vld [vmem:[%s151 + $0x270] sm:$0xf]
                %338 = vst [vmem:[%s152 + $0x170] sm:$0xf] %v337
                %v339 = vld [vmem:[%s151 + $0x274] sm:$0xf]
                %340 = vst [vmem:[%s152 + $0x174] sm:$0xf] %v339
                %v341 = vld [vmem:[%s151 + $0x278] sm:$0xf]
                %342 = vst [vmem:[%s152 + $0x178] sm:$0xf] %v341
                %v343 = vld [vmem:[%s151 + $0x27c] sm:$0xf]
                %344 = vst [vmem:[%s152 + $0x17c] sm:$0xf] %v343
                %v345 = vld [vmem:[%s151 + $0x300] sm:$0xf]
                %346 = vst [vmem:[%s152 + $0x180] sm:$0xf] %v345
                %v347 = vld [vmem:[%s151 + $0x304] sm:$0xf]
                %348 = vst [vmem:[%s152 + $0x184] sm:$0xf] %v347
                %v349 = vld [vmem:[%s151 + $0x308] sm:$0xf]
                %350 = vst [vmem:[%s152 + $0x188] sm:$0xf] %v349
                %v351 = vld [vmem:[%s151 + $0x30c] sm:$0xf]
                %352 = vst [vmem:[%s152 + $0x18c] sm:$0xf] %v351
                %v353 = vld [vmem:[%s151 + $0x310] sm:$0xf]
                %354 = vst [vmem:[%s152 + $0x190] sm:$0xf] %v353
                %v355 = vld [vmem:[%s151 + $0x314] sm:$0xf]
                %356 = vst [vmem:[%s152 + $0x194] sm:$0xf] %v355
                %v357 = vld [vmem:[%s151 + $0x318] sm:$0xf]
                %358 = vst [vmem:[%s152 + $0x198] sm:$0xf] %v357
                %v359 = vld [vmem:[%s151 + $0x31c] sm:$0xf]
                %360 = vst [vmem:[%s152 + $0x19c] sm:$0xf] %v359
                %v361 = vld [vmem:[%s151 + $0x320] sm:$0xf]
                %362 = vst [vmem:[%s152 + $0x1a0] sm:$0xf] %v361
                %v363 = vld [vmem:[%s151 + $0x324] sm:$0xf]
                %364 = vst [vmem:[%s152 + $0x1a4] sm:$0xf] %v363
                %v365 = vld [vmem:[%s151 + $0x328] sm:$0xf]
                %366 = vst [vmem:[%s152 + $0x1a8] sm:$0xf] %v365
                %v367 = vld [vmem:[%s151 + $0x32c] sm:$0xf]
                %368 = vst [vmem:[%s152 + $0x1ac] sm:$0xf] %v367
                %v369 = vld [vmem:[%s151 + $0x330] sm:$0xf]
                %370 = vst [vmem:[%s152 + $0x1b0] sm:$0xf] %v369
                %v371 = vld [vmem:[%s151 + $0x334] sm:$0xf]
                %372 = vst [vmem:[%s152 + $0x1b4] sm:$0xf] %v371
                %v373 = vld [vmem:[%s151 + $0x338] sm:$0xf]
                %374 = vst [vmem:[%s152 + $0x1b8] sm:$0xf] %v373
                %v375 = vld [vmem:[%s151 + $0x33c] sm:$0xf]
                %376 = vst [vmem:[%s152 + $0x1bc] sm:$0xf] %v375
                %v377 = vld [vmem:[%s151 + $0x340] sm:$0xf]
                %378 = vst [vmem:[%s152 + $0x1c0] sm:$0xf] %v377
                %v379 = vld [vmem:[%s151 + $0x344] sm:$0xf]
                %380 = vst [vmem:[%s152 + $0x1c4] sm:$0xf] %v379
                %v381 = vld [vmem:[%s151 + $0x348] sm:$0xf]
                %382 = vst [vmem:[%s152 + $0x1c8] sm:$0xf] %v381
                %v383 = vld [vmem:[%s151 + $0x34c] sm:$0xf]
                %384 = vst [vmem:[%s152 + $0x1cc] sm:$0xf] %v383
                %v385 = vld [vmem:[%s151 + $0x350] sm:$0xf]
                %386 = vst [vmem:[%s152 + $0x1d0] sm:$0xf] %v385
                %v387 = vld [vmem:[%s151 + $0x354] sm:$0xf]
                %388 = vst [vmem:[%s152 + $0x1d4] sm:$0xf] %v387
                %v389 = vld [vmem:[%s151 + $0x358] sm:$0xf]
                %390 = vst [vmem:[%s152 + $0x1d8] sm:$0xf] %v389
                %v391 = vld [vmem:[%s151 + $0x35c] sm:$0xf]
                %392 = vst [vmem:[%s152 + $0x1dc] sm:$0xf] %v391
                %v393 = vld [vmem:[%s151 + $0x360] sm:$0xf]
                %394 = vst [vmem:[%s152 + $0x1e0] sm:$0xf] %v393
                %v395 = vld [vmem:[%s151 + $0x364] sm:$0xf]
                %396 = vst [vmem:[%s152 + $0x1e4] sm:$0xf] %v395
                %v397 = vld [vmem:[%s151 + $0x368] sm:$0xf]
                %398 = vst [vmem:[%s152 + $0x1e8] sm:$0xf] %v397
                %v399 = vld [vmem:[%s151 + $0x36c] sm:$0xf]
                %400 = vst [vmem:[%s152 + $0x1ec] sm:$0xf] %v399
                %v401 = vld [vmem:[%s151 + $0x370] sm:$0xf]
                %402 = vst [vmem:[%s152 + $0x1f0] sm:$0xf] %v401
                %v403 = vld [vmem:[%s151 + $0x374] sm:$0xf]
                %404 = vst [vmem:[%s152 + $0x1f4] sm:$0xf] %v403
                %v405 = vld [vmem:[%s151 + $0x378] sm:$0xf]
                %406 = vst [vmem:[%s152 + $0x1f8] sm:$0xf] %v405
                %v407 = vld [vmem:[%s151 + $0x37c] sm:$0xf]
                %408 = vst [vmem:[%s152 + $0x1fc] sm:$0xf] %v407
              $region45: #{net_forward.3} parent=39 // loop_footer
                %s150 = sadd.s32 1, %s146
              $region46: #{net_forward.3} parent=39 // loop_footer_branch
                %145 = sbr.rel target = $region42
              $region47: #{net_forward.3} parent=39 // loop_exit
                _
            $region40: #{net_forward.3} parent=31 // pred_fallthru
              _
          $region32: #{net_forward.3} parent=27 // pred_fallthru
            _
          %684 = vnop
        $region28: #{net_forward.3} parent=23 // pred_fallthru
          _
      $region24: #{net_forward.3} parent=5 // pred_fallthru
        _
      %p685 = scmp.le.s32.totalorder 1, %s9
      %p686 = scmp.lt.s32.totalorder %s9, 3
      %p687 = pnand %p685, %p686
      %p688 = pneg %p687
      // Predicated region
      $region66: #{net_forward.3} parent=5 // pred_check
        _
      $region67: #{net_forward.3} parent=5 // pred_check_branch
        %690 = sbr.rel (%p687) target = $region69
      $region68: #{net_forward.3} parent=5 // pred_region
        %s691 = ssub.s32 %s9, 1
        %s692 = sand.u32 %s22, 1
        %s693 = sand.u32 %s22, 1
        %s694 = smul.addr %s693, 512
        %s695 = scalar_lea.vmem [#allocation2], %s694
        // Predicated region
        $region70: #{net_forward.3} parent=68 // pred_check
          %p696 = pneg %p35
        $region71: #{net_forward.3} parent=68 // pred_check_branch
          %698 = sbr.rel (%p696) target = $region73
        $region72: #{net_forward.3} parent=68 // pred_region
          _
        $region73: #{net_forward.3} parent=68 // pred_fallthru
          _
        %s699 = sand.u32 %s22, 1
        %s700 = sand.u32 %s22, 1
        %s701 = smul.addr %s700, 512
        %s702 = scalar_lea.vmem [#allocation2], %s701
        %p703 = pneg %p35
        %p704 = pneg %p32
        %p705 = pneg %p56
        %p706 = pneg %p53
        %p707 = pneg %p77
        %p708 = pneg %p74
        %p709 = pneg %p103
        %p710 = pneg %p100
        %s711 = smul.u32 32, %s14
        %p712 = scmp.lt.s32.totalorder %s711, 63
        %s713 = scalar_select %p712, %s711, 63
        %s714 = smul.addr %s713, 4
        %s715 = scalar_lea.vmem %s3, %s714
        %s716 = smul.u32 32, %s14
        %s717 = smul.u32 32, %s14
        %p718 = scmp.lt.s32.totalorder %s717, 63
        %s719 = scalar_select %p718, %s717, 63
        %s720 = smul.addr %s719, 4
        %s721 = scalar_lea.vmem %s3, %s720
        %s722 = smul.u32 32, %s14
        %v724 = vld [vmem:[%s1] sm:$0xf]
        %v725 = vld [vmem:[%s1 + $0x4] sm:$0xf]
        %v726 = vld [vmem:[%s1 + $0x8] sm:$0xf]
        %v727 = vld [vmem:[%s1 + $0xc] sm:$0xf]
        %v728 = vld [vmem:[%s1 + $0x10] sm:$0xf]
        %v729 = vld [vmem:[%s1 + $0x14] sm:$0xf]
        %v730 = vld [vmem:[%s1 + $0x18] sm:$0xf]
        %v731 = vld [vmem:[%s1 + $0x1c] sm:$0xf]
        %v732 = vld [vmem:[%s1 + $0x20] sm:$0xf]
        %v733 = vld [vmem:[%s1 + $0x24] sm:$0xf]
        %v734 = vld [vmem:[%s1 + $0x28] sm:$0xf]
        %v735 = vld [vmem:[%s1 + $0x2c] sm:$0xf]
        %v736 = vld [vmem:[%s1 + $0x30] sm:$0xf]
        %v737 = vld [vmem:[%s1 + $0x34] sm:$0xf]
        %v738 = vld [vmem:[%s1 + $0x38] sm:$0xf]
        %v739 = vld [vmem:[%s1 + $0x3c] sm:$0xf]
        %v740 = vld [vmem:[%s2] sm:$0x1]
        %v741 = vld [vmem:[%s695] sm:$0xf]
        %v742 = vld [vmem:[%s695 + $0x4] sm:$0xf]
        %v743 = vld [vmem:[%s695 + $0x8] sm:$0xf]
        %v744 = vld [vmem:[%s695 + $0xc] sm:$0xf]
        %v745 = vld [vmem:[%s695 + $0x10] sm:$0xf]
        %v746 = vld [vmem:[%s695 + $0x14] sm:$0xf]
        %v747 = vld [vmem:[%s695 + $0x18] sm:$0xf]
        %v748 = vld [vmem:[%s695 + $0x1c] sm:$0xf]
        %v749 = vld [vmem:[%s695 + $0x20] sm:$0xf]
        %v750 = vld [vmem:[%s695 + $0x24] sm:$0xf]
        %v751 = vld [vmem:[%s695 + $0x28] sm:$0xf]
        %v752 = vld [vmem:[%s695 + $0x2c] sm:$0xf]
        %v753 = vld [vmem:[%s695 + $0x30] sm:$0xf]
        %v754 = vld [vmem:[%s695 + $0x34] sm:$0xf]
        %v755 = vld [vmem:[%s695 + $0x38] sm:$0xf]
        %v756 = vld [vmem:[%s695 + $0x3c] sm:$0xf]
        %v757 = vld [vmem:[%s695 + $0x40] sm:$0xf]
        %v758 = vld [vmem:[%s695 + $0x44] sm:$0xf]
        %v759 = vld [vmem:[%s695 + $0x48] sm:$0xf]
        %v760 = vld [vmem:[%s695 + $0x4c] sm:$0xf]
        %v761 = vld [vmem:[%s695 + $0x50] sm:$0xf]
        %v762 = vld [vmem:[%s695 + $0x54] sm:$0xf]
        %v763 = vld [vmem:[%s695 + $0x58] sm:$0xf]
        %v764 = vld [vmem:[%s695 + $0x5c] sm:$0xf]
        %v765 = vld [vmem:[%s695 + $0x60] sm:$0xf]
        %v766 = vld [vmem:[%s695 + $0x64] sm:$0xf]
        %v767 = vld [vmem:[%s695 + $0x68] sm:$0xf]
        %v768 = vld [vmem:[%s695 + $0x6c] sm:$0xf]
        %v769 = vld [vmem:[%s695 + $0x70] sm:$0xf]
        %v770 = vld [vmem:[%s695 + $0x74] sm:$0xf]
        %v771 = vld [vmem:[%s695 + $0x78] sm:$0xf]
        %v772 = vld [vmem:[%s695 + $0x7c] sm:$0xf]
        %v774 = vlaneseq
        %v775 = vshrl.u32 %v774, 7
        %v776 = vsub.s32 0, %v775
        %v777 = vrot.slane %v740, %v776
        %v811 = vunpack.c.l.b16 %v741
        %v812 = vunpack.c.l.b16 %v742
        %v813 = vunpack.c.l.b16 %v743
        %v814 = vunpack.c.l.b16 %v744
        %v815 = vunpack.c.l.b16 %v745
        %v816 = vunpack.c.l.b16 %v746
        %v817 = vunpack.c.l.b16 %v747
        %v818 = vunpack.c.l.b16 %v748
        %v819 = vunpack.c.l.b16 %v749
        %v820 = vunpack.c.l.b16 %v750
        %v821 = vunpack.c.l.b16 %v751
        %v822 = vunpack.c.l.b16 %v752
        %v823 = vunpack.c.l.b16 %v753
        %v824 = vunpack.c.l.b16 %v754
        %v825 = vunpack.c.l.b16 %v755
        %v826 = vunpack.c.l.b16 %v756
        %v827 = vunpack.c.l.b16 %v757
        %v828 = vunpack.c.l.b16 %v758
        %v829 = vunpack.c.l.b16 %v759
        %v830 = vunpack.c.l.b16 %v760
        %v831 = vunpack.c.l.b16 %v761
        %v832 = vunpack.c.l.b16 %v762
        %v833 = vunpack.c.l.b16 %v763
        %v834 = vunpack.c.l.b16 %v764
        %v835 = vunpack.c.l.b16 %v765
        %v836 = vunpack.c.l.b16 %v766
        %v837 = vunpack.c.l.b16 %v767
        %v838 = vunpack.c.l.b16 %v768
        %v839 = vunpack.c.l.b16 %v769
        %v840 = vunpack.c.l.b16 %v770
        %v841 = vunpack.c.l.b16 %v771
        %v842 = vunpack.c.l.b16 %v772
        %v843 = vpack.c.b16 %v812, %v811
        %v844 = vpack.c.b16 %v814, %v813
        %v845 = vpack.c.b16 %v816, %v815
        %v846 = vpack.c.b16 %v818, %v817
        %v847 = vpack.c.b16 %v820, %v819
        %v848 = vpack.c.b16 %v822, %v821
        %v849 = vpack.c.b16 %v824, %v823
        %v850 = vpack.c.b16 %v826, %v825
        %v851 = vpack.c.b16 %v828, %v827
        %v852 = vpack.c.b16 %v830, %v829
        %v853 = vpack.c.b16 %v832, %v831
        %v854 = vpack.c.b16 %v834, %v833
        %v855 = vpack.c.b16 %v836, %v835
        %v856 = vpack.c.b16 %v838, %v837
        %v857 = vpack.c.b16 %v840, %v839
        %v858 = vpack.c.b16 %v842, %v841
        %v891 = vunpack.c.l.b16 %v724
        %v892 = vunpack.c.l.b16 %v725
        %v893 = vunpack.c.l.b16 %v726
        %v894 = vunpack.c.l.b16 %v727
        %v895 = vunpack.c.l.b16 %v728
        %v896 = vunpack.c.l.b16 %v729
        %v897 = vunpack.c.l.b16 %v730
        %v898 = vunpack.c.l.b16 %v731
        %v899 = vunpack.c.l.b16 %v732
        %v900 = vunpack.c.l.b16 %v733
        %v901 = vunpack.c.l.b16 %v734
        %v902 = vunpack.c.l.b16 %v735
        %v903 = vunpack.c.l.b16 %v736
        %v904 = vunpack.c.l.b16 %v737
        %v905 = vunpack.c.l.b16 %v738
        %v906 = vunpack.c.l.b16 %v739
        %v907 = vpack.c.b16 %v892, %v891
        %v908 = vpack.c.b16 %v894, %v893
        %v909 = vpack.c.b16 %v896, %v895
        %v910 = vpack.c.b16 %v898, %v897
        %v911 = vpack.c.b16 %v900, %v899
        %v912 = vpack.c.b16 %v902, %v901
        %v913 = vpack.c.b16 %v904, %v903
        %v914 = vpack.c.b16 %v906, %v905
        %923 = vmatprep.subr.bf16.mxu0 0
        %924 = vmatpush1.bf16.msra.mxu0 %v907
        %925 = vmatprep.subr.bf16.mxu0 0
        %926 = vmatpush1.bf16.msra.mxu0 %v908
        %927 = vmatprep.subr.bf16.mxu0 0
        %928 = vmatpush1.bf16.msra.mxu0 %v909
        %929 = vmatprep.subr.bf16.mxu0 0
        %930 = vmatpush1.bf16.msra.mxu0 %v910
        %931 = vmatprep.subr.bf16.mxu0 0
        %932 = vmatpush1.bf16.msra.mxu0 %v911
        %933 = vmatprep.subr.bf16.mxu0 0
        %934 = vmatpush1.bf16.msra.mxu0 %v912
        %935 = vmatprep.subr.bf16.mxu0 0
        %936 = vmatpush1.bf16.msra.mxu0 %v913
        %937 = vmatprep.subr.bf16.mxu0 0
        %938 = vmatpush1.bf16.msra.mxu0 %v914
        %939 = vmatprep.subr.bf16.mxu0 0
        %940 = vmatpush1.bf16.msra.mxu0 0
        %941 = vmatprep.subr.bf16.mxu0 0
        %942 = vmatpush1.bf16.msra.mxu0 0
        %943 = vmatprep.subr.bf16.mxu0 0
        %944 = vmatpush1.bf16.msra.mxu0 0
        %945 = vmatprep.subr.bf16.mxu0 0
        %946 = vmatpush1.bf16.msra.mxu0 0
        %947 = vmatprep.subr.bf16.mxu0 0
        %948 = vmatpush1.bf16.msra.mxu0 0
        %949 = vmatprep.subr.bf16.mxu0 0
        %950 = vmatpush1.bf16.msra.mxu0 0
        %951 = vmatprep.subr.bf16.mxu0 0
        %952 = vmatpush1.bf16.msra.mxu0 0
        %953 = vmatprep.subr.bf16.mxu0 0
        %954 = vmatpush1.bf16.msra.mxu0 0
        %955 = vmatprep.mubr.bf16.mxu0 0
        %956 = vmatmul.mubr.bf16.gmra.mrb[0].mxu0 %v843
        %v957 = vpop.f32.mrb[0].mxu0
        %v958 = vadd.f32 %v777, %v957
        %v959 = vpop.f32.mrb[0].mxu0
        %v960 = vpop.f32.mrb[0].mxu0
        %v961 = vadd.f32 %v777, %v960
        %v962 = vpop.f32.mrb[0].mxu0
        %963 = vmatprep.mubr.bf16.mxu0 0
        %964 = vmatmul.mubr.bf16.gmra.mrb[0].mxu0 %v844
        %v965 = vpop.f32.mrb[0].mxu0
        %v966 = vadd.f32 %v777, %v965
        %v967 = vpop.f32.mrb[0].mxu0
        %v968 = vpop.f32.mrb[0].mxu0
        %v969 = vadd.f32 %v777, %v968
        %v970 = vpop.f32.mrb[0].mxu0
        %971 = vmatprep.mubr.bf16.mxu0 0
        %972 = vmatmul.mubr.bf16.gmra.mrb[0].mxu0 %v845
        %v973 = vpop.f32.mrb[0].mxu0
        %v974 = vadd.f32 %v777, %v973
        %v975 = vpop.f32.mrb[0].mxu0
        %v976 = vpop.f32.mrb[0].mxu0
        %v977 = vadd.f32 %v777, %v976
        %v978 = vpop.f32.mrb[0].mxu0
        %979 = vmatprep.mubr.bf16.mxu0 0
        %980 = vmatmul.mubr.bf16.gmra.mrb[0].mxu0 %v846
        %v981 = vpop.f32.mrb[0].mxu0
        %v982 = vadd.f32 %v777, %v981
        %v983 = vpop.f32.mrb[0].mxu0
        %v984 = vpop.f32.mrb[0].mxu0
        %v985 = vadd.f32 %v777, %v984
        %v986 = vpop.f32.mrb[0].mxu0
        %987 = vmatprep.mubr.bf16.mxu0 0
        %988 = vmatmul.mubr.bf16.gmra.mrb[0].mxu0 %v847
        %v989 = vpop.f32.mrb[0].mxu0
        %v990 = vadd.f32 %v777, %v989
        %v991 = vpop.f32.mrb[0].mxu0
        %v992 = vpop.f32.mrb[0].mxu0
        %v993 = vadd.f32 %v777, %v992
        %v994 = vpop.f32.mrb[0].mxu0
        %995 = vmatprep.mubr.bf16.mxu0 0
        %996 = vmatmul.mubr.bf16.gmra.mrb[0].mxu0 %v848
        %v997 = vpop.f32.mrb[0].mxu0
        %v998 = vadd.f32 %v777, %v997
        %v999 = vpop.f32.mrb[0].mxu0
        %v1000 = vpop.f32.mrb[0].mxu0
        %v1001 = vadd.f32 %v777, %v1000
        %v1002 = vpop.f32.mrb[0].mxu0
        %1003 = vmatprep.mubr.bf16.mxu0 0
        %1004 = vmatmul.mubr.bf16.gmra.mrb[0].mxu0 %v849
        %v1005 = vpop.f32.mrb[0].mxu0
        %v1006 = vadd.f32 %v777, %v1005
        %v1007 = vpop.f32.mrb[0].mxu0
        %v1008 = vpop.f32.mrb[0].mxu0
        %v1009 = vadd.f32 %v777, %v1008
        %v1010 = vpop.f32.mrb[0].mxu0
        %1011 = vmatprep.mubr.bf16.mxu0 0
        %1012 = vmatmul.mubr.bf16.gmra.mrb[0].mxu0 %v850
        %v1013 = vpop.f32.mrb[0].mxu0
        %v1014 = vadd.f32 %v777, %v1013
        %v1015 = vpop.f32.mrb[0].mxu0
        %v1016 = vpop.f32.mrb[0].mxu0
        %v1017 = vadd.f32 %v777, %v1016
        %v1018 = vpop.f32.mrb[0].mxu0
        %1019 = vmatprep.mubr.bf16.mxu0 0
        %1020 = vmatmul.mubr.bf16.gmra.mrb[0].mxu0 %v851
        %v1021 = vpop.f32.mrb[0].mxu0
        %v1022 = vadd.f32 %v777, %v1021
        %v1023 = vpop.f32.mrb[0].mxu0
        %v1024 = vpop.f32.mrb[0].mxu0
        %v1025 = vadd.f32 %v777, %v1024
        %v1026 = vpop.f32.mrb[0].mxu0
        %1027 = vmatprep.mubr.bf16.mxu0 0
        %1028 = vmatmul.mubr.bf16.gmra.mrb[0].mxu0 %v852
        %v1029 = vpop.f32.mrb[0].mxu0
        %v1030 = vadd.f32 %v777, %v1029
        %v1031 = vpop.f32.mrb[0].mxu0
        %v1032 = vpop.f32.mrb[0].mxu0
        %v1033 = vadd.f32 %v777, %v1032
        %v1034 = vpop.f32.mrb[0].mxu0
        %1035 = vmatprep.mubr.bf16.mxu0 0
        %1036 = vmatmul.mubr.bf16.gmra.mrb[0].mxu0 %v853
        %v1037 = vpop.f32.mrb[0].mxu0
        %v1038 = vadd.f32 %v777, %v1037
        %v1039 = vpop.f32.mrb[0].mxu0
        %v1040 = vpop.f32.mrb[0].mxu0
        %v1041 = vadd.f32 %v777, %v1040
        %v1042 = vpop.f32.mrb[0].mxu0
        %1043 = vmatprep.mubr.bf16.mxu0 0
        %1044 = vmatmul.mubr.bf16.gmra.mrb[0].mxu0 %v854
        %v1045 = vpop.f32.mrb[0].mxu0
        %v1046 = vadd.f32 %v777, %v1045
        %v1047 = vpop.f32.mrb[0].mxu0
        %v1048 = vpop.f32.mrb[0].mxu0
        %v1049 = vadd.f32 %v777, %v1048
        %v1050 = vpop.f32.mrb[0].mxu0
        %1051 = vmatprep.mubr.bf16.mxu0 0
        %1052 = vmatmul.mubr.bf16.gmra.mrb[0].mxu0 %v855
        %v1053 = vpop.f32.mrb[0].mxu0
        %v1054 = vadd.f32 %v777, %v1053
        %v1055 = vpop.f32.mrb[0].mxu0
        %v1056 = vpop.f32.mrb[0].mxu0
        %v1057 = vadd.f32 %v777, %v1056
        %v1058 = vpop.f32.mrb[0].mxu0
        %1059 = vmatprep.mubr.bf16.mxu0 0
        %1060 = vmatmul.mubr.bf16.gmra.mrb[0].mxu0 %v856
        %v1061 = vpop.f32.mrb[0].mxu0
        %v1062 = vadd.f32 %v777, %v1061
        %v1063 = vpop.f32.mrb[0].mxu0
        %v1064 = vpop.f32.mrb[0].mxu0
        %v1065 = vadd.f32 %v777, %v1064
        %v1066 = vpop.f32.mrb[0].mxu0
        %1067 = vmatprep.mubr.bf16.mxu0 0
        %1068 = vmatmul.mubr.bf16.gmra.mrb[0].mxu0 %v857
        %v1069 = vpop.f32.mrb[0].mxu0
        %v1070 = vadd.f32 %v777, %v1069
        %v1071 = vpop.f32.mrb[0].mxu0
        %v1072 = vpop.f32.mrb[0].mxu0
        %v1073 = vadd.f32 %v777, %v1072
        %v1074 = vpop.f32.mrb[0].mxu0
        %1075 = vmatprep.mubr.bf16.mxu0 0
        %1076 = vmatmul.mubr.bf16.gmra.mrb[0].mxu0 %v858
        %v1077 = vpop.f32.mrb[0].mxu0
        %v1078 = vadd.f32 %v777, %v1077
        %v1079 = vpop.f32.mrb[0].mxu0
        %v1080 = vpop.f32.mrb[0].mxu0
        %v1081 = vadd.f32 %v777, %v1080
        %v1082 = vpop.f32.mrb[0].mxu0
        %1083 = vdwg.mxu0
        %v1084 = vmax.f32 %v958, 0.0
        %v1085 = vmax.f32 %v961, 0.0
        %v1086 = vmax.f32 %v966, 0.0
        %v1087 = vmax.f32 %v969, 0.0
        %v1088 = vmax.f32 %v974, 0.0
        %v1089 = vmax.f32 %v977, 0.0
        %v1090 = vmax.f32 %v982, 0.0
        %v1091 = vmax.f32 %v985, 0.0
        %v1092 = vmax.f32 %v990, 0.0
        %v1093 = vmax.f32 %v993, 0.0
        %v1094 = vmax.f32 %v998, 0.0
        %v1095 = vmax.f32 %v1001, 0.0
        %v1096 = vmax.f32 %v1006, 0.0
        %v1097 = vmax.f32 %v1009, 0.0
        %v1098 = vmax.f32 %v1014, 0.0
        %v1099 = vmax.f32 %v1017, 0.0
        %v1100 = vmax.f32 %v1022, 0.0
        %v1101 = vmax.f32 %v1025, 0.0
        %v1102 = vmax.f32 %v1030, 0.0
        %v1103 = vmax.f32 %v1033, 0.0
        %v1104 = vmax.f32 %v1038, 0.0
        %v1105 = vmax.f32 %v1041, 0.0
        %v1106 = vmax.f32 %v1046, 0.0
        %v1107 = vmax.f32 %v1049, 0.0
        %v1108 = vmax.f32 %v1054, 0.0
        %v1109 = vmax.f32 %v1057, 0.0
        %v1110 = vmax.f32 %v1062, 0.0
        %v1111 = vmax.f32 %v1065, 0.0
        %v1112 = vmax.f32 %v1070, 0.0
        %v1113 = vmax.f32 %v1073, 0.0
        %v1114 = vmax.f32 %v1078, 0.0
        %v1115 = vmax.f32 %v1081, 0.0
        %s1116 = scalar_lea.vmem %s695, 128 [#allocation2]
        %v1117 = vld [vmem:[%s1116] sm:$0xf]
        %v1118 = vld [vmem:[%s1116 + $0x4] sm:$0xf]
        %v1119 = vld [vmem:[%s1116 + $0x8] sm:$0xf]
        %v1120 = vld [vmem:[%s1116 + $0xc] sm:$0xf]
        %v1121 = vld [vmem:[%s1116 + $0x10] sm:$0xf]
        %v1122 = vld [vmem:[%s1116 + $0x14] sm:$0xf]
        %v1123 = vld [vmem:[%s1116 + $0x18] sm:$0xf]
        %v1124 = vld [vmem:[%s1116 + $0x1c] sm:$0xf]
        %v1125 = vld [vmem:[%s1116 + $0x20] sm:$0xf]
        %v1126 = vld [vmem:[%s1116 + $0x24] sm:$0xf]
        %v1127 = vld [vmem:[%s1116 + $0x28] sm:$0xf]
        %v1128 = vld [vmem:[%s1116 + $0x2c] sm:$0xf]
        %v1129 = vld [vmem:[%s1116 + $0x30] sm:$0xf]
        %v1130 = vld [vmem:[%s1116 + $0x34] sm:$0xf]
        %v1131 = vld [vmem:[%s1116 + $0x38] sm:$0xf]
        %v1132 = vld [vmem:[%s1116 + $0x3c] sm:$0xf]
        %v1133 = vld [vmem:[%s1116 + $0x40] sm:$0xf]
        %v1134 = vld [vmem:[%s1116 + $0x44] sm:$0xf]
        %v1135 = vld [vmem:[%s1116 + $0x48] sm:$0xf]
        %v1136 = vld [vmem:[%s1116 + $0x4c] sm:$0xf]
        %v1137 = vld [vmem:[%s1116 + $0x50] sm:$0xf]
        %v1138 = vld [vmem:[%s1116 + $0x54] sm:$0xf]
        %v1139 = vld [vmem:[%s1116 + $0x58] sm:$0xf]
        %v1140 = vld [vmem:[%s1116 + $0x5c] sm:$0xf]
        %v1141 = vld [vmem:[%s1116 + $0x60] sm:$0xf]
        %v1142 = vld [vmem:[%s1116 + $0x64] sm:$0xf]
        %v1143 = vld [vmem:[%s1116 + $0x68] sm:$0xf]
        %v1144 = vld [vmem:[%s1116 + $0x6c] sm:$0xf]
        %v1145 = vld [vmem:[%s1116 + $0x70] sm:$0xf]
        %v1146 = vld [vmem:[%s1116 + $0x74] sm:$0xf]
        %v1147 = vld [vmem:[%s1116 + $0x78] sm:$0xf]
        %v1148 = vld [vmem:[%s1116 + $0x7c] sm:$0xf]
        %v1181 = vunpack.c.l.b16 %v1117
        %v1182 = vunpack.c.l.b16 %v1118
        %v1183 = vunpack.c.l.b16 %v1119
        %v1184 = vunpack.c.l.b16 %v1120
        %v1185 = vunpack.c.l.b16 %v1121
        %v1186 = vunpack.c.l.b16 %v1122
        %v1187 = vunpack.c.l.b16 %v1123
        %v1188 = vunpack.c.l.b16 %v1124
        %v1189 = vunpack.c.l.b16 %v1125
        %v1190 = vunpack.c.l.b16 %v1126
        %v1191 = vunpack.c.l.b16 %v1127
        %v1192 = vunpack.c.l.b16 %v1128
        %v1193 = vunpack.c.l.b16 %v1129
        %v1194 = vunpack.c.l.b16 %v1130
        %v1195 = vunpack.c.l.b16 %v1131
        %v1196 = vunpack.c.l.b16 %v1132
        %v1197 = vunpack.c.l.b16 %v1133
        %v1198 = vunpack.c.l.b16 %v1134
        %v1199 = vunpack.c.l.b16 %v1135
        %v1200 = vunpack.c.l.b16 %v1136
        %v1201 = vunpack.c.l.b16 %v1137
        %v1202 = vunpack.c.l.b16 %v1138
        %v1203 = vunpack.c.l.b16 %v1139
        %v1204 = vunpack.c.l.b16 %v1140
        %v1205 = vunpack.c.l.b16 %v1141
        %v1206 = vunpack.c.l.b16 %v1142
        %v1207 = vunpack.c.l.b16 %v1143
        %v1208 = vunpack.c.l.b16 %v1144
        %v1209 = vunpack.c.l.b16 %v1145
        %v1210 = vunpack.c.l.b16 %v1146
        %v1211 = vunpack.c.l.b16 %v1147
        %v1212 = vunpack.c.l.b16 %v1148
        %v1213 = vpack.c.b16 %v1182, %v1181
        %v1214 = vpack.c.b16 %v1184, %v1183
        %v1215 = vpack.c.b16 %v1186, %v1185
        %v1216 = vpack.c.b16 %v1188, %v1187
        %v1217 = vpack.c.b16 %v1190, %v1189
        %v1218 = vpack.c.b16 %v1192, %v1191
        %v1219 = vpack.c.b16 %v1194, %v1193
        %v1220 = vpack.c.b16 %v1196, %v1195
        %v1221 = vpack.c.b16 %v1198, %v1197
        %v1222 = vpack.c.b16 %v1200, %v1199
        %v1223 = vpack.c.b16 %v1202, %v1201
        %v1224 = vpack.c.b16 %v1204, %v1203
        %v1225 = vpack.c.b16 %v1206, %v1205
        %v1226 = vpack.c.b16 %v1208, %v1207
        %v1227 = vpack.c.b16 %v1210, %v1209
        %v1228 = vpack.c.b16 %v1212, %v1211
        %1245 = vmatprep.subr.bf16.mxu0 0
        %1246 = vmatpush1.bf16.msra.mxu0 %v907
        %1247 = vmatprep.subr.bf16.mxu0 0
        %1248 = vmatpush1.bf16.msra.mxu0 %v908
        %1249 = vmatprep.subr.bf16.mxu0 0
        %1250 = vmatpush1.bf16.msra.mxu0 %v909
        %1251 = vmatprep.subr.bf16.mxu0 0
        %1252 = vmatpush1.bf16.msra.mxu0 %v910
        %1253 = vmatprep.subr.bf16.mxu0 0
        %1254 = vmatpush1.bf16.msra.mxu0 %v911
        %1255 = vmatprep.subr.bf16.mxu0 0
        %1256 = vmatpush1.bf16.msra.mxu0 %v912
        %1257 = vmatprep.subr.bf16.mxu0 0
        %1258 = vmatpush1.bf16.msra.mxu0 %v913
        %1259 = vmatprep.subr.bf16.mxu0 0
        %1260 = vmatpush1.bf16.msra.mxu0 %v914
        %1261 = vmatprep.subr.bf16.mxu0 0
        %1262 = vmatpush1.bf16.msra.mxu0 0
        %1263 = vmatprep.subr.bf16.mxu0 0
        %1264 = vmatpush1.bf16.msra.mxu0 0
        %1265 = vmatprep.subr.bf16.mxu0 0
        %1266 = vmatpush1.bf16.msra.mxu0 0
        %1267 = vmatprep.subr.bf16.mxu0 0
        %1268 = vmatpush1.bf16.msra.mxu0 0
        %1269 = vmatprep.subr.bf16.mxu0 0
        %1270 = vmatpush1.bf16.msra.mxu0 0
        %1271 = vmatprep.subr.bf16.mxu0 0
        %1272 = vmatpush1.bf16.msra.mxu0 0
        %1273 = vmatprep.subr.bf16.mxu0 0
        %1274 = vmatpush1.bf16.msra.mxu0 0
        %1275 = vmatprep.subr.bf16.mxu0 0
        %1276 = vmatpush1.bf16.msra.mxu0 0
        %1277 = vmatprep.mubr.bf16.mxu0 0
        %1278 = vmatmul.mubr.bf16.gmra.mrb[0].mxu0 %v1213
        %v1279 = vpop.f32.mrb[0].mxu0
        %v1280 = vadd.f32 %v777, %v1279
        %v1281 = vpop.f32.mrb[0].mxu0
        %v1282 = vpop.f32.mrb[0].mxu0
        %v1283 = vadd.f32 %v777, %v1282
        %v1284 = vpop.f32.mrb[0].mxu0
        %1285 = vmatprep.mubr.bf16.mxu0 0
        %1286 = vmatmul.mubr.bf16.gmra.mrb[0].mxu0 %v1214
        %v1287 = vpop.f32.mrb[0].mxu0
        %v1288 = vadd.f32 %v777, %v1287
        %v1289 = vpop.f32.mrb[0].mxu0
        %v1290 = vpop.f32.mrb[0].mxu0
        %v1291 = vadd.f32 %v777, %v1290
        %v1292 = vpop.f32.mrb[0].mxu0
        %1293 = vmatprep.mubr.bf16.mxu0 0
        %1294 = vmatmul.mubr.bf16.gmra.mrb[0].mxu0 %v1215
        %v1295 = vpop.f32.mrb[0].mxu0
        %v1296 = vadd.f32 %v777, %v1295
        %v1297 = vpop.f32.mrb[0].mxu0
        %v1298 = vpop.f32.mrb[0].mxu0
        %v1299 = vadd.f32 %v777, %v1298
        %v1300 = vpop.f32.mrb[0].mxu0
        %1301 = vmatprep.mubr.bf16.mxu0 0
        %1302 = vmatmul.mubr.bf16.gmra.mrb[0].mxu0 %v1216
        %v1303 = vpop.f32.mrb[0].mxu0
        %v1304 = vadd.f32 %v777, %v1303
        %v1305 = vpop.f32.mrb[0].mxu0
        %v1306 = vpop.f32.mrb[0].mxu0
        %v1307 = vadd.f32 %v777, %v1306
        %v1308 = vpop.f32.mrb[0].mxu0
        %1309 = vmatprep.mubr.bf16.mxu0 0
        %1310 = vmatmul.mubr.bf16.gmra.mrb[0].mxu0 %v1217
        %v1311 = vpop.f32.mrb[0].mxu0
        %v1312 = vadd.f32 %v777, %v1311
        %v1313 = vpop.f32.mrb[0].mxu0
        %v1314 = vpop.f32.mrb[0].mxu0
        %v1315 = vadd.f32 %v777, %v1314
        %v1316 = vpop.f32.mrb[0].mxu0
        %1317 = vmatprep.mubr.bf16.mxu0 0
        %1318 = vmatmul.mubr.bf16.gmra.mrb[0].mxu0 %v1218
        %v1319 = vpop.f32.mrb[0].mxu0
        %v1320 = vadd.f32 %v777, %v1319
        %v1321 = vpop.f32.mrb[0].mxu0
        %v1322 = vpop.f32.mrb[0].mxu0
        %v1323 = vadd.f32 %v777, %v1322
        %v1324 = vpop.f32.mrb[0].mxu0
        %1325 = vmatprep.mubr.bf16.mxu0 0
        %1326 = vmatmul.mubr.bf16.gmra.mrb[0].mxu0 %v1219
        %v1327 = vpop.f32.mrb[0].mxu0
        %v1328 = vadd.f32 %v777, %v1327
        %v1329 = vpop.f32.mrb[0].mxu0
        %v1330 = vpop.f32.mrb[0].mxu0
        %v1331 = vadd.f32 %v777, %v1330
        %v1332 = vpop.f32.mrb[0].mxu0
        %1333 = vmatprep.mubr.bf16.mxu0 0
        %1334 = vmatmul.mubr.bf16.gmra.mrb[0].mxu0 %v1220
        %v1335 = vpop.f32.mrb[0].mxu0
        %v1336 = vadd.f32 %v777, %v1335
        %v1337 = vpop.f32.mrb[0].mxu0
        %v1338 = vpop.f32.mrb[0].mxu0
        %v1339 = vadd.f32 %v777, %v1338
        %v1340 = vpop.f32.mrb[0].mxu0
        %1341 = vmatprep.mubr.bf16.mxu0 0
        %1342 = vmatmul.mubr.bf16.gmra.mrb[0].mxu0 %v1221
        %v1343 = vpop.f32.mrb[0].mxu0
        %v1344 = vadd.f32 %v777, %v1343
        %v1345 = vpop.f32.mrb[0].mxu0
        %v1346 = vpop.f32.mrb[0].mxu0
        %v1347 = vadd.f32 %v777, %v1346
        %v1348 = vpop.f32.mrb[0].mxu0
        %1349 = vmatprep.mubr.bf16.mxu0 0
        %1350 = vmatmul.mubr.bf16.gmra.mrb[0].mxu0 %v1222
        %v1351 = vpop.f32.mrb[0].mxu0
        %v1352 = vadd.f32 %v777, %v1351
        %v1353 = vpop.f32.mrb[0].mxu0
        %v1354 = vpop.f32.mrb[0].mxu0
        %v1355 = vadd.f32 %v777, %v1354
        %v1356 = vpop.f32.mrb[0].mxu0
        %1357 = vmatprep.mubr.bf16.mxu0 0
        %1358 = vmatmul.mubr.bf16.gmra.mrb[0].mxu0 %v1223
        %v1359 = vpop.f32.mrb[0].mxu0
        %v1360 = vadd.f32 %v777, %v1359
        %v1361 = vpop.f32.mrb[0].mxu0
        %v1362 = vpop.f32.mrb[0].mxu0
        %v1363 = vadd.f32 %v777, %v1362
        %v1364 = vpop.f32.mrb[0].mxu0
        %1365 = vmatprep.mubr.bf16.mxu0 0
        %1366 = vmatmul.mubr.bf16.gmra.mrb[0].mxu0 %v1224
        %v1367 = vpop.f32.mrb[0].mxu0
        %v1368 = vadd.f32 %v777, %v1367
        %v1369 = vpop.f32.mrb[0].mxu0
        %v1370 = vpop.f32.mrb[0].mxu0
        %v1371 = vadd.f32 %v777, %v1370
        %v1372 = vpop.f32.mrb[0].mxu0
        %1373 = vmatprep.mubr.bf16.mxu0 0
        %1374 = vmatmul.mubr.bf16.gmra.mrb[0].mxu0 %v1225
        %v1375 = vpop.f32.mrb[0].mxu0
        %v1376 = vadd.f32 %v777, %v1375
        %v1377 = vpop.f32.mrb[0].mxu0
        %v1378 = vpop.f32.mrb[0].mxu0
        %v1379 = vadd.f32 %v777, %v1378
        %v1380 = vpop.f32.mrb[0].mxu0
        %1381 = vmatprep.mubr.bf16.mxu0 0
        %1382 = vmatmul.mubr.bf16.gmra.mrb[0].mxu0 %v1226
        %v1383 = vpop.f32.mrb[0].mxu0
        %v1384 = vadd.f32 %v777, %v1383
        %v1385 = vpop.f32.mrb[0].mxu0
        %v1386 = vpop.f32.mrb[0].mxu0
        %v1387 = vadd.f32 %v777, %v1386
        %v1388 = vpop.f32.mrb[0].mxu0
        %1389 = vmatprep.mubr.bf16.mxu0 0
        %1390 = vmatmul.mubr.bf16.gmra.mrb[0].mxu0 %v1227
        %v1391 = vpop.f32.mrb[0].mxu0
        %v1392 = vadd.f32 %v777, %v1391
        %v1393 = vpop.f32.mrb[0].mxu0
        %v1394 = vpop.f32.mrb[0].mxu0
        %v1395 = vadd.f32 %v777, %v1394
        %v1396 = vpop.f32.mrb[0].mxu0
        %1397 = vmatprep.mubr.bf16.mxu0 0
        %1398 = vmatmul.mubr.bf16.gmra.mrb[0].mxu0 %v1228
        %v1399 = vpop.f32.mrb[0].mxu0
        %v1400 = vadd.f32 %v777, %v1399
        %v1401 = vpop.f32.mrb[0].mxu0
        %v1402 = vpop.f32.mrb[0].mxu0
        %v1403 = vadd.f32 %v777, %v1402
        %v1404 = vpop.f32.mrb[0].mxu0
        %1405 = vdwg.mxu0
        %v1406 = vmax.f32 %v1280, 0.0
        %v1407 = vmax.f32 %v1283, 0.0
        %v1408 = vmax.f32 %v1288, 0.0
        %v1409 = vmax.f32 %v1291, 0.0
        %v1410 = vmax.f32 %v1296, 0.0
        %v1411 = vmax.f32 %v1299, 0.0
        %v1412 = vmax.f32 %v1304, 0.0
        %v1413 = vmax.f32 %v1307, 0.0
        %v1414 = vmax.f32 %v1312, 0.0
        %v1415 = vmax.f32 %v1315, 0.0
        %v1416 = vmax.f32 %v1320, 0.0
        %v1417 = vmax.f32 %v1323, 0.0
        %v1418 = vmax.f32 %v1328, 0.0
        %v1419 = vmax.f32 %v1331, 0.0
        %v1420 = vmax.f32 %v1336, 0.0
        %v1421 = vmax.f32 %v1339, 0.0
        %v1422 = vmax.f32 %v1344, 0.0
        %v1423 = vmax.f32 %v1347, 0.0
        %v1424 = vmax.f32 %v1352, 0.0
        %v1425 = vmax.f32 %v1355, 0.0
        %v1426 = vmax.f32 %v1360, 0.0
        %v1427 = vmax.f32 %v1363, 0.0
        %v1428 = vmax.f32 %v1368, 0.0
        %v1429 = vmax.f32 %v1371, 0.0
        %v1430 = vmax.f32 %v1376, 0.0
        %v1431 = vmax.f32 %v1379, 0.0
        %v1432 = vmax.f32 %v1384, 0.0
        %v1433 = vmax.f32 %v1387, 0.0
        %v1434 = vmax.f32 %v1392, 0.0
        %v1435 = vmax.f32 %v1395, 0.0
        %v1436 = vmax.f32 %v1400, 0.0
        %v1437 = vmax.f32 %v1403, 0.0
        %v1438 = vmax.f32 %v1084, %v1406
        %v1439 = vmax.f32 %v1085, %v1407
        %v1440 = vmax.f32 %v1086, %v1408
        %v1441 = vmax.f32 %v1087, %v1409
        %v1442 = vmax.f32 %v1088, %v1410
        %v1443 = vmax.f32 %v1089, %v1411
        %v1444 = vmax.f32 %v1090, %v1412
        %v1445 = vmax.f32 %v1091, %v1413
        %v1446 = vmax.f32 %v1092, %v1414
        %v1447 = vmax.f32 %v1093, %v1415
        %v1448 = vmax.f32 %v1094, %v1416
        %v1449 = vmax.f32 %v1095, %v1417
        %v1450 = vmax.f32 %v1096, %v1418
        %v1451 = vmax.f32 %v1097, %v1419
        %v1452 = vmax.f32 %v1098, %v1420
        %v1453 = vmax.f32 %v1099, %v1421
        %v1454 = vmax.f32 %v1100, %v1422
        %v1455 = vmax.f32 %v1101, %v1423
        %v1456 = vmax.f32 %v1102, %v1424
        %v1457 = vmax.f32 %v1103, %v1425
        %v1458 = vmax.f32 %v1104, %v1426
        %v1459 = vmax.f32 %v1105, %v1427
        %v1460 = vmax.f32 %v1106, %v1428
        %v1461 = vmax.f32 %v1107, %v1429
        %v1462 = vmax.f32 %v1108, %v1430
        %v1463 = vmax.f32 %v1109, %v1431
        %v1464 = vmax.f32 %v1110, %v1432
        %v1465 = vmax.f32 %v1111, %v1433
        %v1466 = vmax.f32 %v1112, %v1434
        %v1467 = vmax.f32 %v1113, %v1435
        %v1468 = vmax.f32 %v1114, %v1436
        %v1469 = vmax.f32 %v1115, %v1437
        %s1470 = scalar_lea.vmem %s695, 256 [#allocation2]
        %v1471 = vld [vmem:[%s1470] sm:$0xf]
        %v1472 = vld [vmem:[%s1470 + $0x4] sm:$0xf]
        %v1473 = vld [vmem:[%s1470 + $0x8] sm:$0xf]
        %v1474 = vld [vmem:[%s1470 + $0xc] sm:$0xf]
        %v1475 = vld [vmem:[%s1470 + $0x10] sm:$0xf]
        %v1476 = vld [vmem:[%s1470 + $0x14] sm:$0xf]
        %v1477 = vld [vmem:[%s1470 + $0x18] sm:$0xf]
        %v1478 = vld [vmem:[%s1470 + $0x1c] sm:$0xf]
        %v1479 = vld [vmem:[%s1470 + $0x20] sm:$0xf]
        %v1480 = vld [vmem:[%s1470 + $0x24] sm:$0xf]
        %v1481 = vld [vmem:[%s1470 + $0x28] sm:$0xf]
        %v1482 = vld [vmem:[%s1470 + $0x2c] sm:$0xf]
        %v1483 = vld [vmem:[%s1470 + $0x30] sm:$0xf]
        %v1484 = vld [vmem:[%s1470 + $0x34] sm:$0xf]
        %v1485 = vld [vmem:[%s1470 + $0x38] sm:$0xf]
        %v1486 = vld [vmem:[%s1470 + $0x3c] sm:$0xf]
        %v1487 = vld [vmem:[%s1470 + $0x40] sm:$0xf]
        %v1488 = vld [vmem:[%s1470 + $0x44] sm:$0xf]
        %v1489 = vld [vmem:[%s1470 + $0x48] sm:$0xf]
        %v1490 = vld [vmem:[%s1470 + $0x4c] sm:$0xf]
        %v1491 = vld [vmem:[%s1470 + $0x50] sm:$0xf]
        %v1492 = vld [vmem:[%s1470 + $0x54] sm:$0xf]
        %v1493 = vld [vmem:[%s1470 + $0x58] sm:$0xf]
        %v1494 = vld [vmem:[%s1470 + $0x5c] sm:$0xf]
        %v1495 = vld [vmem:[%s1470 + $0x60] sm:$0xf]
        %v1496 = vld [vmem:[%s1470 + $0x64] sm:$0xf]
        %v1497 = vld [vmem:[%s1470 + $0x68] sm:$0xf]
        %v1498 = vld [vmem:[%s1470 + $0x6c] sm:$0xf]
        %v1499 = vld [vmem:[%s1470 + $0x70] sm:$0xf]
        %v1500 = vld [vmem:[%s1470 + $0x74] sm:$0xf]
        %v1501 = vld [vmem:[%s1470 + $0x78] sm:$0xf]
        %v1502 = vld [vmem:[%s1470 + $0x7c] sm:$0xf]
        %v1535 = vunpack.c.l.b16 %v1471
        %v1536 = vunpack.c.l.b16 %v1472
        %v1537 = vunpack.c.l.b16 %v1473
        %v1538 = vunpack.c.l.b16 %v1474
        %v1539 = vunpack.c.l.b16 %v1475
        %v1540 = vunpack.c.l.b16 %v1476
        %v1541 = vunpack.c.l.b16 %v1477
        %v1542 = vunpack.c.l.b16 %v1478
        %v1543 = vunpack.c.l.b16 %v1479
        %v1544 = vunpack.c.l.b16 %v1480
        %v1545 = vunpack.c.l.b16 %v1481
        %v1546 = vunpack.c.l.b16 %v1482
        %v1547 = vunpack.c.l.b16 %v1483
        %v1548 = vunpack.c.l.b16 %v1484
        %v1549 = vunpack.c.l.b16 %v1485
        %v1550 = vunpack.c.l.b16 %v1486
        %v1551 = vunpack.c.l.b16 %v1487
        %v1552 = vunpack.c.l.b16 %v1488
        %v1553 = vunpack.c.l.b16 %v1489
        %v1554 = vunpack.c.l.b16 %v1490
        %v1555 = vunpack.c.l.b16 %v1491
        %v1556 = vunpack.c.l.b16 %v1492
        %v1557 = vunpack.c.l.b16 %v1493
        %v1558 = vunpack.c.l.b16 %v1494
        %v1559 = vunpack.c.l.b16 %v1495
        %v1560 = vunpack.c.l.b16 %v1496
        %v1561 = vunpack.c.l.b16 %v1497
        %v1562 = vunpack.c.l.b16 %v1498
        %v1563 = vunpack.c.l.b16 %v1499
        %v1564 = vunpack.c.l.b16 %v1500
        %v1565 = vunpack.c.l.b16 %v1501
        %v1566 = vunpack.c.l.b16 %v1502
        %v1567 = vpack.c.b16 %v1536, %v1535
        %v1568 = vpack.c.b16 %v1538, %v1537
        %v1569 = vpack.c.b16 %v1540, %v1539
        %v1570 = vpack.c.b16 %v1542, %v1541
        %v1571 = vpack.c.b16 %v1544, %v1543
        %v1572 = vpack.c.b16 %v1546, %v1545
        %v1573 = vpack.c.b16 %v1548, %v1547
        %v1574 = vpack.c.b16 %v1550, %v1549
        %v1575 = vpack.c.b16 %v1552, %v1551
        %v1576 = vpack.c.b16 %v1554, %v1553
        %v1577 = vpack.c.b16 %v1556, %v1555
        %v1578 = vpack.c.b16 %v1558, %v1557
        %v1579 = vpack.c.b16 %v1560, %v1559
        %v1580 = vpack.c.b16 %v1562, %v1561
        %v1581 = vpack.c.b16 %v1564, %v1563
        %v1582 = vpack.c.b16 %v1566, %v1565
        %1599 = vmatprep.subr.bf16.mxu0 0
        %1600 = vmatpush1.bf16.msra.mxu0 %v907
        %1601 = vmatprep.subr.bf16.mxu0 0
        %1602 = vmatpush1.bf16.msra.mxu0 %v908
        %1603 = vmatprep.subr.bf16.mxu0 0
        %1604 = vmatpush1.bf16.msra.mxu0 %v909
        %1605 = vmatprep.subr.bf16.mxu0 0
        %1606 = vmatpush1.bf16.msra.mxu0 %v910
        %1607 = vmatprep.subr.bf16.mxu0 0
        %1608 = vmatpush1.bf16.msra.mxu0 %v911
        %1609 = vmatprep.subr.bf16.mxu0 0
        %1610 = vmatpush1.bf16.msra.mxu0 %v912
        %1611 = vmatprep.subr.bf16.mxu0 0
        %1612 = vmatpush1.bf16.msra.mxu0 %v913
        %1613 = vmatprep.subr.bf16.mxu0 0
        %1614 = vmatpush1.bf16.msra.mxu0 %v914
        %1615 = vmatprep.subr.bf16.mxu0 0
        %1616 = vmatpush1.bf16.msra.mxu0 0
        %1617 = vmatprep.subr.bf16.mxu0 0
        %1618 = vmatpush1.bf16.msra.mxu0 0
        %1619 = vmatprep.subr.bf16.mxu0 0
        %1620 = vmatpush1.bf16.msra.mxu0 0
        %1621 = vmatprep.subr.bf16.mxu0 0
        %1622 = vmatpush1.bf16.msra.mxu0 0
        %1623 = vmatprep.subr.bf16.mxu0 0
        %1624 = vmatpush1.bf16.msra.mxu0 0
        %1625 = vmatprep.subr.bf16.mxu0 0
        %1626 = vmatpush1.bf16.msra.mxu0 0
        %1627 = vmatprep.subr.bf16.mxu0 0
        %1628 = vmatpush1.bf16.msra.mxu0 0
        %1629 = vmatprep.subr.bf16.mxu0 0
        %1630 = vmatpush1.bf16.msra.mxu0 0
        %1631 = vmatprep.mubr.bf16.mxu0 0
        %1632 = vmatmul.mubr.bf16.gmra.mrb[0].mxu0 %v1567
        %v1633 = vpop.f32.mrb[0].mxu0
        %v1634 = vadd.f32 %v777, %v1633
        %v1635 = vpop.f32.mrb[0].mxu0
        %v1636 = vpop.f32.mrb[0].mxu0
        %v1637 = vadd.f32 %v777, %v1636
        %v1638 = vpop.f32.mrb[0].mxu0
        %1639 = vmatprep.mubr.bf16.mxu0 0
        %1640 = vmatmul.mubr.bf16.gmra.mrb[0].mxu0 %v1568
        %v1641 = vpop.f32.mrb[0].mxu0
        %v1642 = vadd.f32 %v777, %v1641
        %v1643 = vpop.f32.mrb[0].mxu0
        %v1644 = vpop.f32.mrb[0].mxu0
        %v1645 = vadd.f32 %v777, %v1644
        %v1646 = vpop.f32.mrb[0].mxu0
        %1647 = vmatprep.mubr.bf16.mxu0 0
        %1648 = vmatmul.mubr.bf16.gmra.mrb[0].mxu0 %v1569
        %v1649 = vpop.f32.mrb[0].mxu0
        %v1650 = vadd.f32 %v777, %v1649
        %v1651 = vpop.f32.mrb[0].mxu0
        %v1652 = vpop.f32.mrb[0].mxu0
        %v1653 = vadd.f32 %v777, %v1652
        %v1654 = vpop.f32.mrb[0].mxu0
        %1655 = vmatprep.mubr.bf16.mxu0 0
        %1656 = vmatmul.mubr.bf16.gmra.mrb[0].mxu0 %v1570
        %v1657 = vpop.f32.mrb[0].mxu0
        %v1658 = vadd.f32 %v777, %v1657
        %v1659 = vpop.f32.mrb[0].mxu0
        %v1660 = vpop.f32.mrb[0].mxu0
        %v1661 = vadd.f32 %v777, %v1660
        %v1662 = vpop.f32.mrb[0].mxu0
        %1663 = vmatprep.mubr.bf16.mxu0 0
        %1664 = vmatmul.mubr.bf16.gmra.mrb[0].mxu0 %v1571
        %v1665 = vpop.f32.mrb[0].mxu0
        %v1666 = vadd.f32 %v777, %v1665
        %v1667 = vpop.f32.mrb[0].mxu0
        %v1668 = vpop.f32.mrb[0].mxu0
        %v1669 = vadd.f32 %v777, %v1668
        %v1670 = vpop.f32.mrb[0].mxu0
        %1671 = vmatprep.mubr.bf16.mxu0 0
        %1672 = vmatmul.mubr.bf16.gmra.mrb[0].mxu0 %v1572
        %v1673 = vpop.f32.mrb[0].mxu0
        %v1674 = vadd.f32 %v777, %v1673
        %v1675 = vpop.f32.mrb[0].mxu0
        %v1676 = vpop.f32.mrb[0].mxu0
        %v1677 = vadd.f32 %v777, %v1676
        %v1678 = vpop.f32.mrb[0].mxu0
        %1679 = vmatprep.mubr.bf16.mxu0 0
        %1680 = vmatmul.mubr.bf16.gmra.mrb[0].mxu0 %v1573
        %v1681 = vpop.f32.mrb[0].mxu0
        %v1682 = vadd.f32 %v777, %v1681
        %v1683 = vpop.f32.mrb[0].mxu0
        %v1684 = vpop.f32.mrb[0].mxu0
        %v1685 = vadd.f32 %v777, %v1684
        %v1686 = vpop.f32.mrb[0].mxu0
        %1687 = vmatprep.mubr.bf16.mxu0 0
        %1688 = vmatmul.mubr.bf16.gmra.mrb[0].mxu0 %v1574
        %v1689 = vpop.f32.mrb[0].mxu0
        %v1690 = vadd.f32 %v777, %v1689
        %v1691 = vpop.f32.mrb[0].mxu0
        %v1692 = vpop.f32.mrb[0].mxu0
        %v1693 = vadd.f32 %v777, %v1692
        %v1694 = vpop.f32.mrb[0].mxu0
        %1695 = vmatprep.mubr.bf16.mxu0 0
        %1696 = vmatmul.mubr.bf16.gmra.mrb[0].mxu0 %v1575
        %v1697 = vpop.f32.mrb[0].mxu0
        %v1698 = vadd.f32 %v777, %v1697
        %v1699 = vpop.f32.mrb[0].mxu0
        %v1700 = vpop.f32.mrb[0].mxu0
        %v1701 = vadd.f32 %v777, %v1700
        %v1702 = vpop.f32.mrb[0].mxu0
        %1703 = vmatprep.mubr.bf16.mxu0 0
        %1704 = vmatmul.mubr.bf16.gmra.mrb[0].mxu0 %v1576
        %v1705 = vpop.f32.mrb[0].mxu0
        %v1706 = vadd.f32 %v777, %v1705
        %v1707 = vpop.f32.mrb[0].mxu0
        %v1708 = vpop.f32.mrb[0].mxu0
        %v1709 = vadd.f32 %v777, %v1708
        %v1710 = vpop.f32.mrb[0].mxu0
        %1711 = vmatprep.mubr.bf16.mxu0 0
        %1712 = vmatmul.mubr.bf16.gmra.mrb[0].mxu0 %v1577
        %v1713 = vpop.f32.mrb[0].mxu0
        %v1714 = vadd.f32 %v777, %v1713
        %v1715 = vpop.f32.mrb[0].mxu0
        %v1716 = vpop.f32.mrb[0].mxu0
        %v1717 = vadd.f32 %v777, %v1716
        %v1718 = vpop.f32.mrb[0].mxu0
        %1719 = vmatprep.mubr.bf16.mxu0 0
        %1720 = vmatmul.mubr.bf16.gmra.mrb[0].mxu0 %v1578
        %v1721 = vpop.f32.mrb[0].mxu0
        %v1722 = vadd.f32 %v777, %v1721
        %v1723 = vpop.f32.mrb[0].mxu0
        %v1724 = vpop.f32.mrb[0].mxu0
        %v1725 = vadd.f32 %v777, %v1724
        %v1726 = vpop.f32.mrb[0].mxu0
        %1727 = vmatprep.mubr.bf16.mxu0 0
        %1728 = vmatmul.mubr.bf16.gmra.mrb[0].mxu0 %v1579
        %v1729 = vpop.f32.mrb[0].mxu0
        %v1730 = vadd.f32 %v777, %v1729
        %v1731 = vpop.f32.mrb[0].mxu0
        %v1732 = vpop.f32.mrb[0].mxu0
        %v1733 = vadd.f32 %v777, %v1732
        %v1734 = vpop.f32.mrb[0].mxu0
        %1735 = vmatprep.mubr.bf16.mxu0 0
        %1736 = vmatmul.mubr.bf16.gmra.mrb[0].mxu0 %v1580
        %v1737 = vpop.f32.mrb[0].mxu0
        %v1738 = vadd.f32 %v777, %v1737
        %v1739 = vpop.f32.mrb[0].mxu0
        %v1740 = vpop.f32.mrb[0].mxu0
        %v1741 = vadd.f32 %v777, %v1740
        %v1742 = vpop.f32.mrb[0].mxu0
        %1743 = vmatprep.mubr.bf16.mxu0 0
        %1744 = vmatmul.mubr.bf16.gmra.mrb[0].mxu0 %v1581
        %v1745 = vpop.f32.mrb[0].mxu0
        %v1746 = vadd.f32 %v777, %v1745
        %v1747 = vpop.f32.mrb[0].mxu0
        %v1748 = vpop.f32.mrb[0].mxu0
        %v1749 = vadd.f32 %v777, %v1748
        %v1750 = vpop.f32.mrb[0].mxu0
        %1751 = vmatprep.mubr.bf16.mxu0 0
        %1752 = vmatmul.mubr.bf16.gmra.mrb[0].mxu0 %v1582
        %v1753 = vpop.f32.mrb[0].mxu0
        %v1754 = vadd.f32 %v777, %v1753
        %v1755 = vpop.f32.mrb[0].mxu0
        %v1756 = vpop.f32.mrb[0].mxu0
        %v1757 = vadd.f32 %v777, %v1756
        %v1758 = vpop.f32.mrb[0].mxu0
        %1759 = vdwg.mxu0
        %v1760 = vmax.f32 %v1634, 0.0
        %v1761 = vmax.f32 %v1637, 0.0
        %v1762 = vmax.f32 %v1642, 0.0
        %v1763 = vmax.f32 %v1645, 0.0
        %v1764 = vmax.f32 %v1650, 0.0
        %v1765 = vmax.f32 %v1653, 0.0
        %v1766 = vmax.f32 %v1658, 0.0
        %v1767 = vmax.f32 %v1661, 0.0
        %v1768 = vmax.f32 %v1666, 0.0
        %v1769 = vmax.f32 %v1669, 0.0
        %v1770 = vmax.f32 %v1674, 0.0
        %v1771 = vmax.f32 %v1677, 0.0
        %v1772 = vmax.f32 %v1682, 0.0
        %v1773 = vmax.f32 %v1685, 0.0
        %v1774 = vmax.f32 %v1690, 0.0
        %v1775 = vmax.f32 %v1693, 0.0
        %v1776 = vmax.f32 %v1698, 0.0
        %v1777 = vmax.f32 %v1701, 0.0
        %v1778 = vmax.f32 %v1706, 0.0
        %v1779 = vmax.f32 %v1709, 0.0
        %v1780 = vmax.f32 %v1714, 0.0
        %v1781 = vmax.f32 %v1717, 0.0
        %v1782 = vmax.f32 %v1722, 0.0
        %v1783 = vmax.f32 %v1725, 0.0
        %v1784 = vmax.f32 %v1730, 0.0
        %v1785 = vmax.f32 %v1733, 0.0
        %v1786 = vmax.f32 %v1738, 0.0
        %v1787 = vmax.f32 %v1741, 0.0
        %v1788 = vmax.f32 %v1746, 0.0
        %v1789 = vmax.f32 %v1749, 0.0
        %v1790 = vmax.f32 %v1754, 0.0
        %v1791 = vmax.f32 %v1757, 0.0
        %v1792 = vmax.f32 %v1438, %v1760
        %v1793 = vmax.f32 %v1439, %v1761
        %v1794 = vmax.f32 %v1440, %v1762
        %v1795 = vmax.f32 %v1441, %v1763
        %v1796 = vmax.f32 %v1442, %v1764
        %v1797 = vmax.f32 %v1443, %v1765
        %v1798 = vmax.f32 %v1444, %v1766
        %v1799 = vmax.f32 %v1445, %v1767
        %v1800 = vmax.f32 %v1446, %v1768
        %v1801 = vmax.f32 %v1447, %v1769
        %v1802 = vmax.f32 %v1448, %v1770
        %v1803 = vmax.f32 %v1449, %v1771
        %v1804 = vmax.f32 %v1450, %v1772
        %v1805 = vmax.f32 %v1451, %v1773
        %v1806 = vmax.f32 %v1452, %v1774
        %v1807 = vmax.f32 %v1453, %v1775
        %v1808 = vmax.f32 %v1454, %v1776
        %v1809 = vmax.f32 %v1455, %v1777
        %v1810 = vmax.f32 %v1456, %v1778
        %v1811 = vmax.f32 %v1457, %v1779
        %v1812 = vmax.f32 %v1458, %v1780
        %v1813 = vmax.f32 %v1459, %v1781
        %v1814 = vmax.f32 %v1460, %v1782
        %v1815 = vmax.f32 %v1461, %v1783
        %v1816 = vmax.f32 %v1462, %v1784
        %v1817 = vmax.f32 %v1463, %v1785
        %v1818 = vmax.f32 %v1464, %v1786
        %v1819 = vmax.f32 %v1465, %v1787
        %v1820 = vmax.f32 %v1466, %v1788
        %v1821 = vmax.f32 %v1467, %v1789
        %v1822 = vmax.f32 %v1468, %v1790
        %v1823 = vmax.f32 %v1469, %v1791
        %s1824 = scalar_lea.vmem %s695, 384 [#allocation2]
        %v1825 = vld [vmem:[%s1824] sm:$0xf]
        %v1826 = vld [vmem:[%s1824 + $0x4] sm:$0xf]
        %v1827 = vld [vmem:[%s1824 + $0x8] sm:$0xf]
        %v1828 = vld [vmem:[%s1824 + $0xc] sm:$0xf]
        %v1829 = vld [vmem:[%s1824 + $0x10] sm:$0xf]
        %v1830 = vld [vmem:[%s1824 + $0x14] sm:$0xf]
        %v1831 = vld [vmem:[%s1824 + $0x18] sm:$0xf]
        %v1832 = vld [vmem:[%s1824 + $0x1c] sm:$0xf]
        %v1833 = vld [vmem:[%s1824 + $0x20] sm:$0xf]
        %v1834 = vld [vmem:[%s1824 + $0x24] sm:$0xf]
        %v1835 = vld [vmem:[%s1824 + $0x28] sm:$0xf]
        %v1836 = vld [vmem:[%s1824 + $0x2c] sm:$0xf]
        %v1837 = vld [vmem:[%s1824 + $0x30] sm:$0xf]
        %v1838 = vld [vmem:[%s1824 + $0x34] sm:$0xf]
        %v1839 = vld [vmem:[%s1824 + $0x38] sm:$0xf]
        %v1840 = vld [vmem:[%s1824 + $0x3c] sm:$0xf]
        %v1841 = vld [vmem:[%s1824 + $0x40] sm:$0xf]
        %v1842 = vld [vmem:[%s1824 + $0x44] sm:$0xf]
        %v1843 = vld [vmem:[%s1824 + $0x48] sm:$0xf]
        %v1844 = vld [vmem:[%s1824 + $0x4c] sm:$0xf]
        %v1845 = vld [vmem:[%s1824 + $0x50] sm:$0xf]
        %v1846 = vld [vmem:[%s1824 + $0x54] sm:$0xf]
        %v1847 = vld [vmem:[%s1824 + $0x58] sm:$0xf]
        %v1848 = vld [vmem:[%s1824 + $0x5c] sm:$0xf]
        %v1849 = vld [vmem:[%s1824 + $0x60] sm:$0xf]
        %v1850 = vld [vmem:[%s1824 + $0x64] sm:$0xf]
        %v1851 = vld [vmem:[%s1824 + $0x68] sm:$0xf]
        %v1852 = vld [vmem:[%s1824 + $0x6c] sm:$0xf]
        %v1853 = vld [vmem:[%s1824 + $0x70] sm:$0xf]
        %v1854 = vld [vmem:[%s1824 + $0x74] sm:$0xf]
        %v1855 = vld [vmem:[%s1824 + $0x78] sm:$0xf]
        %v1856 = vld [vmem:[%s1824 + $0x7c] sm:$0xf]
        %v1889 = vunpack.c.l.b16 %v1825
        %v1890 = vunpack.c.l.b16 %v1826
        %v1891 = vunpack.c.l.b16 %v1827
        %v1892 = vunpack.c.l.b16 %v1828
        %v1893 = vunpack.c.l.b16 %v1829
        %v1894 = vunpack.c.l.b16 %v1830
        %v1895 = vunpack.c.l.b16 %v1831
        %v1896 = vunpack.c.l.b16 %v1832
        %v1897 = vunpack.c.l.b16 %v1833
        %v1898 = vunpack.c.l.b16 %v1834
        %v1899 = vunpack.c.l.b16 %v1835
        %v1900 = vunpack.c.l.b16 %v1836
        %v1901 = vunpack.c.l.b16 %v1837
        %v1902 = vunpack.c.l.b16 %v1838
        %v1903 = vunpack.c.l.b16 %v1839
        %v1904 = vunpack.c.l.b16 %v1840
        %v1905 = vunpack.c.l.b16 %v1841
        %v1906 = vunpack.c.l.b16 %v1842
        %v1907 = vunpack.c.l.b16 %v1843
        %v1908 = vunpack.c.l.b16 %v1844
        %v1909 = vunpack.c.l.b16 %v1845
        %v1910 = vunpack.c.l.b16 %v1846
        %v1911 = vunpack.c.l.b16 %v1847
        %v1912 = vunpack.c.l.b16 %v1848
        %v1913 = vunpack.c.l.b16 %v1849
        %v1914 = vunpack.c.l.b16 %v1850
        %v1915 = vunpack.c.l.b16 %v1851
        %v1916 = vunpack.c.l.b16 %v1852
        %v1917 = vunpack.c.l.b16 %v1853
        %v1918 = vunpack.c.l.b16 %v1854
        %v1919 = vunpack.c.l.b16 %v1855
        %v1920 = vunpack.c.l.b16 %v1856
        %v1921 = vpack.c.b16 %v1890, %v1889
        %v1922 = vpack.c.b16 %v1892, %v1891
        %v1923 = vpack.c.b16 %v1894, %v1893
        %v1924 = vpack.c.b16 %v1896, %v1895
        %v1925 = vpack.c.b16 %v1898, %v1897
        %v1926 = vpack.c.b16 %v1900, %v1899
        %v1927 = vpack.c.b16 %v1902, %v1901
        %v1928 = vpack.c.b16 %v1904, %v1903
        %v1929 = vpack.c.b16 %v1906, %v1905
        %v1930 = vpack.c.b16 %v1908, %v1907
        %v1931 = vpack.c.b16 %v1910, %v1909
        %v1932 = vpack.c.b16 %v1912, %v1911
        %v1933 = vpack.c.b16 %v1914, %v1913
        %v1934 = vpack.c.b16 %v1916, %v1915
        %v1935 = vpack.c.b16 %v1918, %v1917
        %v1936 = vpack.c.b16 %v1920, %v1919
        %1953 = vmatprep.subr.bf16.mxu0 0
        %1954 = vmatpush1.bf16.msra.mxu0 %v907
        %1955 = vmatprep.subr.bf16.mxu0 0
        %1956 = vmatpush1.bf16.msra.mxu0 %v908
        %1957 = vmatprep.subr.bf16.mxu0 0
        %1958 = vmatpush1.bf16.msra.mxu0 %v909
        %1959 = vmatprep.subr.bf16.mxu0 0
        %1960 = vmatpush1.bf16.msra.mxu0 %v910
        %1961 = vmatprep.subr.bf16.mxu0 0
        %1962 = vmatpush1.bf16.msra.mxu0 %v911
        %1963 = vmatprep.subr.bf16.mxu0 0
        %1964 = vmatpush1.bf16.msra.mxu0 %v912
        %1965 = vmatprep.subr.bf16.mxu0 0
        %1966 = vmatpush1.bf16.msra.mxu0 %v913
        %1967 = vmatprep.subr.bf16.mxu0 0
        %1968 = vmatpush1.bf16.msra.mxu0 %v914
        %1969 = vmatprep.subr.bf16.mxu0 0
        %1970 = vmatpush1.bf16.msra.mxu0 0
        %1971 = vmatprep.subr.bf16.mxu0 0
        %1972 = vmatpush1.bf16.msra.mxu0 0
        %1973 = vmatprep.subr.bf16.mxu0 0
        %1974 = vmatpush1.bf16.msra.mxu0 0
        %1975 = vmatprep.subr.bf16.mxu0 0
        %1976 = vmatpush1.bf16.msra.mxu0 0
        %1977 = vmatprep.subr.bf16.mxu0 0
        %1978 = vmatpush1.bf16.msra.mxu0 0
        %1979 = vmatprep.subr.bf16.mxu0 0
        %1980 = vmatpush1.bf16.msra.mxu0 0
        %1981 = vmatprep.subr.bf16.mxu0 0
        %1982 = vmatpush1.bf16.msra.mxu0 0
        %1983 = vmatprep.subr.bf16.mxu0 0
        %1984 = vmatpush1.bf16.msra.mxu0 0
        %1985 = vmatprep.mubr.bf16.mxu0 0
        %1986 = vmatmul.mubr.bf16.gmra.mrb[0].mxu0 %v1921
        %v1987 = vpop.f32.mrb[0].mxu0
        %v1988 = vadd.f32 %v777, %v1987
        %v1989 = vpop.f32.mrb[0].mxu0
        %v1990 = vpop.f32.mrb[0].mxu0
        %v1991 = vadd.f32 %v777, %v1990
        %v1992 = vpop.f32.mrb[0].mxu0
        %1993 = vmatprep.mubr.bf16.mxu0 0
        %1994 = vmatmul.mubr.bf16.gmra.mrb[0].mxu0 %v1922
        %v1995 = vpop.f32.mrb[0].mxu0
        %v1996 = vadd.f32 %v777, %v1995
        %v1997 = vpop.f32.mrb[0].mxu0
        %v1998 = vpop.f32.mrb[0].mxu0
        %v1999 = vadd.f32 %v777, %v1998
        %v2000 = vpop.f32.mrb[0].mxu0
        %2001 = vmatprep.mubr.bf16.mxu0 0
        %2002 = vmatmul.mubr.bf16.gmra.mrb[0].mxu0 %v1923
        %v2003 = vpop.f32.mrb[0].mxu0
        %v2004 = vadd.f32 %v777, %v2003
        %v2005 = vpop.f32.mrb[0].mxu0
        %v2006 = vpop.f32.mrb[0].mxu0
        %v2007 = vadd.f32 %v777, %v2006
        %v2008 = vpop.f32.mrb[0].mxu0
        %2009 = vmatprep.mubr.bf16.mxu0 0
        %2010 = vmatmul.mubr.bf16.gmra.mrb[0].mxu0 %v1924
        %v2011 = vpop.f32.mrb[0].mxu0
        %v2012 = vadd.f32 %v777, %v2011
        %v2013 = vpop.f32.mrb[0].mxu0
        %v2014 = vpop.f32.mrb[0].mxu0
        %v2015 = vadd.f32 %v777, %v2014
        %v2016 = vpop.f32.mrb[0].mxu0
        %2017 = vmatprep.mubr.bf16.mxu0 0
        %2018 = vmatmul.mubr.bf16.gmra.mrb[0].mxu0 %v1925
        %v2019 = vpop.f32.mrb[0].mxu0
        %v2020 = vadd.f32 %v777, %v2019
        %v2021 = vpop.f32.mrb[0].mxu0
        %v2022 = vpop.f32.mrb[0].mxu0
        %v2023 = vadd.f32 %v777, %v2022
        %v2024 = vpop.f32.mrb[0].mxu0
        %2025 = vmatprep.mubr.bf16.mxu0 0
        %2026 = vmatmul.mubr.bf16.gmra.mrb[0].mxu0 %v1926
        %v2027 = vpop.f32.mrb[0].mxu0
        %v2028 = vadd.f32 %v777, %v2027
        %v2029 = vpop.f32.mrb[0].mxu0
        %v2030 = vpop.f32.mrb[0].mxu0
        %v2031 = vadd.f32 %v777, %v2030
        %v2032 = vpop.f32.mrb[0].mxu0
        %2033 = vmatprep.mubr.bf16.mxu0 0
        %2034 = vmatmul.mubr.bf16.gmra.mrb[0].mxu0 %v1927
        %v2035 = vpop.f32.mrb[0].mxu0
        %v2036 = vadd.f32 %v777, %v2035
        %v2037 = vpop.f32.mrb[0].mxu0
        %v2038 = vpop.f32.mrb[0].mxu0
        %v2039 = vadd.f32 %v777, %v2038
        %v2040 = vpop.f32.mrb[0].mxu0
        %2041 = vmatprep.mubr.bf16.mxu0 0
        %2042 = vmatmul.mubr.bf16.gmra.mrb[0].mxu0 %v1928
        %v2043 = vpop.f32.mrb[0].mxu0
        %v2044 = vadd.f32 %v777, %v2043
        %v2045 = vpop.f32.mrb[0].mxu0
        %v2046 = vpop.f32.mrb[0].mxu0
        %v2047 = vadd.f32 %v777, %v2046
        %v2048 = vpop.f32.mrb[0].mxu0
        %2049 = vmatprep.mubr.bf16.mxu0 0
        %2050 = vmatmul.mubr.bf16.gmra.mrb[0].mxu0 %v1929
        %v2051 = vpop.f32.mrb[0].mxu0
        %v2052 = vadd.f32 %v777, %v2051
        %v2053 = vpop.f32.mrb[0].mxu0
        %v2054 = vpop.f32.mrb[0].mxu0
        %v2055 = vadd.f32 %v777, %v2054
        %v2056 = vpop.f32.mrb[0].mxu0
        %2057 = vmatprep.mubr.bf16.mxu0 0
        %2058 = vmatmul.mubr.bf16.gmra.mrb[0].mxu0 %v1930
        %v2059 = vpop.f32.mrb[0].mxu0
        %v2060 = vadd.f32 %v777, %v2059
        %v2061 = vpop.f32.mrb[0].mxu0
        %v2062 = vpop.f32.mrb[0].mxu0
        %v2063 = vadd.f32 %v777, %v2062
        %v2064 = vpop.f32.mrb[0].mxu0
        %2065 = vmatprep.mubr.bf16.mxu0 0
        %2066 = vmatmul.mubr.bf16.gmra.mrb[0].mxu0 %v1931
        %v2067 = vpop.f32.mrb[0].mxu0
        %v2068 = vadd.f32 %v777, %v2067
        %v2069 = vpop.f32.mrb[0].mxu0
        %v2070 = vpop.f32.mrb[0].mxu0
        %v2071 = vadd.f32 %v777, %v2070
        %v2072 = vpop.f32.mrb[0].mxu0
        %2073 = vmatprep.mubr.bf16.mxu0 0
        %2074 = vmatmul.mubr.bf16.gmra.mrb[0].mxu0 %v1932
        %v2075 = vpop.f32.mrb[0].mxu0
        %v2076 = vadd.f32 %v777, %v2075
        %v2077 = vpop.f32.mrb[0].mxu0
        %v2078 = vpop.f32.mrb[0].mxu0
        %v2079 = vadd.f32 %v777, %v2078
        %v2080 = vpop.f32.mrb[0].mxu0
        %2081 = vmatprep.mubr.bf16.mxu0 0
        %2082 = vmatmul.mubr.bf16.gmra.mrb[0].mxu0 %v1933
        %v2083 = vpop.f32.mrb[0].mxu0
        %v2084 = vadd.f32 %v777, %v2083
        %v2085 = vpop.f32.mrb[0].mxu0
        %v2086 = vpop.f32.mrb[0].mxu0
        %v2087 = vadd.f32 %v777, %v2086
        %v2088 = vpop.f32.mrb[0].mxu0
        %2089 = vmatprep.mubr.bf16.mxu0 0
        %2090 = vmatmul.mubr.bf16.gmra.mrb[0].mxu0 %v1934
        %v2091 = vpop.f32.mrb[0].mxu0
        %v2092 = vadd.f32 %v777, %v2091
        %v2093 = vpop.f32.mrb[0].mxu0
        %v2094 = vpop.f32.mrb[0].mxu0
        %v2095 = vadd.f32 %v777, %v2094
        %v2096 = vpop.f32.mrb[0].mxu0
        %2097 = vmatprep.mubr.bf16.mxu0 0
        %2098 = vmatmul.mubr.bf16.gmra.mrb[0].mxu0 %v1935
        %v2099 = vpop.f32.mrb[0].mxu0
        %v2100 = vadd.f32 %v777, %v2099
        %v2101 = vpop.f32.mrb[0].mxu0
        %v2102 = vpop.f32.mrb[0].mxu0
        %v2103 = vadd.f32 %v777, %v2102
        %v2104 = vpop.f32.mrb[0].mxu0
        %2105 = vmatprep.mubr.bf16.mxu0 0
        %2106 = vmatmul.mubr.bf16.gmra.mrb[0].mxu0 %v1936
        %v2107 = vpop.f32.mrb[0].mxu0
        %v2108 = vadd.f32 %v777, %v2107
        %v2109 = vpop.f32.mrb[0].mxu0
        %v2110 = vpop.f32.mrb[0].mxu0
        %v2111 = vadd.f32 %v777, %v2110
        %v2112 = vpop.f32.mrb[0].mxu0
        %2113 = vdwg.mxu0
        %v2114 = vmax.f32 %v1988, 0.0
        %v2115 = vmax.f32 %v1991, 0.0
        %v2116 = vmax.f32 %v1996, 0.0
        %v2117 = vmax.f32 %v1999, 0.0
        %v2118 = vmax.f32 %v2004, 0.0
        %v2119 = vmax.f32 %v2007, 0.0
        %v2120 = vmax.f32 %v2012, 0.0
        %v2121 = vmax.f32 %v2015, 0.0
        %v2122 = vmax.f32 %v2020, 0.0
        %v2123 = vmax.f32 %v2023, 0.0
        %v2124 = vmax.f32 %v2028, 0.0
        %v2125 = vmax.f32 %v2031, 0.0
        %v2126 = vmax.f32 %v2036, 0.0
        %v2127 = vmax.f32 %v2039, 0.0
        %v2128 = vmax.f32 %v2044, 0.0
        %v2129 = vmax.f32 %v2047, 0.0
        %v2130 = vmax.f32 %v2052, 0.0
        %v2131 = vmax.f32 %v2055, 0.0
        %v2132 = vmax.f32 %v2060, 0.0
        %v2133 = vmax.f32 %v2063, 0.0
        %v2134 = vmax.f32 %v2068, 0.0
        %v2135 = vmax.f32 %v2071, 0.0
        %v2136 = vmax.f32 %v2076, 0.0
        %v2137 = vmax.f32 %v2079, 0.0
        %v2138 = vmax.f32 %v2084, 0.0
        %v2139 = vmax.f32 %v2087, 0.0
        %v2140 = vmax.f32 %v2092, 0.0
        %v2141 = vmax.f32 %v2095, 0.0
        %v2142 = vmax.f32 %v2100, 0.0
        %v2143 = vmax.f32 %v2103, 0.0
        %v2144 = vmax.f32 %v2108, 0.0
        %v2145 = vmax.f32 %v2111, 0.0
        %v2146 = vmax.f32 %v1792, %v2114
        %v2147 = vmax.f32 %v1793, %v2115
        %v2148 = vmax.f32 %v1794, %v2116
        %v2149 = vmax.f32 %v1795, %v2117
        %v2150 = vmax.f32 %v1796, %v2118
        %v2151 = vmax.f32 %v1797, %v2119
        %v2152 = vmax.f32 %v1798, %v2120
        %v2153 = vmax.f32 %v1799, %v2121
        %v2154 = vmax.f32 %v1800, %v2122
        %v2155 = vmax.f32 %v1801, %v2123
        %v2156 = vmax.f32 %v1802, %v2124
        %v2157 = vmax.f32 %v1803, %v2125
        %v2158 = vmax.f32 %v1804, %v2126
        %v2159 = vmax.f32 %v1805, %v2127
        %v2160 = vmax.f32 %v1806, %v2128
        %v2161 = vmax.f32 %v1807, %v2129
        %v2162 = vmax.f32 %v1808, %v2130
        %v2163 = vmax.f32 %v1809, %v2131
        %v2164 = vmax.f32 %v1810, %v2132
        %v2165 = vmax.f32 %v1811, %v2133
        %v2166 = vmax.f32 %v1812, %v2134
        %v2167 = vmax.f32 %v1813, %v2135
        %v2168 = vmax.f32 %v1814, %v2136
        %v2169 = vmax.f32 %v1815, %v2137
        %v2170 = vmax.f32 %v1816, %v2138
        %v2171 = vmax.f32 %v1817, %v2139
        %v2172 = vmax.f32 %v1818, %v2140
        %v2173 = vmax.f32 %v1819, %v2141
        %v2174 = vmax.f32 %v1820, %v2142
        %v2175 = vmax.f32 %v1821, %v2143
        %v2176 = vmax.f32 %v1822, %v2144
        %v2177 = vmax.f32 %v1823, %v2145
        %v2178 = vpack.c.bf16 %v2147, %v2146
        %v2179 = vpack.c.bf16 %v2149, %v2148
        %v2180 = vpack.c.bf16 %v2151, %v2150
        %v2181 = vpack.c.bf16 %v2153, %v2152
        %v2182 = vpack.c.bf16 %v2155, %v2154
        %v2183 = vpack.c.bf16 %v2157, %v2156
        %v2184 = vpack.c.bf16 %v2159, %v2158
        %v2185 = vpack.c.bf16 %v2161, %v2160
        %v2186 = vpack.c.bf16 %v2163, %v2162
        %v2187 = vpack.c.bf16 %v2165, %v2164
        %v2188 = vpack.c.bf16 %v2167, %v2166
        %v2189 = vpack.c.bf16 %v2169, %v2168
        %v2190 = vpack.c.bf16 %v2171, %v2170
        %v2191 = vpack.c.bf16 %v2173, %v2172
        %v2192 = vpack.c.bf16 %v2175, %v2174
        %v2193 = vpack.c.bf16 %v2177, %v2176
        %v2210 = vunpack.c.l.b16 %v2178
        %v2211 = vunpack.c.h.b16 %v2178
        %v2212 = vunpack.c.l.b16 %v2179
        %v2213 = vunpack.c.h.b16 %v2179
        %v2214 = vunpack.c.l.b16 %v2180
        %v2215 = vunpack.c.h.b16 %v2180
        %v2216 = vunpack.c.l.b16 %v2181
        %v2217 = vunpack.c.h.b16 %v2181
        %v2218 = vunpack.c.l.b16 %v2182
        %v2219 = vunpack.c.h.b16 %v2182
        %v2220 = vunpack.c.l.b16 %v2183
        %v2221 = vunpack.c.h.b16 %v2183
        %v2222 = vunpack.c.l.b16 %v2184
        %v2223 = vunpack.c.h.b16 %v2184
        %v2224 = vunpack.c.l.b16 %v2185
        %v2225 = vunpack.c.h.b16 %v2185
        %v2226 = vunpack.c.l.b16 %v2186
        %v2227 = vunpack.c.h.b16 %v2186
        %v2228 = vunpack.c.l.b16 %v2187
        %v2229 = vunpack.c.h.b16 %v2187
        %v2230 = vunpack.c.l.b16 %v2188
        %v2231 = vunpack.c.h.b16 %v2188
        %v2232 = vunpack.c.l.b16 %v2189
        %v2233 = vunpack.c.h.b16 %v2189
        %v2234 = vunpack.c.l.b16 %v2190
        %v2235 = vunpack.c.h.b16 %v2190
        %v2236 = vunpack.c.l.b16 %v2191
        %v2237 = vunpack.c.h.b16 %v2191
        %v2238 = vunpack.c.l.b16 %v2192
        %v2239 = vunpack.c.h.b16 %v2192
        %v2240 = vunpack.c.l.b16 %v2193
        %v2241 = vunpack.c.h.b16 %v2193
        %v2242 = vpack.c.b16 %v2210, %v2210
        %v2243 = vpack.c.b16 %v2211, %v2211
        %v2244 = vpack.c.b16 %v2212, %v2212
        %v2245 = vpack.c.b16 %v2213, %v2213
        %v2246 = vpack.c.b16 %v2214, %v2214
        %v2247 = vpack.c.b16 %v2215, %v2215
        %v2248 = vpack.c.b16 %v2216, %v2216
        %v2249 = vpack.c.b16 %v2217, %v2217
        %v2250 = vpack.c.b16 %v2218, %v2218
        %v2251 = vpack.c.b16 %v2219, %v2219
        %v2252 = vpack.c.b16 %v2220, %v2220
        %v2253 = vpack.c.b16 %v2221, %v2221
        %v2254 = vpack.c.b16 %v2222, %v2222
        %v2255 = vpack.c.b16 %v2223, %v2223
        %v2256 = vpack.c.b16 %v2224, %v2224
        %v2257 = vpack.c.b16 %v2225, %v2225
        %v2258 = vpack.c.b16 %v2226, %v2226
        %v2259 = vpack.c.b16 %v2227, %v2227
        %v2260 = vpack.c.b16 %v2228, %v2228
        %v2261 = vpack.c.b16 %v2229, %v2229
        %v2262 = vpack.c.b16 %v2230, %v2230
        %v2263 = vpack.c.b16 %v2231, %v2231
        %v2264 = vpack.c.b16 %v2232, %v2232
        %v2265 = vpack.c.b16 %v2233, %v2233
        %v2266 = vpack.c.b16 %v2234, %v2234
        %v2267 = vpack.c.b16 %v2235, %v2235
        %v2268 = vpack.c.b16 %v2236, %v2236
        %v2269 = vpack.c.b16 %v2237, %v2237
        %v2270 = vpack.c.b16 %v2238, %v2238
        %v2271 = vpack.c.b16 %v2239, %v2239
        %v2272 = vpack.c.b16 %v2240, %v2240
        %v2273 = vpack.c.b16 %v2241, %v2241
        %2306 = vst [vmem:[%s721] sm:$0xf] %v2242
        %2307 = vst [vmem:[%s721 + $0x4] sm:$0xf] %v2243
        %2308 = vst [vmem:[%s721 + $0x8] sm:$0xf] %v2244
        %2309 = vst [vmem:[%s721 + $0xc] sm:$0xf] %v2245
        %2310 = vst [vmem:[%s721 + $0x10] sm:$0xf] %v2246
        %2311 = vst [vmem:[%s721 + $0x14] sm:$0xf] %v2247
        %2312 = vst [vmem:[%s721 + $0x18] sm:$0xf] %v2248
        %2313 = vst [vmem:[%s721 + $0x1c] sm:$0xf] %v2249
        %2314 = vst [vmem:[%s721 + $0x20] sm:$0xf] %v2250
        %2315 = vst [vmem:[%s721 + $0x24] sm:$0xf] %v2251
        %2316 = vst [vmem:[%s721 + $0x28] sm:$0xf] %v2252
        %2317 = vst [vmem:[%s721 + $0x2c] sm:$0xf] %v2253
        %2318 = vst [vmem:[%s721 + $0x30] sm:$0xf] %v2254
        %2319 = vst [vmem:[%s721 + $0x34] sm:$0xf] %v2255
        %2320 = vst [vmem:[%s721 + $0x38] sm:$0xf] %v2256
        %2321 = vst [vmem:[%s721 + $0x3c] sm:$0xf] %v2257
        %2322 = vst [vmem:[%s721 + $0x40] sm:$0xf] %v2258
        %2323 = vst [vmem:[%s721 + $0x44] sm:$0xf] %v2259
        %2324 = vst [vmem:[%s721 + $0x48] sm:$0xf] %v2260
        %2325 = vst [vmem:[%s721 + $0x4c] sm:$0xf] %v2261
        %2326 = vst [vmem:[%s721 + $0x50] sm:$0xf] %v2262
        %2327 = vst [vmem:[%s721 + $0x54] sm:$0xf] %v2263
        %2328 = vst [vmem:[%s721 + $0x58] sm:$0xf] %v2264
        %2329 = vst [vmem:[%s721 + $0x5c] sm:$0xf] %v2265
        %2330 = vst [vmem:[%s721 + $0x60] sm:$0xf] %v2266
        %2331 = vst [vmem:[%s721 + $0x64] sm:$0xf] %v2267
        %2332 = vst [vmem:[%s721 + $0x68] sm:$0xf] %v2268
        %2333 = vst [vmem:[%s721 + $0x6c] sm:$0xf] %v2269
        %2334 = vst [vmem:[%s721 + $0x70] sm:$0xf] %v2270
        %2335 = vst [vmem:[%s721 + $0x74] sm:$0xf] %v2271
        %2336 = vst [vmem:[%s721 + $0x78] sm:$0xf] %v2272
        %2337 = vst [vmem:[%s721 + $0x7c] sm:$0xf] %v2273
        %s2338 = smul.u32 32, %s14
        %p2339 = scmp.lt.s32.totalorder %s2338, 63
        %s2340 = scalar_select %p2339, %s2338, 63
        %s2341 = smul.addr %s2340, 4
        %s2342 = scalar_lea.vmem %s3, %s2341
        // Predicated region
        $region74: #{net_forward.3} parent=68 // pred_check
          %p2343 = pneg %p100
        $region75: #{net_forward.3} parent=68 // pred_check_branch
          %2345 = sbr.rel (%p2343) target = $region77
        $region76: #{net_forward.3} parent=68 // pred_region
          %s2346 = smul.u32 32, %s14
        $region77: #{net_forward.3} parent=68 // pred_fallthru
          _
      $region69: #{net_forward.3} parent=5 // pred_fallthru
        _
      %p2347 = scmp.le.s32.totalorder 2, %s9
      // Predicated region
      $region78: #{net_forward.3} parent=5 // pred_check
        %p2348 = pneg %p2347
      $region79: #{net_forward.3} parent=5 // pred_check_branch
        %2350 = sbr.rel (%p2348) target = $region81
      $region80: #{net_forward.3} parent=5 // pred_region
        %s2351 = ssub.s32 %s9, 2
        // Predicated region
        $region82: #{net_forward.3} parent=80 // pred_check
          %p2352 = pneg %p106
        $region83: #{net_forward.3} parent=80 // pred_check_branch
          %2354 = sbr.rel (%p2352) target = $region85
        $region84: #{net_forward.3} parent=80 // pred_region
          %s2355 = smul.u32 32, %s15
          %p2356 = scmp.lt.s32.totalorder %s2355, 63
          %s2357 = scalar_select %p2356, %s2355, 63
          %s2358 = smul.addr %s2357, 4
          %s2359 = scalar_lea.vmem %s3, %s2358
        $region85: #{net_forward.3} parent=80 // pred_fallthru
          _
      $region81: #{net_forward.3} parent=5 // pred_fallthru
        _
    $region6: #{net_forward.3} parent=1 // loop_footer
      %s13 = sadd.s32 1, %s9
    $region7: #{net_forward.3} parent=1 // loop_footer_branch
      %8 = sbr.rel target = $region3
    $region8: #{net_forward.3} parent=1 // loop_exit
      _

// kernel: net_forward.4
$region0: #{net_forward.4}
  #allocation0 [shape = 'u32[]', space=smem, size = 0x4, offset = 0x4, fixed_abs, tag = 'smem constant byte address 0x4 - core index']
  #allocation1 [shape = 'u32[144,128]{1,0:T(1,128)}', space=vmem, size = 0x12000, scoped, tag = 'internal scratch']
  %s0 = inlined_call_operand.vmem [shape: bf16[4,64,256], index: 0, kind: input, shape index: {}]
  %s1 = inlined_call_operand.vmem [shape: bf16[256,128], index: 1, kind: input, shape index: {}]
  %s2 = inlined_call_operand.vmem [shape: f32[1,128], index: 2, kind: input, shape index: {}]
  %s3 = inlined_call_operand.vmem [shape: bf16[64,128], index: 3, kind: output, shape index: {}]
  %s4 = sld [smem:[#allocation0]]
  $region22: #{net_forward.4} parent=0
    _
  %s6 = ssub.s32 1, %s4
  %s7 = scalar_select 0, %s6, %s4
  // Predicated region
  $region2: #{net_forward.4} parent=0 // pred_check
    _
  $region3: #{net_forward.4} parent=0 // pred_check_branch
    %9 = sbr.rel (0) target = $region5
  $region4: #{net_forward.4} parent=0 // pred_region
    _
  $region5: #{net_forward.4} parent=0 // pred_fallthru
    _
  // Predicated region
  $region6: #{net_forward.4} parent=0 // pred_check
    _
  $region7: #{net_forward.4} parent=0 // pred_check_branch
    %11 = sbr.rel (0) target = $region9
  $region8: #{net_forward.4} parent=0 // pred_region
    _
  $region9: #{net_forward.4} parent=0 // pred_fallthru
    _
  // Predicated region
  $region10: #{net_forward.4} parent=0 // pred_check
    _
  $region11: #{net_forward.4} parent=0 // pred_check_branch
    %13 = sbr.rel (0) target = $region13
  $region12: #{net_forward.4} parent=0 // pred_region
    _
  $region13: #{net_forward.4} parent=0 // pred_fallthru
    _
  %v15 = vld [vmem:[%s1] sm:$0xf]
  %v16 = vld [vmem:[%s1 + $0x4] sm:$0xf]
  %v17 = vld [vmem:[%s1 + $0x8] sm:$0xf]
  %v18 = vld [vmem:[%s1 + $0xc] sm:$0xf]
  %v19 = vld [vmem:[%s1 + $0x10] sm:$0xf]
  %v20 = vld [vmem:[%s1 + $0x14] sm:$0xf]
  %v21 = vld [vmem:[%s1 + $0x18] sm:$0xf]
  %v22 = vld [vmem:[%s1 + $0x1c] sm:$0xf]
  %v23 = vld [vmem:[%s1 + $0x20] sm:$0xf]
  %v24 = vld [vmem:[%s1 + $0x24] sm:$0xf]
  %v25 = vld [vmem:[%s1 + $0x28] sm:$0xf]
  %v26 = vld [vmem:[%s1 + $0x2c] sm:$0xf]
  %v27 = vld [vmem:[%s1 + $0x30] sm:$0xf]
  %v28 = vld [vmem:[%s1 + $0x34] sm:$0xf]
  %v29 = vld [vmem:[%s1 + $0x38] sm:$0xf]
  %v30 = vld [vmem:[%s1 + $0x3c] sm:$0xf]
  %v31 = vld [vmem:[%s1 + $0x40] sm:$0xf]
  %v32 = vld [vmem:[%s1 + $0x44] sm:$0xf]
  %v33 = vld [vmem:[%s1 + $0x48] sm:$0xf]
  %v34 = vld [vmem:[%s1 + $0x4c] sm:$0xf]
  %v35 = vld [vmem:[%s1 + $0x50] sm:$0xf]
  %v36 = vld [vmem:[%s1 + $0x54] sm:$0xf]
  %v37 = vld [vmem:[%s1 + $0x58] sm:$0xf]
  %v38 = vld [vmem:[%s1 + $0x5c] sm:$0xf]
  %v39 = vld [vmem:[%s1 + $0x60] sm:$0xf]
  %v40 = vld [vmem:[%s1 + $0x64] sm:$0xf]
  %v41 = vld [vmem:[%s1 + $0x68] sm:$0xf]
  %v42 = vld [vmem:[%s1 + $0x6c] sm:$0xf]
  %v43 = vld [vmem:[%s1 + $0x70] sm:$0xf]
  %v44 = vld [vmem:[%s1 + $0x74] sm:$0xf]
  %v45 = vld [vmem:[%s1 + $0x78] sm:$0xf]
  %v46 = vld [vmem:[%s1 + $0x7c] sm:$0xf]
  %v47 = vld [vmem:[%s2] sm:$0x1]
  %v48 = vld [vmem:[%s0] sm:$0xff]
  %v49 = vld [vmem:[%s0 + $0x8] sm:$0xff]
  %v50 = vld [vmem:[%s0 + $0x10] sm:$0xff]
  %v51 = vld [vmem:[%s0 + $0x18] sm:$0xff]
  %v52 = vld [vmem:[%s0 + $0x20] sm:$0xff]
  %v53 = vld [vmem:[%s0 + $0x28] sm:$0xff]
  %v54 = vld [vmem:[%s0 + $0x30] sm:$0xff]
  %v55 = vld [vmem:[%s0 + $0x38] sm:$0xff]
  %v57 = vlaneseq
  %v58 = vshrl.u32 %v57, 7
  %v59 = vsub.s32 0, %v58
  %v60 = vrot.slane %v47, %v59
  %v70 = vunpack.c.l.b16 %v48
  %v71 = vunpack.c.h.b16 %v48
  %v72 = vunpack.c.l.b16 %v49
  %v73 = vunpack.c.h.b16 %v49
  %v74 = vunpack.c.l.b16 %v50
  %v75 = vunpack.c.h.b16 %v50
  %v76 = vunpack.c.l.b16 %v51
  %v77 = vunpack.c.h.b16 %v51
  %v78 = vunpack.c.l.b16 %v52
  %v79 = vunpack.c.h.b16 %v52
  %v80 = vunpack.c.l.b16 %v53
  %v81 = vunpack.c.h.b16 %v53
  %v82 = vunpack.c.l.b16 %v54
  %v83 = vunpack.c.h.b16 %v54
  %v84 = vunpack.c.l.b16 %v55
  %v85 = vunpack.c.h.b16 %v55
  %v86 = vpack.c.b16 %v72, %v70
  %v87 = vpack.c.b16 %v73, %v71
  %v88 = vpack.c.b16 %v76, %v74
  %v89 = vpack.c.b16 %v77, %v75
  %v90 = vpack.c.b16 %v80, %v78
  %v91 = vpack.c.b16 %v81, %v79
  %v92 = vpack.c.b16 %v84, %v82
  %v93 = vpack.c.b16 %v85, %v83
  %v134 = vunpack.c.l.b16 %v15
  %v135 = vunpack.c.l.b16 %v16
  %v136 = vunpack.c.l.b16 %v17
  %v137 = vunpack.c.l.b16 %v18
  %v138 = vunpack.c.l.b16 %v19
  %v139 = vunpack.c.l.b16 %v20
  %v140 = vunpack.c.l.b16 %v21
  %v141 = vunpack.c.l.b16 %v22
  %v142 = vunpack.c.l.b16 %v23
  %v143 = vunpack.c.l.b16 %v24
  %v144 = vunpack.c.l.b16 %v25
  %v145 = vunpack.c.l.b16 %v26
  %v146 = vunpack.c.l.b16 %v27
  %v147 = vunpack.c.l.b16 %v28
  %v148 = vunpack.c.l.b16 %v29
  %v149 = vunpack.c.l.b16 %v30
  %v150 = vunpack.c.l.b16 %v31
  %v151 = vunpack.c.l.b16 %v32
  %v152 = vunpack.c.l.b16 %v33
  %v153 = vunpack.c.l.b16 %v34
  %v154 = vunpack.c.l.b16 %v35
  %v155 = vunpack.c.l.b16 %v36
  %v156 = vunpack.c.l.b16 %v37
  %v157 = vunpack.c.l.b16 %v38
  %v158 = vunpack.c.l.b16 %v39
  %v159 = vunpack.c.l.b16 %v40
  %v160 = vunpack.c.l.b16 %v41
  %v161 = vunpack.c.l.b16 %v42
  %v162 = vunpack.c.l.b16 %v43
  %v163 = vunpack.c.l.b16 %v44
  %v164 = vunpack.c.l.b16 %v45
  %v165 = vunpack.c.l.b16 %v46
  %v166 = vpack.c.b16 %v135, %v134
  %v167 = vpack.c.b16 %v137, %v136
  %v168 = vpack.c.b16 %v139, %v138
  %v169 = vpack.c.b16 %v141, %v140
  %v170 = vpack.c.b16 %v143, %v142
  %v171 = vpack.c.b16 %v145, %v144
  %v172 = vpack.c.b16 %v147, %v146
  %v173 = vpack.c.b16 %v149, %v148
  %v174 = vpack.c.b16 %v151, %v150
  %v175 = vpack.c.b16 %v153, %v152
  %v176 = vpack.c.b16 %v155, %v154
  %v177 = vpack.c.b16 %v157, %v156
  %v178 = vpack.c.b16 %v159, %v158
  %v179 = vpack.c.b16 %v161, %v160
  %v180 = vpack.c.b16 %v163, %v162
  %v181 = vpack.c.b16 %v165, %v164
  %198 = vmatprep.subr.bf16.mxu0 0
  %199 = vmatpush1.bf16.msra.mxu0 %v166
  %200 = vmatprep.subr.bf16.mxu0 0
  %201 = vmatpush1.bf16.msra.mxu0 %v167
  %202 = vmatprep.subr.bf16.mxu0 0
  %203 = vmatpush1.bf16.msra.mxu0 %v168
  %204 = vmatprep.subr.bf16.mxu0 0
  %205 = vmatpush1.bf16.msra.mxu0 %v169
  %206 = vmatprep.subr.bf16.mxu0 0
  %207 = vmatpush1.bf16.msra.mxu0 %v170
  %208 = vmatprep.subr.bf16.mxu0 0
  %209 = vmatpush1.bf16.msra.mxu0 %v171
  %210 = vmatprep.subr.bf16.mxu0 0
  %211 = vmatpush1.bf16.msra.mxu0 %v172
  %212 = vmatprep.subr.bf16.mxu0 0
  %213 = vmatpush1.bf16.msra.mxu0 %v173
  %214 = vmatprep.subr.bf16.mxu0 0
  %215 = vmatpush1.bf16.msra.mxu0 %v174
  %216 = vmatprep.subr.bf16.mxu0 0
  %217 = vmatpush1.bf16.msra.mxu0 %v175
  %218 = vmatprep.subr.bf16.mxu0 0
  %219 = vmatpush1.bf16.msra.mxu0 %v176
  %220 = vmatprep.subr.bf16.mxu0 0
  %221 = vmatpush1.bf16.msra.mxu0 %v177
  %222 = vmatprep.subr.bf16.mxu0 0
  %223 = vmatpush1.bf16.msra.mxu0 %v178
  %224 = vmatprep.subr.bf16.mxu0 0
  %225 = vmatpush1.bf16.msra.mxu0 %v179
  %226 = vmatprep.subr.bf16.mxu0 0
  %227 = vmatpush1.bf16.msra.mxu0 %v180
  %228 = vmatprep.subr.bf16.mxu0 0
  %229 = vmatpush1.bf16.msra.mxu0 %v181
  %230 = vmatprep.mubr.bf16.mxu0 %v87
  %231 = vmatmul.mubr.bf16.gmra.mrb[0].mxu0 %v86
  %v232 = vpop.f32.mrb[0].mxu0
  %v233 = vadd.f32 %v60, %v232
  %v234 = vpop.f32.mrb[0].mxu0
  %v235 = vpop.f32.mrb[0].mxu0
  %v236 = vadd.f32 %v60, %v235
  %v237 = vpop.f32.mrb[0].mxu0
  %238 = vmatprep.mubr.bf16.mxu0 %v89
  %239 = vmatmul.mubr.bf16.gmra.mrb[0].mxu0 %v88
  %v240 = vpop.f32.mrb[0].mxu0
  %v241 = vadd.f32 %v60, %v240
  %v242 = vpop.f32.mrb[0].mxu0
  %v243 = vpop.f32.mrb[0].mxu0
  %v244 = vadd.f32 %v60, %v243
  %v245 = vpop.f32.mrb[0].mxu0
  %246 = vmatprep.mubr.bf16.mxu0 %v91
  %247 = vmatmul.mubr.bf16.gmra.mrb[0].mxu0 %v90
  %v248 = vpop.f32.mrb[0].mxu0
  %v249 = vadd.f32 %v60, %v248
  %v250 = vpop.f32.mrb[0].mxu0
  %v251 = vpop.f32.mrb[0].mxu0
  %v252 = vadd.f32 %v60, %v251
  %v253 = vpop.f32.mrb[0].mxu0
  %254 = vmatprep.mubr.bf16.mxu0 %v93
  %255 = vmatmul.mubr.bf16.gmra.mrb[0].mxu0 %v92
  %v256 = vpop.f32.mrb[0].mxu0
  %v257 = vadd.f32 %v60, %v256
  %v258 = vpop.f32.mrb[0].mxu0
  %v259 = vpop.f32.mrb[0].mxu0
  %v260 = vadd.f32 %v60, %v259
  %v261 = vpop.f32.mrb[0].mxu0
  %262 = vdwg.mxu0
  %v263 = vmax.f32 %v233, 0.0
  %v264 = vmax.f32 %v236, 0.0
  %v265 = vmax.f32 %v241, 0.0
  %v266 = vmax.f32 %v244, 0.0
  %v267 = vmax.f32 %v249, 0.0
  %v268 = vmax.f32 %v252, 0.0
  %v269 = vmax.f32 %v257, 0.0
  %v270 = vmax.f32 %v260, 0.0
  %s271 = scalar_lea.vmem %s0, 64
  %v272 = vld [vmem:[%s271] sm:$0xff]
  %v273 = vld [vmem:[%s271 + $0x8] sm:$0xff]
  %v274 = vld [vmem:[%s271 + $0x10] sm:$0xff]
  %v275 = vld [vmem:[%s271 + $0x18] sm:$0xff]
  %v276 = vld [vmem:[%s271 + $0x20] sm:$0xff]
  %v277 = vld [vmem:[%s271 + $0x28] sm:$0xff]
  %v278 = vld [vmem:[%s271 + $0x30] sm:$0xff]
  %v279 = vld [vmem:[%s271 + $0x38] sm:$0xff]
  %v288 = vunpack.c.l.b16 %v272
  %v289 = vunpack.c.h.b16 %v272
  %v290 = vunpack.c.l.b16 %v273
  %v291 = vunpack.c.h.b16 %v273
  %v292 = vunpack.c.l.b16 %v274
  %v293 = vunpack.c.h.b16 %v274
  %v294 = vunpack.c.l.b16 %v275
  %v295 = vunpack.c.h.b16 %v275
  %v296 = vunpack.c.l.b16 %v276
  %v297 = vunpack.c.h.b16 %v276
  %v298 = vunpack.c.l.b16 %v277
  %v299 = vunpack.c.h.b16 %v277
  %v300 = vunpack.c.l.b16 %v278
  %v301 = vunpack.c.h.b16 %v278
  %v302 = vunpack.c.l.b16 %v279
  %v303 = vunpack.c.h.b16 %v279
  %v304 = vpack.c.b16 %v290, %v288
  %v305 = vpack.c.b16 %v291, %v289
  %v306 = vpack.c.b16 %v294, %v292
  %v307 = vpack.c.b16 %v295, %v293
  %v308 = vpack.c.b16 %v298, %v296
  %v309 = vpack.c.b16 %v299, %v297
  %v310 = vpack.c.b16 %v302, %v300
  %v311 = vpack.c.b16 %v303, %v301
  %320 = vmatprep.subr.bf16.mxu0 0
  %321 = vmatpush1.bf16.msra.mxu0 %v166
  %322 = vmatprep.subr.bf16.mxu0 0
  %323 = vmatpush1.bf16.msra.mxu0 %v167
  %324 = vmatprep.subr.bf16.mxu0 0
  %325 = vmatpush1.bf16.msra.mxu0 %v168
  %326 = vmatprep.subr.bf16.mxu0 0
  %327 = vmatpush1.bf16.msra.mxu0 %v169
  %328 = vmatprep.subr.bf16.mxu0 0
  %329 = vmatpush1.bf16.msra.mxu0 %v170
  %330 = vmatprep.subr.bf16.mxu0 0
  %331 = vmatpush1.bf16.msra.mxu0 %v171
  %332 = vmatprep.subr.bf16.mxu0 0
  %333 = vmatpush1.bf16.msra.mxu0 %v172
  %334 = vmatprep.subr.bf16.mxu0 0
  %335 = vmatpush1.bf16.msra.mxu0 %v173
  %336 = vmatprep.subr.bf16.mxu0 0
  %337 = vmatpush1.bf16.msra.mxu0 %v174
  %338 = vmatprep.subr.bf16.mxu0 0
  %339 = vmatpush1.bf16.msra.mxu0 %v175
  %340 = vmatprep.subr.bf16.mxu0 0
  %341 = vmatpush1.bf16.msra.mxu0 %v176
  %342 = vmatprep.subr.bf16.mxu0 0
  %343 = vmatpush1.bf16.msra.mxu0 %v177
  %344 = vmatprep.subr.bf16.mxu0 0
  %345 = vmatpush1.bf16.msra.mxu0 %v178
  %346 = vmatprep.subr.bf16.mxu0 0
  %347 = vmatpush1.bf16.msra.mxu0 %v179
  %348 = vmatprep.subr.bf16.mxu0 0
  %349 = vmatpush1.bf16.msra.mxu0 %v180
  %350 = vmatprep.subr.bf16.mxu0 0
  %351 = vmatpush1.bf16.msra.mxu0 %v181
  %352 = vmatprep.mubr.bf16.mxu0 %v305
  %353 = vmatmul.mubr.bf16.gmra.mrb[0].mxu0 %v304
  %v354 = vpop.f32.mrb[0].mxu0
  %v355 = vadd.f32 %v60, %v354
  %v356 = vpop.f32.mrb[0].mxu0
  %v357 = vpop.f32.mrb[0].mxu0
  %v358 = vadd.f32 %v60, %v357
  %v359 = vpop.f32.mrb[0].mxu0
  %360 = vmatprep.mubr.bf16.mxu0 %v307
  %361 = vmatmul.mubr.bf16.gmra.mrb[0].mxu0 %v306
  %v362 = vpop.f32.mrb[0].mxu0
  %v363 = vadd.f32 %v60, %v362
  %v364 = vpop.f32.mrb[0].mxu0
  %v365 = vpop.f32.mrb[0].mxu0
  %v366 = vadd.f32 %v60, %v365
  %v367 = vpop.f32.mrb[0].mxu0
  %368 = vmatprep.mubr.bf16.mxu0 %v309
  %369 = vmatmul.mubr.bf16.gmra.mrb[0].mxu0 %v308
  %v370 = vpop.f32.mrb[0].mxu0
  %v371 = vadd.f32 %v60, %v370
  %v372 = vpop.f32.mrb[0].mxu0
  %v373 = vpop.f32.mrb[0].mxu0
  %v374 = vadd.f32 %v60, %v373
  %v375 = vpop.f32.mrb[0].mxu0
  %376 = vmatprep.mubr.bf16.mxu0 %v311
  %377 = vmatmul.mubr.bf16.gmra.mrb[0].mxu0 %v310
  %v378 = vpop.f32.mrb[0].mxu0
  %v379 = vadd.f32 %v60, %v378
  %v380 = vpop.f32.mrb[0].mxu0
  %v381 = vpop.f32.mrb[0].mxu0
  %v382 = vadd.f32 %v60, %v381
  %v383 = vpop.f32.mrb[0].mxu0
  %384 = vdwg.mxu0
  %v385 = vmax.f32 %v355, 0.0
  %v386 = vmax.f32 %v358, 0.0
  %v387 = vmax.f32 %v363, 0.0
  %v388 = vmax.f32 %v366, 0.0
  %v389 = vmax.f32 %v371, 0.0
  %v390 = vmax.f32 %v374, 0.0
  %v391 = vmax.f32 %v379, 0.0
  %v392 = vmax.f32 %v382, 0.0
  %v393 = vmax.f32 %v263, %v385
  %v394 = vmax.f32 %v264, %v386
  %v395 = vmax.f32 %v265, %v387
  %v396 = vmax.f32 %v266, %v388
  %v397 = vmax.f32 %v267, %v389
  %v398 = vmax.f32 %v268, %v390
  %v399 = vmax.f32 %v269, %v391
  %v400 = vmax.f32 %v270, %v392
  %s401 = scalar_lea.vmem %s0, 128
  %v402 = vld [vmem:[%s401] sm:$0xff]
  %v403 = vld [vmem:[%s401 + $0x8] sm:$0xff]
  %v404 = vld [vmem:[%s401 + $0x10] sm:$0xff]
  %v405 = vld [vmem:[%s401 + $0x18] sm:$0xff]
  %v406 = vld [vmem:[%s401 + $0x20] sm:$0xff]
  %v407 = vld [vmem:[%s401 + $0x28] sm:$0xff]
  %v408 = vld [vmem:[%s401 + $0x30] sm:$0xff]
  %v409 = vld [vmem:[%s401 + $0x38] sm:$0xff]
  %v418 = vunpack.c.l.b16 %v402
  %v419 = vunpack.c.h.b16 %v402
  %v420 = vunpack.c.l.b16 %v403
  %v421 = vunpack.c.h.b16 %v403
  %v422 = vunpack.c.l.b16 %v404
  %v423 = vunpack.c.h.b16 %v404
  %v424 = vunpack.c.l.b16 %v405
  %v425 = vunpack.c.h.b16 %v405
  %v426 = vunpack.c.l.b16 %v406
  %v427 = vunpack.c.h.b16 %v406
  %v428 = vunpack.c.l.b16 %v407
  %v429 = vunpack.c.h.b16 %v407
  %v430 = vunpack.c.l.b16 %v408
  %v431 = vunpack.c.h.b16 %v408
  %v432 = vunpack.c.l.b16 %v409
  %v433 = vunpack.c.h.b16 %v409
  %v434 = vpack.c.b16 %v420, %v418
  %v435 = vpack.c.b16 %v421, %v419
  %v436 = vpack.c.b16 %v424, %v422
  %v437 = vpack.c.b16 %v425, %v423
  %v438 = vpack.c.b16 %v428, %v426
  %v439 = vpack.c.b16 %v429, %v427
  %v440 = vpack.c.b16 %v432, %v430
  %v441 = vpack.c.b16 %v433, %v431
  %450 = vmatprep.subr.bf16.mxu0 0
  %451 = vmatpush1.bf16.msra.mxu0 %v166
  %452 = vmatprep.subr.bf16.mxu0 0
  %453 = vmatpush1.bf16.msra.mxu0 %v167
  %454 = vmatprep.subr.bf16.mxu0 0
  %455 = vmatpush1.bf16.msra.mxu0 %v168
  %456 = vmatprep.subr.bf16.mxu0 0
  %457 = vmatpush1.bf16.msra.mxu0 %v169
  %458 = vmatprep.subr.bf16.mxu0 0
  %459 = vmatpush1.bf16.msra.mxu0 %v170
  %460 = vmatprep.subr.bf16.mxu0 0
  %461 = vmatpush1.bf16.msra.mxu0 %v171
  %462 = vmatprep.subr.bf16.mxu0 0
  %463 = vmatpush1.bf16.msra.mxu0 %v172
  %464 = vmatprep.subr.bf16.mxu0 0
  %465 = vmatpush1.bf16.msra.mxu0 %v173
  %466 = vmatprep.subr.bf16.mxu0 0
  %467 = vmatpush1.bf16.msra.mxu0 %v174
  %468 = vmatprep.subr.bf16.mxu0 0
  %469 = vmatpush1.bf16.msra.mxu0 %v175
  %470 = vmatprep.subr.bf16.mxu0 0
  %471 = vmatpush1.bf16.msra.mxu0 %v176
  %472 = vmatprep.subr.bf16.mxu0 0
  %473 = vmatpush1.bf16.msra.mxu0 %v177
  %474 = vmatprep.subr.bf16.mxu0 0
  %475 = vmatpush1.bf16.msra.mxu0 %v178
  %476 = vmatprep.subr.bf16.mxu0 0
  %477 = vmatpush1.bf16.msra.mxu0 %v179
  %478 = vmatprep.subr.bf16.mxu0 0
  %479 = vmatpush1.bf16.msra.mxu0 %v180
  %480 = vmatprep.subr.bf16.mxu0 0
  %481 = vmatpush1.bf16.msra.mxu0 %v181
  %482 = vmatprep.mubr.bf16.mxu0 %v435
  %483 = vmatmul.mubr.bf16.gmra.mrb[0].mxu0 %v434
  %v484 = vpop.f32.mrb[0].mxu0
  %v485 = vadd.f32 %v60, %v484
  %v486 = vpop.f32.mrb[0].mxu0
  %v487 = vpop.f32.mrb[0].mxu0
  %v488 = vadd.f32 %v60, %v487
  %v489 = vpop.f32.mrb[0].mxu0
  %490 = vmatprep.mubr.bf16.mxu0 %v437
  %491 = vmatmul.mubr.bf16.gmra.mrb[0].mxu0 %v436
  %v492 = vpop.f32.mrb[0].mxu0
  %v493 = vadd.f32 %v60, %v492
  %v494 = vpop.f32.mrb[0].mxu0
  %v495 = vpop.f32.mrb[0].mxu0
  %v496 = vadd.f32 %v60, %v495
  %v497 = vpop.f32.mrb[0].mxu0
  %498 = vmatprep.mubr.bf16.mxu0 %v439
  %499 = vmatmul.mubr.bf16.gmra.mrb[0].mxu0 %v438
  %v500 = vpop.f32.mrb[0].mxu0
  %v501 = vadd.f32 %v60, %v500
  %v502 = vpop.f32.mrb[0].mxu0
  %v503 = vpop.f32.mrb[0].mxu0
  %v504 = vadd.f32 %v60, %v503
  %v505 = vpop.f32.mrb[0].mxu0
  %506 = vmatprep.mubr.bf16.mxu0 %v441
  %507 = vmatmul.mubr.bf16.gmra.mrb[0].mxu0 %v440
  %v508 = vpop.f32.mrb[0].mxu0
  %v509 = vadd.f32 %v60, %v508
  %v510 = vpop.f32.mrb[0].mxu0
  %v511 = vpop.f32.mrb[0].mxu0
  %v512 = vadd.f32 %v60, %v511
  %v513 = vpop.f32.mrb[0].mxu0
  %514 = vdwg.mxu0
  %v515 = vmax.f32 %v485, 0.0
  %v516 = vmax.f32 %v488, 0.0
  %v517 = vmax.f32 %v493, 0.0
  %v518 = vmax.f32 %v496, 0.0
  %v519 = vmax.f32 %v501, 0.0
  %v520 = vmax.f32 %v504, 0.0
  %v521 = vmax.f32 %v509, 0.0
  %v522 = vmax.f32 %v512, 0.0
  %v523 = vmax.f32 %v393, %v515
  %v524 = vmax.f32 %v394, %v516
  %v525 = vmax.f32 %v395, %v517
  %v526 = vmax.f32 %v396, %v518
  %v527 = vmax.f32 %v397, %v519
  %v528 = vmax.f32 %v398, %v520
  %v529 = vmax.f32 %v399, %v521
  %v530 = vmax.f32 %v400, %v522
  %s531 = scalar_lea.vmem %s0, 192
  %v532 = vld [vmem:[%s531] sm:$0xff]
  %v533 = vld [vmem:[%s531 + $0x8] sm:$0xff]
  %v534 = vld [vmem:[%s531 + $0x10] sm:$0xff]
  %v535 = vld [vmem:[%s531 + $0x18] sm:$0xff]
  %v536 = vld [vmem:[%s531 + $0x20] sm:$0xff]
  %v537 = vld [vmem:[%s531 + $0x28] sm:$0xff]
  %v538 = vld [vmem:[%s531 + $0x30] sm:$0xff]
  %v539 = vld [vmem:[%s531 + $0x38] sm:$0xff]
  %v548 = vunpack.c.l.b16 %v532
  %v549 = vunpack.c.h.b16 %v532
  %v550 = vunpack.c.l.b16 %v533
  %v551 = vunpack.c.h.b16 %v533
  %v552 = vunpack.c.l.b16 %v534
  %v553 = vunpack.c.h.b16 %v534
  %v554 = vunpack.c.l.b16 %v535
  %v555 = vunpack.c.h.b16 %v535
  %v556 = vunpack.c.l.b16 %v536
  %v557 = vunpack.c.h.b16 %v536
  %v558 = vunpack.c.l.b16 %v537
  %v559 = vunpack.c.h.b16 %v537
  %v560 = vunpack.c.l.b16 %v538
  %v561 = vunpack.c.h.b16 %v538
  %v562 = vunpack.c.l.b16 %v539
  %v563 = vunpack.c.h.b16 %v539
  %v564 = vpack.c.b16 %v550, %v548
  %v565 = vpack.c.b16 %v551, %v549
  %v566 = vpack.c.b16 %v554, %v552
  %v567 = vpack.c.b16 %v555, %v553
  %v568 = vpack.c.b16 %v558, %v556
  %v569 = vpack.c.b16 %v559, %v557
  %v570 = vpack.c.b16 %v562, %v560
  %v571 = vpack.c.b16 %v563, %v561
  %580 = vmatprep.subr.bf16.mxu0 0
  %581 = vmatpush1.bf16.msra.mxu0 %v166
  %582 = vmatprep.subr.bf16.mxu0 0
  %583 = vmatpush1.bf16.msra.mxu0 %v167
  %584 = vmatprep.subr.bf16.mxu0 0
  %585 = vmatpush1.bf16.msra.mxu0 %v168
  %586 = vmatprep.subr.bf16.mxu0 0
  %587 = vmatpush1.bf16.msra.mxu0 %v169
  %588 = vmatprep.subr.bf16.mxu0 0
  %589 = vmatpush1.bf16.msra.mxu0 %v170
  %590 = vmatprep.subr.bf16.mxu0 0
  %591 = vmatpush1.bf16.msra.mxu0 %v171
  %592 = vmatprep.subr.bf16.mxu0 0
  %593 = vmatpush1.bf16.msra.mxu0 %v172
  %594 = vmatprep.subr.bf16.mxu0 0
  %595 = vmatpush1.bf16.msra.mxu0 %v173
  %596 = vmatprep.subr.bf16.mxu0 0
  %597 = vmatpush1.bf16.msra.mxu0 %v174
  %598 = vmatprep.subr.bf16.mxu0 0
  %599 = vmatpush1.bf16.msra.mxu0 %v175
  %600 = vmatprep.subr.bf16.mxu0 0
  %601 = vmatpush1.bf16.msra.mxu0 %v176
  %602 = vmatprep.subr.bf16.mxu0 0
  %603 = vmatpush1.bf16.msra.mxu0 %v177
  %604 = vmatprep.subr.bf16.mxu0 0
  %605 = vmatpush1.bf16.msra.mxu0 %v178
  %606 = vmatprep.subr.bf16.mxu0 0
  %607 = vmatpush1.bf16.msra.mxu0 %v179
  %608 = vmatprep.subr.bf16.mxu0 0
  %609 = vmatpush1.bf16.msra.mxu0 %v180
  %610 = vmatprep.subr.bf16.mxu0 0
  %611 = vmatpush1.bf16.msra.mxu0 %v181
  %612 = vmatprep.mubr.bf16.mxu0 %v565
  %613 = vmatmul.mubr.bf16.gmra.mrb[0].mxu0 %v564
  %v614 = vpop.f32.mrb[0].mxu0
  %v615 = vadd.f32 %v60, %v614
  %v616 = vpop.f32.mrb[0].mxu0
  %v617 = vpop.f32.mrb[0].mxu0
  %v618 = vadd.f32 %v60, %v617
  %v619 = vpop.f32.mrb[0].mxu0
  %620 = vmatprep.mubr.bf16.mxu0 %v567
  %621 = vmatmul.mubr.bf16.gmra.mrb[0].mxu0 %v566
  %v622 = vpop.f32.mrb[0].mxu0
  %v623 = vadd.f32 %v60, %v622
  %v624 = vpop.f32.mrb[0].mxu0
  %v625 = vpop.f32.mrb[0].mxu0
  %v626 = vadd.f32 %v60, %v625
  %v627 = vpop.f32.mrb[0].mxu0
  %628 = vmatprep.mubr.bf16.mxu0 %v569
  %629 = vmatmul.mubr.bf16.gmra.mrb[0].mxu0 %v568
  %v630 = vpop.f32.mrb[0].mxu0
  %v631 = vadd.f32 %v60, %v630
  %v632 = vpop.f32.mrb[0].mxu0
  %v633 = vpop.f32.mrb[0].mxu0
  %v634 = vadd.f32 %v60, %v633
  %v635 = vpop.f32.mrb[0].mxu0
  %636 = vmatprep.mubr.bf16.mxu0 %v571
  %637 = vmatmul.mubr.bf16.gmra.mrb[0].mxu0 %v570
  %v638 = vpop.f32.mrb[0].mxu0
  %v639 = vadd.f32 %v60, %v638
  %v640 = vpop.f32.mrb[0].mxu0
  %v641 = vpop.f32.mrb[0].mxu0
  %v642 = vadd.f32 %v60, %v641
  %v643 = vpop.f32.mrb[0].mxu0
  %644 = vdwg.mxu0
  %v645 = vmax.f32 %v615, 0.0
  %v646 = vmax.f32 %v618, 0.0
  %v647 = vmax.f32 %v623, 0.0
  %v648 = vmax.f32 %v626, 0.0
  %v649 = vmax.f32 %v631, 0.0
  %v650 = vmax.f32 %v634, 0.0
  %v651 = vmax.f32 %v639, 0.0
  %v652 = vmax.f32 %v642, 0.0
  %v653 = vmax.f32 %v523, %v645
  %v654 = vmax.f32 %v524, %v646
  %v655 = vmax.f32 %v525, %v647
  %v656 = vmax.f32 %v526, %v648
  %v657 = vmax.f32 %v527, %v649
  %v658 = vmax.f32 %v528, %v650
  %v659 = vmax.f32 %v529, %v651
  %v660 = vmax.f32 %v530, %v652
  %v661 = vpack.c.bf16 %v654, %v653
  %v662 = vpack.c.bf16 %v656, %v655
  %v663 = vpack.c.bf16 %v658, %v657
  %v664 = vpack.c.bf16 %v660, %v659
  %v669 = vunpack.c.l.b16 %v661
  %v670 = vunpack.c.h.b16 %v661
  %v671 = vunpack.c.l.b16 %v662
  %v672 = vunpack.c.h.b16 %v662
  %v673 = vunpack.c.l.b16 %v663
  %v674 = vunpack.c.h.b16 %v663
  %v675 = vunpack.c.l.b16 %v664
  %v676 = vunpack.c.h.b16 %v664
  %v677 = vpack.c.b16 %v669, %v669
  %v678 = vpack.c.b16 %v670, %v670
  %v679 = vpack.c.b16 %v671, %v671
  %v680 = vpack.c.b16 %v672, %v672
  %v681 = vpack.c.b16 %v673, %v673
  %v682 = vpack.c.b16 %v674, %v674
  %v683 = vpack.c.b16 %v675, %v675
  %v684 = vpack.c.b16 %v676, %v676
  %693 = vst [vmem:[%s3] sm:$0xf] %v677
  %694 = vst [vmem:[%s3 + $0x4] sm:$0xf] %v678
  %695 = vst [vmem:[%s3 + $0x8] sm:$0xf] %v679
  %696 = vst [vmem:[%s3 + $0xc] sm:$0xf] %v680
  %697 = vst [vmem:[%s3 + $0x10] sm:$0xf] %v681
  %698 = vst [vmem:[%s3 + $0x14] sm:$0xf] %v682
  %699 = vst [vmem:[%s3 + $0x18] sm:$0xf] %v683
  %700 = vst [vmem:[%s3 + $0x1c] sm:$0xf] %v684
  // Predicated region
  $region14: #{net_forward.4} parent=0 // pred_check
    _
  $region15: #{net_forward.4} parent=0 // pred_check_branch
    %702 = sbr.rel (0) target = $region17
  $region16: #{net_forward.4} parent=0 // pred_region
    _
  $region17: #{net_forward.4} parent=0 // pred_fallthru
    _
  // Predicated region
  $region18: #{net_forward.4} parent=0 // pred_check
    _
  $region19: #{net_forward.4} parent=0 // pred_check_branch
    %704 = sbr.rel (0) target = $region21
  $region20: #{net_forward.4} parent=0 // pred_region
    _
  $region21: #{net_forward.4} parent=0 // pred_fallthru
    _

// kernel: net_forward.5
$region0: #{net_forward.5}
  #allocation0 [shape = 'u32[]', space=smem, size = 0x4, offset = 0x4, fixed_abs, tag = 'smem constant byte address 0x4 - core index']
  #allocation1 [shape = 'u32[144,128]{1,0:T(1,128)}', space=vmem, size = 0x12000, scoped, tag = 'internal scratch']
  %s0 = inlined_call_operand.vmem [shape: bf16[32,3200], index: 0, kind: input, shape index: {}]
  %s1 = inlined_call_operand.vmem [shape: bf16[3200,128], index: 1, kind: input, shape index: {}]
  %s2 = inlined_call_operand.vmem [shape: f32[1,128], index: 2, kind: input, shape index: {}]
  %s3 = inlined_call_operand.vmem [shape: bf16[128,128], index: 3, kind: input, shape index: {}]
  %s4 = inlined_call_operand.vmem [shape: f32[1,128], index: 4, kind: input, shape index: {}]
  %s5 = inlined_call_operand.vmem [shape: bf16[128,128], index: 5, kind: input, shape index: {}]
  %s6 = inlined_call_operand.vmem [shape: f32[1,128], index: 6, kind: input, shape index: {}]
  %s7 = inlined_call_operand.vmem [shape: f32[32,128], index: 7, kind: output, shape index: {}]
  %s8 = sld [smem:[#allocation0]]
  $region38: #{net_forward.5} parent=0
    _
  %s10 = ssub.s32 1, %s8
  %s11 = scalar_select 0, %s10, %s8
  // Predicated region
  $region2: #{net_forward.5} parent=0 // pred_check
    _
  $region3: #{net_forward.5} parent=0 // pred_check_branch
    %13 = sbr.rel (0) target = $region5
  $region4: #{net_forward.5} parent=0 // pred_region
    _
  $region5: #{net_forward.5} parent=0 // pred_fallthru
    _
  // Predicated region
  $region6: #{net_forward.5} parent=0 // pred_check
    _
  $region7: #{net_forward.5} parent=0 // pred_check_branch
    %15 = sbr.rel (0) target = $region9
  $region8: #{net_forward.5} parent=0 // pred_region
    _
  $region9: #{net_forward.5} parent=0 // pred_fallthru
    _
  // Predicated region
  $region10: #{net_forward.5} parent=0 // pred_check
    _
  $region11: #{net_forward.5} parent=0 // pred_check_branch
    %17 = sbr.rel (0) target = $region13
  $region12: #{net_forward.5} parent=0 // pred_region
    _
  $region13: #{net_forward.5} parent=0 // pred_fallthru
    _
  // Predicated region
  $region14: #{net_forward.5} parent=0 // pred_check
    _
  $region15: #{net_forward.5} parent=0 // pred_check_branch
    %19 = sbr.rel (0) target = $region17
  $region16: #{net_forward.5} parent=0 // pred_region
    _
  $region17: #{net_forward.5} parent=0 // pred_fallthru
    _
  // Predicated region
  $region18: #{net_forward.5} parent=0 // pred_check
    _
  $region19: #{net_forward.5} parent=0 // pred_check_branch
    %21 = sbr.rel (0) target = $region21
  $region20: #{net_forward.5} parent=0 // pred_region
    _
  $region21: #{net_forward.5} parent=0 // pred_fallthru
    _
  // Predicated region
  $region22: #{net_forward.5} parent=0 // pred_check
    _
  $region23: #{net_forward.5} parent=0 // pred_check_branch
    %23 = sbr.rel (0) target = $region25
  $region24: #{net_forward.5} parent=0 // pred_region
    _
  $region25: #{net_forward.5} parent=0 // pred_fallthru
    _
  // Predicated region
  $region26: #{net_forward.5} parent=0 // pred_check
    _
  $region27: #{net_forward.5} parent=0 // pred_check_branch
    %25 = sbr.rel (0) target = $region29
  $region28: #{net_forward.5} parent=0 // pred_region
    _
  $region29: #{net_forward.5} parent=0 // pred_fallthru
    _
  %v27 = vld [vmem:[%s0] sm:$0xff]
  %v28 = vld [vmem:[%s0 + $0x8] sm:$0xff]
  %v29 = vld [vmem:[%s0 + $0x10] sm:$0xff]
  %v30 = vld [vmem:[%s0 + $0x18] sm:$0xff]
  %v31 = vld [vmem:[%s0 + $0x20] sm:$0xff]
  %v32 = vld [vmem:[%s0 + $0x28] sm:$0xff]
  %v33 = vld [vmem:[%s0 + $0x30] sm:$0xff]
  %v34 = vld [vmem:[%s0 + $0x38] sm:$0xff]
  %v35 = vld [vmem:[%s0 + $0x40] sm:$0xff]
  %v36 = vld [vmem:[%s0 + $0x48] sm:$0xff]
  %v37 = vld [vmem:[%s0 + $0x50] sm:$0xff]
  %v38 = vld [vmem:[%s0 + $0x58] sm:$0xff]
  %v39 = vld [vmem:[%s0 + $0x60] sm:$0xf]
  %v40 = vld [vmem:[%s0 + $0x64] sm:$0xff]
  %v41 = vld [vmem:[%s0 + $0x6c] sm:$0xff]
  %v42 = vld [vmem:[%s0 + $0x74] sm:$0xff]
  %v43 = vld [vmem:[%s0 + $0x7c] sm:$0xff]
  %v44 = vld [vmem:[%s0 + $0x84] sm:$0xff]
  %v45 = vld [vmem:[%s0 + $0x8c] sm:$0xff]
  %v46 = vld [vmem:[%s0 + $0x94] sm:$0xff]
  %v47 = vld [vmem:[%s0 + $0x9c] sm:$0xff]
  %v48 = vld [vmem:[%s0 + $0xa4] sm:$0xff]
  %v49 = vld [vmem:[%s0 + $0xac] sm:$0xff]
  %v50 = vld [vmem:[%s0 + $0xb4] sm:$0xff]
  %v51 = vld [vmem:[%s0 + $0xbc] sm:$0xff]
  %v52 = vld [vmem:[%s0 + $0xc4] sm:$0xf]
  %v53 = vld [vmem:[%s0 + $0xc8] sm:$0xff]
  %v54 = vld [vmem:[%s0 + $0xd0] sm:$0xff]
  %v55 = vld [vmem:[%s0 + $0xd8] sm:$0xff]
  %v56 = vld [vmem:[%s0 + $0xe0] sm:$0xff]
  %v57 = vld [vmem:[%s0 + $0xe8] sm:$0xff]
  %v58 = vld [vmem:[%s0 + $0xf0] sm:$0xff]
  %v59 = vld [vmem:[%s0 + $0xf8] sm:$0xff]
  %v60 = vld [vmem:[%s0 + $0x100] sm:$0xff]
  %v61 = vld [vmem:[%s0 + $0x108] sm:$0xff]
  %v62 = vld [vmem:[%s0 + $0x110] sm:$0xff]
  %v63 = vld [vmem:[%s0 + $0x118] sm:$0xff]
  %v64 = vld [vmem:[%s0 + $0x120] sm:$0xff]
  %v65 = vld [vmem:[%s0 + $0x128] sm:$0xf]
  %v66 = vld [vmem:[%s0 + $0x12c] sm:$0xff]
  %v67 = vld [vmem:[%s0 + $0x134] sm:$0xff]
  %v68 = vld [vmem:[%s0 + $0x13c] sm:$0xff]
  %v69 = vld [vmem:[%s0 + $0x144] sm:$0xff]
  %v70 = vld [vmem:[%s0 + $0x14c] sm:$0xff]
  %v71 = vld [vmem:[%s0 + $0x154] sm:$0xff]
  %v72 = vld [vmem:[%s0 + $0x15c] sm:$0xff]
  %v73 = vld [vmem:[%s0 + $0x164] sm:$0xff]
  %v74 = vld [vmem:[%s0 + $0x16c] sm:$0xff]
  %v75 = vld [vmem:[%s0 + $0x174] sm:$0xff]
  %v76 = vld [vmem:[%s0 + $0x17c] sm:$0xff]
  %v77 = vld [vmem:[%s0 + $0x184] sm:$0xff]
  %v78 = vld [vmem:[%s0 + $0x18c] sm:$0xf]
  %v79 = vld [vmem:[%s1] sm:$0xf]
  %v80 = vld [vmem:[%s1 + $0x4] sm:$0xf]
  %v81 = vld [vmem:[%s1 + $0x8] sm:$0xf]
  %v82 = vld [vmem:[%s1 + $0xc] sm:$0xf]
  %v83 = vld [vmem:[%s1 + $0x10] sm:$0xf]
  %v84 = vld [vmem:[%s1 + $0x14] sm:$0xf]
  %v85 = vld [vmem:[%s1 + $0x18] sm:$0xf]
  %v86 = vld [vmem:[%s1 + $0x1c] sm:$0xf]
  %v87 = vld [vmem:[%s1 + $0x20] sm:$0xf]
  %v88 = vld [vmem:[%s1 + $0x24] sm:$0xf]
  %v89 = vld [vmem:[%s1 + $0x28] sm:$0xf]
  %v90 = vld [vmem:[%s1 + $0x2c] sm:$0xf]
  %v91 = vld [vmem:[%s1 + $0x30] sm:$0xf]
  %v92 = vld [vmem:[%s1 + $0x34] sm:$0xf]
  %v93 = vld [vmem:[%s1 + $0x38] sm:$0xf]
  %v94 = vld [vmem:[%s1 + $0x3c] sm:$0xf]
  %v95 = vld [vmem:[%s1 + $0x40] sm:$0xf]
  %v96 = vld [vmem:[%s1 + $0x44] sm:$0xf]
  %v97 = vld [vmem:[%s1 + $0x48] sm:$0xf]
  %v98 = vld [vmem:[%s1 + $0x4c] sm:$0xf]
  %v99 = vld [vmem:[%s1 + $0x50] sm:$0xf]
  %v100 = vld [vmem:[%s1 + $0x54] sm:$0xf]
  %v101 = vld [vmem:[%s1 + $0x58] sm:$0xf]
  %v102 = vld [vmem:[%s1 + $0x5c] sm:$0xf]
  %v103 = vld [vmem:[%s1 + $0x60] sm:$0xf]
  %v104 = vld [vmem:[%s1 + $0x64] sm:$0xf]
  %v105 = vld [vmem:[%s1 + $0x68] sm:$0xf]
  %v106 = vld [vmem:[%s1 + $0x6c] sm:$0xf]
  %v107 = vld [vmem:[%s1 + $0x70] sm:$0xf]
  %v108 = vld [vmem:[%s1 + $0x74] sm:$0xf]
  %v109 = vld [vmem:[%s1 + $0x78] sm:$0xf]
  %v110 = vld [vmem:[%s1 + $0x7c] sm:$0xf]
  %v111 = vld [vmem:[%s1 + $0x80] sm:$0xf]
  %v112 = vld [vmem:[%s1 + $0x84] sm:$0xf]
  %v113 = vld [vmem:[%s1 + $0x88] sm:$0xf]
  %v114 = vld [vmem:[%s1 + $0x8c] sm:$0xf]
  %v115 = vld [vmem:[%s1 + $0x90] sm:$0xf]
  %v116 = vld [vmem:[%s1 + $0x94] sm:$0xf]
  %v117 = vld [vmem:[%s1 + $0x98] sm:$0xf]
  %v118 = vld [vmem:[%s1 + $0x9c] sm:$0xf]
  %v119 = vld [vmem:[%s1 + $0xa0] sm:$0xf]
  %v120 = vld [vmem:[%s1 + $0xa4] sm:$0xf]
  %v121 = vld [vmem:[%s1 + $0xa8] sm:$0xf]
  %v122 = vld [vmem:[%s1 + $0xac] sm:$0xf]
  %v123 = vld [vmem:[%s1 + $0xb0] sm:$0xf]
  %v124 = vld [vmem:[%s1 + $0xb4] sm:$0xf]
  %v125 = vld [vmem:[%s1 + $0xb8] sm:$0xf]
  %v126 = vld [vmem:[%s1 + $0xbc] sm:$0xf]
  %v127 = vld [vmem:[%s1 + $0xc0] sm:$0xf]
  %v128 = vld [vmem:[%s1 + $0xc4] sm:$0xf]
  %v129 = vld [vmem:[%s1 + $0xc8] sm:$0xf]
  %v130 = vld [vmem:[%s1 + $0xcc] sm:$0xf]
  %v131 = vld [vmem:[%s1 + $0xd0] sm:$0xf]
  %v132 = vld [vmem:[%s1 + $0xd4] sm:$0xf]
  %v133 = vld [vmem:[%s1 + $0xd8] sm:$0xf]
  %v134 = vld [vmem:[%s1 + $0xdc] sm:$0xf]
  %v135 = vld [vmem:[%s1 + $0xe0] sm:$0xf]
  %v136 = vld [vmem:[%s1 + $0xe4] sm:$0xf]
  %v137 = vld [vmem:[%s1 + $0xe8] sm:$0xf]
  %v138 = vld [vmem:[%s1 + $0xec] sm:$0xf]
  %v139 = vld [vmem:[%s1 + $0xf0] sm:$0xf]
  %v140 = vld [vmem:[%s1 + $0xf4] sm:$0xf]
  %v141 = vld [vmem:[%s1 + $0xf8] sm:$0xf]
  %v142 = vld [vmem:[%s1 + $0xfc] sm:$0xf]
  %v143 = vld [vmem:[%s1 + $0x100] sm:$0xf]
  %v144 = vld [vmem:[%s1 + $0x104] sm:$0xf]
  %v145 = vld [vmem:[%s1 + $0x108] sm:$0xf]
  %v146 = vld [vmem:[%s1 + $0x10c] sm:$0xf]
  %v147 = vld [vmem:[%s1 + $0x110] sm:$0xf]
  %v148 = vld [vmem:[%s1 + $0x114] sm:$0xf]
  %v149 = vld [vmem:[%s1 + $0x118] sm:$0xf]
  %v150 = vld [vmem:[%s1 + $0x11c] sm:$0xf]
  %v151 = vld [vmem:[%s1 + $0x120] sm:$0xf]
  %v152 = vld [vmem:[%s1 + $0x124] sm:$0xf]
  %v153 = vld [vmem:[%s1 + $0x128] sm:$0xf]
  %v154 = vld [vmem:[%s1 + $0x12c] sm:$0xf]
  %v155 = vld [vmem:[%s1 + $0x130] sm:$0xf]
  %v156 = vld [vmem:[%s1 + $0x134] sm:$0xf]
  %v157 = vld [vmem:[%s1 + $0x138] sm:$0xf]
  %v158 = vld [vmem:[%s1 + $0x13c] sm:$0xf]
  %v159 = vld [vmem:[%s1 + $0x140] sm:$0xf]
  %v160 = vld [vmem:[%s1 + $0x144] sm:$0xf]
  %v161 = vld [vmem:[%s1 + $0x148] sm:$0xf]
  %v162 = vld [vmem:[%s1 + $0x14c] sm:$0xf]
  %v163 = vld [vmem:[%s1 + $0x150] sm:$0xf]
  %v164 = vld [vmem:[%s1 + $0x154] sm:$0xf]
  %v165 = vld [vmem:[%s1 + $0x158] sm:$0xf]
  %v166 = vld [vmem:[%s1 + $0x15c] sm:$0xf]
  %v167 = vld [vmem:[%s1 + $0x160] sm:$0xf]
  %v168 = vld [vmem:[%s1 + $0x164] sm:$0xf]
  %v169 = vld [vmem:[%s1 + $0x168] sm:$0xf]
  %v170 = vld [vmem:[%s1 + $0x16c] sm:$0xf]
  %v171 = vld [vmem:[%s1 + $0x170] sm:$0xf]
  %v172 = vld [vmem:[%s1 + $0x174] sm:$0xf]
  %v173 = vld [vmem:[%s1 + $0x178] sm:$0xf]
  %v174 = vld [vmem:[%s1 + $0x17c] sm:$0xf]
  %v175 = vld [vmem:[%s1 + $0x180] sm:$0xf]
  %v176 = vld [vmem:[%s1 + $0x184] sm:$0xf]
  %v177 = vld [vmem:[%s1 + $0x188] sm:$0xf]
  %v178 = vld [vmem:[%s1 + $0x18c] sm:$0xf]
  %v179 = vld [vmem:[%s1 + $0x190] sm:$0xf]
  %v180 = vld [vmem:[%s1 + $0x194] sm:$0xf]
  %v181 = vld [vmem:[%s1 + $0x198] sm:$0xf]
  %v182 = vld [vmem:[%s1 + $0x19c] sm:$0xf]
  %v183 = vld [vmem:[%s1 + $0x1a0] sm:$0xf]
  %v184 = vld [vmem:[%s1 + $0x1a4] sm:$0xf]
  %v185 = vld [vmem:[%s1 + $0x1a8] sm:$0xf]
  %v186 = vld [vmem:[%s1 + $0x1ac] sm:$0xf]
  %v187 = vld [vmem:[%s1 + $0x1b0] sm:$0xf]
  %v188 = vld [vmem:[%s1 + $0x1b4] sm:$0xf]
  %v189 = vld [vmem:[%s1 + $0x1b8] sm:$0xf]
  %v190 = vld [vmem:[%s1 + $0x1bc] sm:$0xf]
  %v191 = vld [vmem:[%s1 + $0x1c0] sm:$0xf]
  %v192 = vld [vmem:[%s1 + $0x1c4] sm:$0xf]
  %v193 = vld [vmem:[%s1 + $0x1c8] sm:$0xf]
  %v194 = vld [vmem:[%s1 + $0x1cc] sm:$0xf]
  %v195 = vld [vmem:[%s1 + $0x1d0] sm:$0xf]
  %v196 = vld [vmem:[%s1 + $0x1d4] sm:$0xf]
  %v197 = vld [vmem:[%s1 + $0x1d8] sm:$0xf]
  %v198 = vld [vmem:[%s1 + $0x1dc] sm:$0xf]
  %v199 = vld [vmem:[%s1 + $0x1e0] sm:$0xf]
  %v200 = vld [vmem:[%s1 + $0x1e4] sm:$0xf]
  %v201 = vld [vmem:[%s1 + $0x1e8] sm:$0xf]
  %v202 = vld [vmem:[%s1 + $0x1ec] sm:$0xf]
  %v203 = vld [vmem:[%s1 + $0x1f0] sm:$0xf]
  %v204 = vld [vmem:[%s1 + $0x1f4] sm:$0xf]
  %v205 = vld [vmem:[%s1 + $0x1f8] sm:$0xf]
  %v206 = vld [vmem:[%s1 + $0x1fc] sm:$0xf]
  %v207 = vld [vmem:[%s1 + $0x200] sm:$0xf]
  %v208 = vld [vmem:[%s1 + $0x204] sm:$0xf]
  %v209 = vld [vmem:[%s1 + $0x208] sm:$0xf]
  %v210 = vld [vmem:[%s1 + $0x20c] sm:$0xf]
  %v211 = vld [vmem:[%s1 + $0x210] sm:$0xf]
  %v212 = vld [vmem:[%s1 + $0x214] sm:$0xf]
  %v213 = vld [vmem:[%s1 + $0x218] sm:$0xf]
  %v214 = vld [vmem:[%s1 + $0x21c] sm:$0xf]
  %v215 = vld [vmem:[%s1 + $0x220] sm:$0xf]
  %v216 = vld [vmem:[%s1 + $0x224] sm:$0xf]
  %v217 = vld [vmem:[%s1 + $0x228] sm:$0xf]
  %v218 = vld [vmem:[%s1 + $0x22c] sm:$0xf]
  %v219 = vld [vmem:[%s1 + $0x230] sm:$0xf]
  %v220 = vld [vmem:[%s1 + $0x234] sm:$0xf]
  %v221 = vld [vmem:[%s1 + $0x238] sm:$0xf]
  %v222 = vld [vmem:[%s1 + $0x23c] sm:$0xf]
  %v223 = vld [vmem:[%s1 + $0x240] sm:$0xf]
  %v224 = vld [vmem:[%s1 + $0x244] sm:$0xf]
  %v225 = vld [vmem:[%s1 + $0x248] sm:$0xf]
  %v226 = vld [vmem:[%s1 + $0x24c] sm:$0xf]
  %v227 = vld [vmem:[%s1 + $0x250] sm:$0xf]
  %v228 = vld [vmem:[%s1 + $0x254] sm:$0xf]
  %v229 = vld [vmem:[%s1 + $0x258] sm:$0xf]
  %v230 = vld [vmem:[%s1 + $0x25c] sm:$0xf]
  %v231 = vld [vmem:[%s1 + $0x260] sm:$0xf]
  %v232 = vld [vmem:[%s1 + $0x264] sm:$0xf]
  %v233 = vld [vmem:[%s1 + $0x268] sm:$0xf]
  %v234 = vld [vmem:[%s1 + $0x26c] sm:$0xf]
  %v235 = vld [vmem:[%s1 + $0x270] sm:$0xf]
  %v236 = vld [vmem:[%s1 + $0x274] sm:$0xf]
  %v237 = vld [vmem:[%s1 + $0x278] sm:$0xf]
  %v238 = vld [vmem:[%s1 + $0x27c] sm:$0xf]
  %v239 = vld [vmem:[%s1 + $0x280] sm:$0xf]
  %v240 = vld [vmem:[%s1 + $0x284] sm:$0xf]
  %v241 = vld [vmem:[%s1 + $0x288] sm:$0xf]
  %v242 = vld [vmem:[%s1 + $0x28c] sm:$0xf]
  %v243 = vld [vmem:[%s1 + $0x290] sm:$0xf]
  %v244 = vld [vmem:[%s1 + $0x294] sm:$0xf]
  %v245 = vld [vmem:[%s1 + $0x298] sm:$0xf]
  %v246 = vld [vmem:[%s1 + $0x29c] sm:$0xf]
  %v247 = vld [vmem:[%s1 + $0x2a0] sm:$0xf]
  %v248 = vld [vmem:[%s1 + $0x2a4] sm:$0xf]
  %v249 = vld [vmem:[%s1 + $0x2a8] sm:$0xf]
  %v250 = vld [vmem:[%s1 + $0x2ac] sm:$0xf]
  %v251 = vld [vmem:[%s1 + $0x2b0] sm:$0xf]
  %v252 = vld [vmem:[%s1 + $0x2b4] sm:$0xf]
  %v253 = vld [vmem:[%s1 + $0x2b8] sm:$0xf]
  %v254 = vld [vmem:[%s1 + $0x2bc] sm:$0xf]
  %v255 = vld [vmem:[%s1 + $0x2c0] sm:$0xf]
  %v256 = vld [vmem:[%s1 + $0x2c4] sm:$0xf]
  %v257 = vld [vmem:[%s1 + $0x2c8] sm:$0xf]
  %v258 = vld [vmem:[%s1 + $0x2cc] sm:$0xf]
  %v259 = vld [vmem:[%s1 + $0x2d0] sm:$0xf]
  %v260 = vld [vmem:[%s1 + $0x2d4] sm:$0xf]
  %v261 = vld [vmem:[%s1 + $0x2d8] sm:$0xf]
  %v262 = vld [vmem:[%s1 + $0x2dc] sm:$0xf]
  %v263 = vld [vmem:[%s1 + $0x2e0] sm:$0xf]
  %v264 = vld [vmem:[%s1 + $0x2e4] sm:$0xf]
  %v265 = vld [vmem:[%s1 + $0x2e8] sm:$0xf]
  %v266 = vld [vmem:[%s1 + $0x2ec] sm:$0xf]
  %v267 = vld [vmem:[%s1 + $0x2f0] sm:$0xf]
  %v268 = vld [vmem:[%s1 + $0x2f4] sm:$0xf]
  %v269 = vld [vmem:[%s1 + $0x2f8] sm:$0xf]
  %v270 = vld [vmem:[%s1 + $0x2fc] sm:$0xf]
  %v271 = vld [vmem:[%s1 + $0x300] sm:$0xf]
  %v272 = vld [vmem:[%s1 + $0x304] sm:$0xf]
  %v273 = vld [vmem:[%s1 + $0x308] sm:$0xf]
  %v274 = vld [vmem:[%s1 + $0x30c] sm:$0xf]
  %v275 = vld [vmem:[%s1 + $0x310] sm:$0xf]
  %v276 = vld [vmem:[%s1 + $0x314] sm:$0xf]
  %v277 = vld [vmem:[%s1 + $0x318] sm:$0xf]
  %v278 = vld [vmem:[%s1 + $0x31c] sm:$0xf]
  %v279 = vld [vmem:[%s1 + $0x320] sm:$0xf]
  %v280 = vld [vmem:[%s1 + $0x324] sm:$0xf]
  %v281 = vld [vmem:[%s1 + $0x328] sm:$0xf]
  %v282 = vld [vmem:[%s1 + $0x32c] sm:$0xf]
  %v283 = vld [vmem:[%s1 + $0x330] sm:$0xf]
  %v284 = vld [vmem:[%s1 + $0x334] sm:$0xf]
  %v285 = vld [vmem:[%s1 + $0x338] sm:$0xf]
  %v286 = vld [vmem:[%s1 + $0x33c] sm:$0xf]
  %v287 = vld [vmem:[%s1 + $0x340] sm:$0xf]
  %v288 = vld [vmem:[%s1 + $0x344] sm:$0xf]
  %v289 = vld [vmem:[%s1 + $0x348] sm:$0xf]
  %v290 = vld [vmem:[%s1 + $0x34c] sm:$0xf]
  %v291 = vld [vmem:[%s1 + $0x350] sm:$0xf]
  %v292 = vld [vmem:[%s1 + $0x354] sm:$0xf]
  %v293 = vld [vmem:[%s1 + $0x358] sm:$0xf]
  %v294 = vld [vmem:[%s1 + $0x35c] sm:$0xf]
  %v295 = vld [vmem:[%s1 + $0x360] sm:$0xf]
  %v296 = vld [vmem:[%s1 + $0x364] sm:$0xf]
  %v297 = vld [vmem:[%s1 + $0x368] sm:$0xf]
  %v298 = vld [vmem:[%s1 + $0x36c] sm:$0xf]
  %v299 = vld [vmem:[%s1 + $0x370] sm:$0xf]
  %v300 = vld [vmem:[%s1 + $0x374] sm:$0xf]
  %v301 = vld [vmem:[%s1 + $0x378] sm:$0xf]
  %v302 = vld [vmem:[%s1 + $0x37c] sm:$0xf]
  %v303 = vld [vmem:[%s1 + $0x380] sm:$0xf]
  %v304 = vld [vmem:[%s1 + $0x384] sm:$0xf]
  %v305 = vld [vmem:[%s1 + $0x388] sm:$0xf]
  %v306 = vld [vmem:[%s1 + $0x38c] sm:$0xf]
  %v307 = vld [vmem:[%s1 + $0x390] sm:$0xf]
  %v308 = vld [vmem:[%s1 + $0x394] sm:$0xf]
  %v309 = vld [vmem:[%s1 + $0x398] sm:$0xf]
  %v310 = vld [vmem:[%s1 + $0x39c] sm:$0xf]
  %v311 = vld [vmem:[%s1 + $0x3a0] sm:$0xf]
  %v312 = vld [vmem:[%s1 + $0x3a4] sm:$0xf]
  %v313 = vld [vmem:[%s1 + $0x3a8] sm:$0xf]
  %v314 = vld [vmem:[%s1 + $0x3ac] sm:$0xf]
  %v315 = vld [vmem:[%s1 + $0x3b0] sm:$0xf]
  %v316 = vld [vmem:[%s1 + $0x3b4] sm:$0xf]
  %v317 = vld [vmem:[%s1 + $0x3b8] sm:$0xf]
  %v318 = vld [vmem:[%s1 + $0x3bc] sm:$0xf]
  %v319 = vld [vmem:[%s1 + $0x3c0] sm:$0xf]
  %v320 = vld [vmem:[%s1 + $0x3c4] sm:$0xf]
  %v321 = vld [vmem:[%s1 + $0x3c8] sm:$0xf]
  %v322 = vld [vmem:[%s1 + $0x3cc] sm:$0xf]
  %v323 = vld [vmem:[%s1 + $0x3d0] sm:$0xf]
  %v324 = vld [vmem:[%s1 + $0x3d4] sm:$0xf]
  %v325 = vld [vmem:[%s1 + $0x3d8] sm:$0xf]
  %v326 = vld [vmem:[%s1 + $0x3dc] sm:$0xf]
  %v327 = vld [vmem:[%s1 + $0x3e0] sm:$0xf]
  %v328 = vld [vmem:[%s1 + $0x3e4] sm:$0xf]
  %v329 = vld [vmem:[%s1 + $0x3e8] sm:$0xf]
  %v330 = vld [vmem:[%s1 + $0x3ec] sm:$0xf]
  %v331 = vld [vmem:[%s1 + $0x3f0] sm:$0xf]
  %v332 = vld [vmem:[%s1 + $0x3f4] sm:$0xf]
  %v333 = vld [vmem:[%s1 + $0x3f8] sm:$0xf]
  %v334 = vld [vmem:[%s1 + $0x3fc] sm:$0xf]
  %v335 = vld [vmem:[%s1 + $0x400] sm:$0xf]
  %v336 = vld [vmem:[%s1 + $0x404] sm:$0xf]
  %v337 = vld [vmem:[%s1 + $0x408] sm:$0xf]
  %v338 = vld [vmem:[%s1 + $0x40c] sm:$0xf]
  %v339 = vld [vmem:[%s1 + $0x410] sm:$0xf]
  %v340 = vld [vmem:[%s1 + $0x414] sm:$0xf]
  %v341 = vld [vmem:[%s1 + $0x418] sm:$0xf]
  %v342 = vld [vmem:[%s1 + $0x41c] sm:$0xf]
  %v343 = vld [vmem:[%s1 + $0x420] sm:$0xf]
  %v344 = vld [vmem:[%s1 + $0x424] sm:$0xf]
  %v345 = vld [vmem:[%s1 + $0x428] sm:$0xf]
  %v346 = vld [vmem:[%s1 + $0x42c] sm:$0xf]
  %v347 = vld [vmem:[%s1 + $0x430] sm:$0xf]
  %v348 = vld [vmem:[%s1 + $0x434] sm:$0xf]
  %v349 = vld [vmem:[%s1 + $0x438] sm:$0xf]
  %v350 = vld [vmem:[%s1 + $0x43c] sm:$0xf]
  %v351 = vld [vmem:[%s1 + $0x440] sm:$0xf]
  %v352 = vld [vmem:[%s1 + $0x444] sm:$0xf]
  %v353 = vld [vmem:[%s1 + $0x448] sm:$0xf]
  %v354 = vld [vmem:[%s1 + $0x44c] sm:$0xf]
  %v355 = vld [vmem:[%s1 + $0x450] sm:$0xf]
  %v356 = vld [vmem:[%s1 + $0x454] sm:$0xf]
  %v357 = vld [vmem:[%s1 + $0x458] sm:$0xf]
  %v358 = vld [vmem:[%s1 + $0x45c] sm:$0xf]
  %v359 = vld [vmem:[%s1 + $0x460] sm:$0xf]
  %v360 = vld [vmem:[%s1 + $0x464] sm:$0xf]
  %v361 = vld [vmem:[%s1 + $0x468] sm:$0xf]
  %v362 = vld [vmem:[%s1 + $0x46c] sm:$0xf]
  %v363 = vld [vmem:[%s1 + $0x470] sm:$0xf]
  %v364 = vld [vmem:[%s1 + $0x474] sm:$0xf]
  %v365 = vld [vmem:[%s1 + $0x478] sm:$0xf]
  %v366 = vld [vmem:[%s1 + $0x47c] sm:$0xf]
  %v367 = vld [vmem:[%s1 + $0x480] sm:$0xf]
  %v368 = vld [vmem:[%s1 + $0x484] sm:$0xf]
  %v369 = vld [vmem:[%s1 + $0x488] sm:$0xf]
  %v370 = vld [vmem:[%s1 + $0x48c] sm:$0xf]
  %v371 = vld [vmem:[%s1 + $0x490] sm:$0xf]
  %v372 = vld [vmem:[%s1 + $0x494] sm:$0xf]
  %v373 = vld [vmem:[%s1 + $0x498] sm:$0xf]
  %v374 = vld [vmem:[%s1 + $0x49c] sm:$0xf]
  %v375 = vld [vmem:[%s1 + $0x4a0] sm:$0xf]
  %v376 = vld [vmem:[%s1 + $0x4a4] sm:$0xf]
  %v377 = vld [vmem:[%s1 + $0x4a8] sm:$0xf]
  %v378 = vld [vmem:[%s1 + $0x4ac] sm:$0xf]
  %v379 = vld [vmem:[%s1 + $0x4b0] sm:$0xf]
  %v380 = vld [vmem:[%s1 + $0x4b4] sm:$0xf]
  %v381 = vld [vmem:[%s1 + $0x4b8] sm:$0xf]
  %v382 = vld [vmem:[%s1 + $0x4bc] sm:$0xf]
  %v383 = vld [vmem:[%s1 + $0x4c0] sm:$0xf]
  %v384 = vld [vmem:[%s1 + $0x4c4] sm:$0xf]
  %v385 = vld [vmem:[%s1 + $0x4c8] sm:$0xf]
  %v386 = vld [vmem:[%s1 + $0x4cc] sm:$0xf]
  %v387 = vld [vmem:[%s1 + $0x4d0] sm:$0xf]
  %v388 = vld [vmem:[%s1 + $0x4d4] sm:$0xf]
  %v389 = vld [vmem:[%s1 + $0x4d8] sm:$0xf]
  %v390 = vld [vmem:[%s1 + $0x4dc] sm:$0xf]
  %v391 = vld [vmem:[%s1 + $0x4e0] sm:$0xf]
  %v392 = vld [vmem:[%s1 + $0x4e4] sm:$0xf]
  %v393 = vld [vmem:[%s1 + $0x4e8] sm:$0xf]
  %v394 = vld [vmem:[%s1 + $0x4ec] sm:$0xf]
  %v395 = vld [vmem:[%s1 + $0x4f0] sm:$0xf]
  %v396 = vld [vmem:[%s1 + $0x4f4] sm:$0xf]
  %v397 = vld [vmem:[%s1 + $0x4f8] sm:$0xf]
  %v398 = vld [vmem:[%s1 + $0x4fc] sm:$0xf]
  %v399 = vld [vmem:[%s1 + $0x500] sm:$0xf]
  %v400 = vld [vmem:[%s1 + $0x504] sm:$0xf]
  %v401 = vld [vmem:[%s1 + $0x508] sm:$0xf]
  %v402 = vld [vmem:[%s1 + $0x50c] sm:$0xf]
  %v403 = vld [vmem:[%s1 + $0x510] sm:$0xf]
  %v404 = vld [vmem:[%s1 + $0x514] sm:$0xf]
  %v405 = vld [vmem:[%s1 + $0x518] sm:$0xf]
  %v406 = vld [vmem:[%s1 + $0x51c] sm:$0xf]
  %v407 = vld [vmem:[%s1 + $0x520] sm:$0xf]
  %v408 = vld [vmem:[%s1 + $0x524] sm:$0xf]
  %v409 = vld [vmem:[%s1 + $0x528] sm:$0xf]
  %v410 = vld [vmem:[%s1 + $0x52c] sm:$0xf]
  %v411 = vld [vmem:[%s1 + $0x530] sm:$0xf]
  %v412 = vld [vmem:[%s1 + $0x534] sm:$0xf]
  %v413 = vld [vmem:[%s1 + $0x538] sm:$0xf]
  %v414 = vld [vmem:[%s1 + $0x53c] sm:$0xf]
  %v415 = vld [vmem:[%s1 + $0x540] sm:$0xf]
  %v416 = vld [vmem:[%s1 + $0x544] sm:$0xf]
  %v417 = vld [vmem:[%s1 + $0x548] sm:$0xf]
  %v418 = vld [vmem:[%s1 + $0x54c] sm:$0xf]
  %v419 = vld [vmem:[%s1 + $0x550] sm:$0xf]
  %v420 = vld [vmem:[%s1 + $0x554] sm:$0xf]
  %v421 = vld [vmem:[%s1 + $0x558] sm:$0xf]
  %v422 = vld [vmem:[%s1 + $0x55c] sm:$0xf]
  %v423 = vld [vmem:[%s1 + $0x560] sm:$0xf]
  %v424 = vld [vmem:[%s1 + $0x564] sm:$0xf]
  %v425 = vld [vmem:[%s1 + $0x568] sm:$0xf]
  %v426 = vld [vmem:[%s1 + $0x56c] sm:$0xf]
  %v427 = vld [vmem:[%s1 + $0x570] sm:$0xf]
  %v428 = vld [vmem:[%s1 + $0x574] sm:$0xf]
  %v429 = vld [vmem:[%s1 + $0x578] sm:$0xf]
  %v430 = vld [vmem:[%s1 + $0x57c] sm:$0xf]
  %v431 = vld [vmem:[%s1 + $0x580] sm:$0xf]
  %v432 = vld [vmem:[%s1 + $0x584] sm:$0xf]
  %v433 = vld [vmem:[%s1 + $0x588] sm:$0xf]
  %v434 = vld [vmem:[%s1 + $0x58c] sm:$0xf]
  %v435 = vld [vmem:[%s1 + $0x590] sm:$0xf]
  %v436 = vld [vmem:[%s1 + $0x594] sm:$0xf]
  %v437 = vld [vmem:[%s1 + $0x598] sm:$0xf]
  %v438 = vld [vmem:[%s1 + $0x59c] sm:$0xf]
  %v439 = vld [vmem:[%s1 + $0x5a0] sm:$0xf]
  %v440 = vld [vmem:[%s1 + $0x5a4] sm:$0xf]
  %v441 = vld [vmem:[%s1 + $0x5a8] sm:$0xf]
  %v442 = vld [vmem:[%s1 + $0x5ac] sm:$0xf]
  %v443 = vld [vmem:[%s1 + $0x5b0] sm:$0xf]
  %v444 = vld [vmem:[%s1 + $0x5b4] sm:$0xf]
  %v445 = vld [vmem:[%s1 + $0x5b8] sm:$0xf]
  %v446 = vld [vmem:[%s1 + $0x5bc] sm:$0xf]
  %v447 = vld [vmem:[%s1 + $0x5c0] sm:$0xf]
  %v448 = vld [vmem:[%s1 + $0x5c4] sm:$0xf]
  %v449 = vld [vmem:[%s1 + $0x5c8] sm:$0xf]
  %v450 = vld [vmem:[%s1 + $0x5cc] sm:$0xf]
  %v451 = vld [vmem:[%s1 + $0x5d0] sm:$0xf]
  %v452 = vld [vmem:[%s1 + $0x5d4] sm:$0xf]
  %v453 = vld [vmem:[%s1 + $0x5d8] sm:$0xf]
  %v454 = vld [vmem:[%s1 + $0x5dc] sm:$0xf]
  %v455 = vld [vmem:[%s1 + $0x5e0] sm:$0xf]
  %v456 = vld [vmem:[%s1 + $0x5e4] sm:$0xf]
  %v457 = vld [vmem:[%s1 + $0x5e8] sm:$0xf]
  %v458 = vld [vmem:[%s1 + $0x5ec] sm:$0xf]
  %v459 = vld [vmem:[%s1 + $0x5f0] sm:$0xf]
  %v460 = vld [vmem:[%s1 + $0x5f4] sm:$0xf]
  %v461 = vld [vmem:[%s1 + $0x5f8] sm:$0xf]
  %v462 = vld [vmem:[%s1 + $0x5fc] sm:$0xf]
  %v463 = vld [vmem:[%s1 + $0x600] sm:$0xf]
  %v464 = vld [vmem:[%s1 + $0x604] sm:$0xf]
  %v465 = vld [vmem:[%s1 + $0x608] sm:$0xf]
  %v466 = vld [vmem:[%s1 + $0x60c] sm:$0xf]
  %v467 = vld [vmem:[%s1 + $0x610] sm:$0xf]
  %v468 = vld [vmem:[%s1 + $0x614] sm:$0xf]
  %v469 = vld [vmem:[%s1 + $0x618] sm:$0xf]
  %v470 = vld [vmem:[%s1 + $0x61c] sm:$0xf]
  %v471 = vld [vmem:[%s1 + $0x620] sm:$0xf]
  %v472 = vld [vmem:[%s1 + $0x624] sm:$0xf]
  %v473 = vld [vmem:[%s1 + $0x628] sm:$0xf]
  %v474 = vld [vmem:[%s1 + $0x62c] sm:$0xf]
  %v475 = vld [vmem:[%s1 + $0x630] sm:$0xf]
  %v476 = vld [vmem:[%s1 + $0x634] sm:$0xf]
  %v477 = vld [vmem:[%s1 + $0x638] sm:$0xf]
  %v478 = vld [vmem:[%s1 + $0x63c] sm:$0xf]
  %v479 = vld [vmem:[%s2] sm:$0x1]
  %v481 = vlaneseq
  %v482 = vshrl.u32 %v481, 7
  %v483 = vsub.s32 0, %v482
  %v484 = vrot.slane %v479, %v483
  %v538 = vunpack.c.l.b16 %v27
  %v539 = vunpack.c.h.b16 %v27
  %v540 = vunpack.c.l.b16 %v28
  %v541 = vunpack.c.h.b16 %v28
  %v542 = vunpack.c.l.b16 %v29
  %v543 = vunpack.c.h.b16 %v29
  %v544 = vunpack.c.l.b16 %v30
  %v545 = vunpack.c.h.b16 %v30
  %v546 = vunpack.c.l.b16 %v31
  %v547 = vunpack.c.h.b16 %v31
  %v548 = vunpack.c.l.b16 %v32
  %v549 = vunpack.c.h.b16 %v32
  %v550 = vunpack.c.l.b16 %v33
  %v551 = vunpack.c.h.b16 %v33
  %v552 = vunpack.c.l.b16 %v34
  %v553 = vunpack.c.h.b16 %v34
  %v554 = vunpack.c.l.b16 %v35
  %v555 = vunpack.c.h.b16 %v35
  %v556 = vunpack.c.l.b16 %v36
  %v557 = vunpack.c.h.b16 %v36
  %v558 = vunpack.c.l.b16 %v37
  %v559 = vunpack.c.h.b16 %v37
  %v560 = vunpack.c.l.b16 %v38
  %v561 = vunpack.c.h.b16 %v38
  %v562 = vunpack.c.l.b16 %v39
  %v563 = vunpack.c.l.b16 %v40
  %v564 = vunpack.c.h.b16 %v40
  %v565 = vunpack.c.l.b16 %v41
  %v566 = vunpack.c.h.b16 %v41
  %v567 = vunpack.c.l.b16 %v42
  %v568 = vunpack.c.h.b16 %v42
  %v569 = vunpack.c.l.b16 %v43
  %v570 = vunpack.c.h.b16 %v43
  %v571 = vunpack.c.l.b16 %v44
  %v572 = vunpack.c.h.b16 %v44
  %v573 = vunpack.c.l.b16 %v45
  %v574 = vunpack.c.h.b16 %v45
  %v575 = vunpack.c.l.b16 %v46
  %v576 = vunpack.c.h.b16 %v46
  %v577 = vunpack.c.l.b16 %v47
  %v578 = vunpack.c.h.b16 %v47
  %v579 = vunpack.c.l.b16 %v48
  %v580 = vunpack.c.h.b16 %v48
  %v581 = vunpack.c.l.b16 %v49
  %v582 = vunpack.c.h.b16 %v49
  %v583 = vunpack.c.l.b16 %v50
  %v584 = vunpack.c.h.b16 %v50
  %v585 = vunpack.c.l.b16 %v51
  %v586 = vunpack.c.h.b16 %v51
  %v587 = vunpack.c.l.b16 %v52
  %v588 = vunpack.c.l.b16 %v53
  %v589 = vunpack.c.h.b16 %v53
  %v590 = vunpack.c.l.b16 %v54
  %v591 = vunpack.c.h.b16 %v54
  %v592 = vunpack.c.l.b16 %v55
  %v593 = vunpack.c.h.b16 %v55
  %v594 = vunpack.c.l.b16 %v56
  %v595 = vunpack.c.h.b16 %v56
  %v596 = vunpack.c.l.b16 %v57
  %v597 = vunpack.c.h.b16 %v57
  %v598 = vunpack.c.l.b16 %v58
  %v599 = vunpack.c.h.b16 %v58
  %v600 = vunpack.c.l.b16 %v59
  %v601 = vunpack.c.h.b16 %v59
  %v602 = vunpack.c.l.b16 %v60
  %v603 = vunpack.c.h.b16 %v60
  %v604 = vunpack.c.l.b16 %v61
  %v605 = vunpack.c.h.b16 %v61
  %v606 = vunpack.c.l.b16 %v62
  %v607 = vunpack.c.h.b16 %v62
  %v608 = vunpack.c.l.b16 %v63
  %v609 = vunpack.c.h.b16 %v63
  %v610 = vunpack.c.l.b16 %v64
  %v611 = vunpack.c.h.b16 %v64
  %v612 = vunpack.c.l.b16 %v65
  %v613 = vunpack.c.l.b16 %v66
  %v614 = vunpack.c.h.b16 %v66
  %v615 = vunpack.c.l.b16 %v67
  %v616 = vunpack.c.h.b16 %v67
  %v617 = vunpack.c.l.b16 %v68
  %v618 = vunpack.c.h.b16 %v68
  %v619 = vunpack.c.l.b16 %v69
  %v620 = vunpack.c.h.b16 %v69
  %v621 = vunpack.c.l.b16 %v70
  %v622 = vunpack.c.h.b16 %v70
  %v623 = vunpack.c.l.b16 %v71
  %v624 = vunpack.c.h.b16 %v71
  %v625 = vunpack.c.l.b16 %v72
  %v626 = vunpack.c.h.b16 %v72
  %v627 = vunpack.c.l.b16 %v73
  %v628 = vunpack.c.h.b16 %v73
  %v629 = vunpack.c.l.b16 %v74
  %v630 = vunpack.c.h.b16 %v74
  %v631 = vunpack.c.l.b16 %v75
  %v632 = vunpack.c.h.b16 %v75
  %v633 = vunpack.c.l.b16 %v76
  %v634 = vunpack.c.h.b16 %v76
  %v635 = vunpack.c.l.b16 %v77
  %v636 = vunpack.c.h.b16 %v77
  %v637 = vunpack.c.l.b16 %v78
  %v638 = vpack.c.b16 %v563, %v538
  %v639 = vpack.c.b16 %v564, %v539
  %v640 = vpack.c.b16 %v565, %v540
  %v641 = vpack.c.b16 %v566, %v541
  %v642 = vpack.c.b16 %v567, %v542
  %v643 = vpack.c.b16 %v568, %v543
  %v644 = vpack.c.b16 %v569, %v544
  %v645 = vpack.c.b16 %v570, %v545
  %v646 = vpack.c.b16 %v571, %v546
  %v647 = vpack.c.b16 %v572, %v547
  %v648 = vpack.c.b16 %v573, %v548
  %v649 = vpack.c.b16 %v574, %v549
  %v650 = vpack.c.b16 %v575, %v550
  %v651 = vpack.c.b16 %v576, %v551
  %v652 = vpack.c.b16 %v577, %v552
  %v653 = vpack.c.b16 %v578, %v553
  %v654 = vpack.c.b16 %v579, %v554
  %v655 = vpack.c.b16 %v580, %v555
  %v656 = vpack.c.b16 %v581, %v556
  %v657 = vpack.c.b16 %v582, %v557
  %v658 = vpack.c.b16 %v583, %v558
  %v659 = vpack.c.b16 %v584, %v559
  %v660 = vpack.c.b16 %v585, %v560
  %v661 = vpack.c.b16 %v586, %v561
  %v662 = vpack.c.b16 %v587, %v562
  %v663 = vpack.c.b16 %v613, %v588
  %v664 = vpack.c.b16 %v614, %v589
  %v665 = vpack.c.b16 %v615, %v590
  %v666 = vpack.c.b16 %v616, %v591
  %v667 = vpack.c.b16 %v617, %v592
  %v668 = vpack.c.b16 %v618, %v593
  %v669 = vpack.c.b16 %v619, %v594
  %v670 = vpack.c.b16 %v620, %v595
  %v671 = vpack.c.b16 %v621, %v596
  %v672 = vpack.c.b16 %v622, %v597
  %v673 = vpack.c.b16 %v623, %v598
  %v674 = vpack.c.b16 %v624, %v599
  %v675 = vpack.c.b16 %v625, %v600
  %v676 = vpack.c.b16 %v626, %v601
  %v677 = vpack.c.b16 %v627, %v602
  %v678 = vpack.c.b16 %v628, %v603
  %v679 = vpack.c.b16 %v629, %v604
  %v680 = vpack.c.b16 %v630, %v605
  %v681 = vpack.c.b16 %v631, %v606
  %v682 = vpack.c.b16 %v632, %v607
  %v683 = vpack.c.b16 %v633, %v608
  %v684 = vpack.c.b16 %v634, %v609
  %v685 = vpack.c.b16 %v635, %v610
  %v686 = vpack.c.b16 %v636, %v611
  %v687 = vpack.c.b16 %v637, %v612
  %v1138 = vunpack.c.l.b16 %v79
  %v1139 = vunpack.c.l.b16 %v80
  %v1140 = vunpack.c.l.b16 %v81
  %v1141 = vunpack.c.l.b16 %v82
  %v1142 = vunpack.c.l.b16 %v83
  %v1143 = vunpack.c.l.b16 %v84
  %v1144 = vunpack.c.l.b16 %v85
  %v1145 = vunpack.c.l.b16 %v86
  %v1146 = vunpack.c.l.b16 %v87
  %v1147 = vunpack.c.l.b16 %v88
  %v1148 = vunpack.c.l.b16 %v89
  %v1149 = vunpack.c.l.b16 %v90
  %v1150 = vunpack.c.l.b16 %v91
  %v1151 = vunpack.c.l.b16 %v92
  %v1152 = vunpack.c.l.b16 %v93
  %v1153 = vunpack.c.l.b16 %v94
  %v1154 = vunpack.c.l.b16 %v95
  %v1155 = vunpack.c.l.b16 %v96
  %v1156 = vunpack.c.l.b16 %v97
  %v1157 = vunpack.c.l.b16 %v98
  %v1158 = vunpack.c.l.b16 %v99
  %v1159 = vunpack.c.l.b16 %v100
  %v1160 = vunpack.c.l.b16 %v101
  %v1161 = vunpack.c.l.b16 %v102
  %v1162 = vunpack.c.l.b16 %v103
  %v1163 = vunpack.c.l.b16 %v104
  %v1164 = vunpack.c.l.b16 %v105
  %v1165 = vunpack.c.l.b16 %v106
  %v1166 = vunpack.c.l.b16 %v107
  %v1167 = vunpack.c.l.b16 %v108
  %v1168 = vunpack.c.l.b16 %v109
  %v1169 = vunpack.c.l.b16 %v110
  %v1170 = vunpack.c.l.b16 %v111
  %v1171 = vunpack.c.l.b16 %v112
  %v1172 = vunpack.c.l.b16 %v113
  %v1173 = vunpack.c.l.b16 %v114
  %v1174 = vunpack.c.l.b16 %v115
  %v1175 = vunpack.c.l.b16 %v116
  %v1176 = vunpack.c.l.b16 %v117
  %v1177 = vunpack.c.l.b16 %v118
  %v1178 = vunpack.c.l.b16 %v119
  %v1179 = vunpack.c.l.b16 %v120
  %v1180 = vunpack.c.l.b16 %v121
  %v1181 = vunpack.c.l.b16 %v122
  %v1182 = vunpack.c.l.b16 %v123
  %v1183 = vunpack.c.l.b16 %v124
  %v1184 = vunpack.c.l.b16 %v125
  %v1185 = vunpack.c.l.b16 %v126
  %v1186 = vunpack.c.l.b16 %v127
  %v1187 = vunpack.c.l.b16 %v128
  %v1188 = vunpack.c.l.b16 %v129
  %v1189 = vunpack.c.l.b16 %v130
  %v1190 = vunpack.c.l.b16 %v131
  %v1191 = vunpack.c.l.b16 %v132
  %v1192 = vunpack.c.l.b16 %v133
  %v1193 = vunpack.c.l.b16 %v134
  %v1194 = vunpack.c.l.b16 %v135
  %v1195 = vunpack.c.l.b16 %v136
  %v1196 = vunpack.c.l.b16 %v137
  %v1197 = vunpack.c.l.b16 %v138
  %v1198 = vunpack.c.l.b16 %v139
  %v1199 = vunpack.c.l.b16 %v140
  %v1200 = vunpack.c.l.b16 %v141
  %v1201 = vunpack.c.l.b16 %v142
  %v1202 = vunpack.c.l.b16 %v143
  %v1203 = vunpack.c.l.b16 %v144
  %v1204 = vunpack.c.l.b16 %v145
  %v1205 = vunpack.c.l.b16 %v146
  %v1206 = vunpack.c.l.b16 %v147
  %v1207 = vunpack.c.l.b16 %v148
  %v1208 = vunpack.c.l.b16 %v149
  %v1209 = vunpack.c.l.b16 %v150
  %v1210 = vunpack.c.l.b16 %v151
  %v1211 = vunpack.c.l.b16 %v152
  %v1212 = vunpack.c.l.b16 %v153
  %v1213 = vunpack.c.l.b16 %v154
  %v1214 = vunpack.c.l.b16 %v155
  %v1215 = vunpack.c.l.b16 %v156
  %v1216 = vunpack.c.l.b16 %v157
  %v1217 = vunpack.c.l.b16 %v158
  %v1218 = vunpack.c.l.b16 %v159
  %v1219 = vunpack.c.l.b16 %v160
  %v1220 = vunpack.c.l.b16 %v161
  %v1221 = vunpack.c.l.b16 %v162
  %v1222 = vunpack.c.l.b16 %v163
  %v1223 = vunpack.c.l.b16 %v164
  %v1224 = vunpack.c.l.b16 %v165
  %v1225 = vunpack.c.l.b16 %v166
  %v1226 = vunpack.c.l.b16 %v167
  %v1227 = vunpack.c.l.b16 %v168
  %v1228 = vunpack.c.l.b16 %v169
  %v1229 = vunpack.c.l.b16 %v170
  %v1230 = vunpack.c.l.b16 %v171
  %v1231 = vunpack.c.l.b16 %v172
  %v1232 = vunpack.c.l.b16 %v173
  %v1233 = vunpack.c.l.b16 %v174
  %v1234 = vunpack.c.l.b16 %v175
  %v1235 = vunpack.c.l.b16 %v176
  %v1236 = vunpack.c.l.b16 %v177
  %v1237 = vunpack.c.l.b16 %v178
  %v1238 = vunpack.c.l.b16 %v179
  %v1239 = vunpack.c.l.b16 %v180
  %v1240 = vunpack.c.l.b16 %v181
  %v1241 = vunpack.c.l.b16 %v182
  %v1242 = vunpack.c.l.b16 %v183
  %v1243 = vunpack.c.l.b16 %v184
  %v1244 = vunpack.c.l.b16 %v185
  %v1245 = vunpack.c.l.b16 %v186
  %v1246 = vunpack.c.l.b16 %v187
  %v1247 = vunpack.c.l.b16 %v188
  %v1248 = vunpack.c.l.b16 %v189
  %v1249 = vunpack.c.l.b16 %v190
  %v1250 = vunpack.c.l.b16 %v191
  %v1251 = vunpack.c.l.b16 %v192
  %v1252 = vunpack.c.l.b16 %v193
  %v1253 = vunpack.c.l.b16 %v194
  %v1254 = vunpack.c.l.b16 %v195
  %v1255 = vunpack.c.l.b16 %v196
  %v1256 = vunpack.c.l.b16 %v197
  %v1257 = vunpack.c.l.b16 %v198
  %v1258 = vunpack.c.l.b16 %v199
  %v1259 = vunpack.c.l.b16 %v200
  %v1260 = vunpack.c.l.b16 %v201
  %v1261 = vunpack.c.l.b16 %v202
  %v1262 = vunpack.c.l.b16 %v203
  %v1263 = vunpack.c.l.b16 %v204
  %v1264 = vunpack.c.l.b16 %v205
  %v1265 = vunpack.c.l.b16 %v206
  %v1266 = vunpack.c.l.b16 %v207
  %v1267 = vunpack.c.l.b16 %v208
  %v1268 = vunpack.c.l.b16 %v209
  %v1269 = vunpack.c.l.b16 %v210
  %v1270 = vunpack.c.l.b16 %v211
  %v1271 = vunpack.c.l.b16 %v212
  %v1272 = vunpack.c.l.b16 %v213
  %v1273 = vunpack.c.l.b16 %v214
  %v1274 = vunpack.c.l.b16 %v215
  %v1275 = vunpack.c.l.b16 %v216
  %v1276 = vunpack.c.l.b16 %v217
  %v1277 = vunpack.c.l.b16 %v218
  %v1278 = vunpack.c.l.b16 %v219
  %v1279 = vunpack.c.l.b16 %v220
  %v1280 = vunpack.c.l.b16 %v221
  %v1281 = vunpack.c.l.b16 %v222
  %v1282 = vunpack.c.l.b16 %v223
  %v1283 = vunpack.c.l.b16 %v224
  %v1284 = vunpack.c.l.b16 %v225
  %v1285 = vunpack.c.l.b16 %v226
  %v1286 = vunpack.c.l.b16 %v227
  %v1287 = vunpack.c.l.b16 %v228
  %v1288 = vunpack.c.l.b16 %v229
  %v1289 = vunpack.c.l.b16 %v230
  %v1290 = vunpack.c.l.b16 %v231
  %v1291 = vunpack.c.l.b16 %v232
  %v1292 = vunpack.c.l.b16 %v233
  %v1293 = vunpack.c.l.b16 %v234
  %v1294 = vunpack.c.l.b16 %v235
  %v1295 = vunpack.c.l.b16 %v236
  %v1296 = vunpack.c.l.b16 %v237
  %v1297 = vunpack.c.l.b16 %v238
  %v1298 = vunpack.c.l.b16 %v239
  %v1299 = vunpack.c.l.b16 %v240
  %v1300 = vunpack.c.l.b16 %v241
  %v1301 = vunpack.c.l.b16 %v242
  %v1302 = vunpack.c.l.b16 %v243
  %v1303 = vunpack.c.l.b16 %v244
  %v1304 = vunpack.c.l.b16 %v245
  %v1305 = vunpack.c.l.b16 %v246
  %v1306 = vunpack.c.l.b16 %v247
  %v1307 = vunpack.c.l.b16 %v248
  %v1308 = vunpack.c.l.b16 %v249
  %v1309 = vunpack.c.l.b16 %v250
  %v1310 = vunpack.c.l.b16 %v251
  %v1311 = vunpack.c.l.b16 %v252
  %v1312 = vunpack.c.l.b16 %v253
  %v1313 = vunpack.c.l.b16 %v254
  %v1314 = vunpack.c.l.b16 %v255
  %v1315 = vunpack.c.l.b16 %v256
  %v1316 = vunpack.c.l.b16 %v257
  %v1317 = vunpack.c.l.b16 %v258
  %v1318 = vunpack.c.l.b16 %v259
  %v1319 = vunpack.c.l.b16 %v260
  %v1320 = vunpack.c.l.b16 %v261
  %v1321 = vunpack.c.l.b16 %v262
  %v1322 = vunpack.c.l.b16 %v263
  %v1323 = vunpack.c.l.b16 %v264
  %v1324 = vunpack.c.l.b16 %v265
  %v1325 = vunpack.c.l.b16 %v266
  %v1326 = vunpack.c.l.b16 %v267
  %v1327 = vunpack.c.l.b16 %v268
  %v1328 = vunpack.c.l.b16 %v269
  %v1329 = vunpack.c.l.b16 %v270
  %v1330 = vunpack.c.l.b16 %v271
  %v1331 = vunpack.c.l.b16 %v272
  %v1332 = vunpack.c.l.b16 %v273
  %v1333 = vunpack.c.l.b16 %v274
  %v1334 = vunpack.c.l.b16 %v275
  %v1335 = vunpack.c.l.b16 %v276
  %v1336 = vunpack.c.l.b16 %v277
  %v1337 = vunpack.c.l.b16 %v278
  %v1338 = vunpack.c.l.b16 %v279
  %v1339 = vunpack.c.l.b16 %v280
  %v1340 = vunpack.c.l.b16 %v281
  %v1341 = vunpack.c.l.b16 %v282
  %v1342 = vunpack.c.l.b16 %v283
  %v1343 = vunpack.c.l.b16 %v284
  %v1344 = vunpack.c.l.b16 %v285
  %v1345 = vunpack.c.l.b16 %v286
  %v1346 = vunpack.c.l.b16 %v287
  %v1347 = vunpack.c.l.b16 %v288
  %v1348 = vunpack.c.l.b16 %v289
  %v1349 = vunpack.c.l.b16 %v290
  %v1350 = vunpack.c.l.b16 %v291
  %v1351 = vunpack.c.l.b16 %v292
  %v1352 = vunpack.c.l.b16 %v293
  %v1353 = vunpack.c.l.b16 %v294
  %v1354 = vunpack.c.l.b16 %v295
  %v1355 = vunpack.c.l.b16 %v296
  %v1356 = vunpack.c.l.b16 %v297
  %v1357 = vunpack.c.l.b16 %v298
  %v1358 = vunpack.c.l.b16 %v299
  %v1359 = vunpack.c.l.b16 %v300
  %v1360 = vunpack.c.l.b16 %v301
  %v1361 = vunpack.c.l.b16 %v302
  %v1362 = vunpack.c.l.b16 %v303
  %v1363 = vunpack.c.l.b16 %v304
  %v1364 = vunpack.c.l.b16 %v305
  %v1365 = vunpack.c.l.b16 %v306
  %v1366 = vunpack.c.l.b16 %v307
  %v1367 = vunpack.c.l.b16 %v308
  %v1368 = vunpack.c.l.b16 %v309
  %v1369 = vunpack.c.l.b16 %v310
  %v1370 = vunpack.c.l.b16 %v311
  %v1371 = vunpack.c.l.b16 %v312
  %v1372 = vunpack.c.l.b16 %v313
  %v1373 = vunpack.c.l.b16 %v314
  %v1374 = vunpack.c.l.b16 %v315
  %v1375 = vunpack.c.l.b16 %v316
  %v1376 = vunpack.c.l.b16 %v317
  %v1377 = vunpack.c.l.b16 %v318
  %v1378 = vunpack.c.l.b16 %v319
  %v1379 = vunpack.c.l.b16 %v320
  %v1380 = vunpack.c.l.b16 %v321
  %v1381 = vunpack.c.l.b16 %v322
  %v1382 = vunpack.c.l.b16 %v323
  %v1383 = vunpack.c.l.b16 %v324
  %v1384 = vunpack.c.l.b16 %v325
  %v1385 = vunpack.c.l.b16 %v326
  %v1386 = vunpack.c.l.b16 %v327
  %v1387 = vunpack.c.l.b16 %v328
  %v1388 = vunpack.c.l.b16 %v329
  %v1389 = vunpack.c.l.b16 %v330
  %v1390 = vunpack.c.l.b16 %v331
  %v1391 = vunpack.c.l.b16 %v332
  %v1392 = vunpack.c.l.b16 %v333
  %v1393 = vunpack.c.l.b16 %v334
  %v1394 = vunpack.c.l.b16 %v335
  %v1395 = vunpack.c.l.b16 %v336
  %v1396 = vunpack.c.l.b16 %v337
  %v1397 = vunpack.c.l.b16 %v338
  %v1398 = vunpack.c.l.b16 %v339
  %v1399 = vunpack.c.l.b16 %v340
  %v1400 = vunpack.c.l.b16 %v341
  %v1401 = vunpack.c.l.b16 %v342
  %v1402 = vunpack.c.l.b16 %v343
  %v1403 = vunpack.c.l.b16 %v344
  %v1404 = vunpack.c.l.b16 %v345
  %v1405 = vunpack.c.l.b16 %v346
  %v1406 = vunpack.c.l.b16 %v347
  %v1407 = vunpack.c.l.b16 %v348
  %v1408 = vunpack.c.l.b16 %v349
  %v1409 = vunpack.c.l.b16 %v350
  %v1410 = vunpack.c.l.b16 %v351
  %v1411 = vunpack.c.l.b16 %v352
  %v1412 = vunpack.c.l.b16 %v353
  %v1413 = vunpack.c.l.b16 %v354
  %v1414 = vunpack.c.l.b16 %v355
  %v1415 = vunpack.c.l.b16 %v356
  %v1416 = vunpack.c.l.b16 %v357
  %v1417 = vunpack.c.l.b16 %v358
  %v1418 = vunpack.c.l.b16 %v359
  %v1419 = vunpack.c.l.b16 %v360
  %v1420 = vunpack.c.l.b16 %v361
  %v1421 = vunpack.c.l.b16 %v362
  %v1422 = vunpack.c.l.b16 %v363
  %v1423 = vunpack.c.l.b16 %v364
  %v1424 = vunpack.c.l.b16 %v365
  %v1425 = vunpack.c.l.b16 %v366
  %v1426 = vunpack.c.l.b16 %v367
  %v1427 = vunpack.c.l.b16 %v368
  %v1428 = vunpack.c.l.b16 %v369
  %v1429 = vunpack.c.l.b16 %v370
  %v1430 = vunpack.c.l.b16 %v371
  %v1431 = vunpack.c.l.b16 %v372
  %v1432 = vunpack.c.l.b16 %v373
  %v1433 = vunpack.c.l.b16 %v374
  %v1434 = vunpack.c.l.b16 %v375
  %v1435 = vunpack.c.l.b16 %v376
  %v1436 = vunpack.c.l.b16 %v377
  %v1437 = vunpack.c.l.b16 %v378
  %v1438 = vunpack.c.l.b16 %v379
  %v1439 = vunpack.c.l.b16 %v380
  %v1440 = vunpack.c.l.b16 %v381
  %v1441 = vunpack.c.l.b16 %v382
  %v1442 = vunpack.c.l.b16 %v383
  %v1443 = vunpack.c.l.b16 %v384
  %v1444 = vunpack.c.l.b16 %v385
  %v1445 = vunpack.c.l.b16 %v386
  %v1446 = vunpack.c.l.b16 %v387
  %v1447 = vunpack.c.l.b16 %v388
  %v1448 = vunpack.c.l.b16 %v389
  %v1449 = vunpack.c.l.b16 %v390
  %v1450 = vunpack.c.l.b16 %v391
  %v1451 = vunpack.c.l.b16 %v392
  %v1452 = vunpack.c.l.b16 %v393
  %v1453 = vunpack.c.l.b16 %v394
  %v1454 = vunpack.c.l.b16 %v395
  %v1455 = vunpack.c.l.b16 %v396
  %v1456 = vunpack.c.l.b16 %v397
  %v1457 = vunpack.c.l.b16 %v398
  %v1458 = vunpack.c.l.b16 %v399
  %v1459 = vunpack.c.l.b16 %v400
  %v1460 = vunpack.c.l.b16 %v401
  %v1461 = vunpack.c.l.b16 %v402
  %v1462 = vunpack.c.l.b16 %v403
  %v1463 = vunpack.c.l.b16 %v404
  %v1464 = vunpack.c.l.b16 %v405
  %v1465 = vunpack.c.l.b16 %v406
  %v1466 = vunpack.c.l.b16 %v407
  %v1467 = vunpack.c.l.b16 %v408
  %v1468 = vunpack.c.l.b16 %v409
  %v1469 = vunpack.c.l.b16 %v410
  %v1470 = vunpack.c.l.b16 %v411
  %v1471 = vunpack.c.l.b16 %v412
  %v1472 = vunpack.c.l.b16 %v413
  %v1473 = vunpack.c.l.b16 %v414
  %v1474 = vunpack.c.l.b16 %v415
  %v1475 = vunpack.c.l.b16 %v416
  %v1476 = vunpack.c.l.b16 %v417
  %v1477 = vunpack.c.l.b16 %v418
  %v1478 = vunpack.c.l.b16 %v419
  %v1479 = vunpack.c.l.b16 %v420
  %v1480 = vunpack.c.l.b16 %v421
  %v1481 = vunpack.c.l.b16 %v422
  %v1482 = vunpack.c.l.b16 %v423
  %v1483 = vunpack.c.l.b16 %v424
  %v1484 = vunpack.c.l.b16 %v425
  %v1485 = vunpack.c.l.b16 %v426
  %v1486 = vunpack.c.l.b16 %v427
  %v1487 = vunpack.c.l.b16 %v428
  %v1488 = vunpack.c.l.b16 %v429
  %v1489 = vunpack.c.l.b16 %v430
  %v1490 = vunpack.c.l.b16 %v431
  %v1491 = vunpack.c.l.b16 %v432
  %v1492 = vunpack.c.l.b16 %v433
  %v1493 = vunpack.c.l.b16 %v434
  %v1494 = vunpack.c.l.b16 %v435
  %v1495 = vunpack.c.l.b16 %v436
  %v1496 = vunpack.c.l.b16 %v437
  %v1497 = vunpack.c.l.b16 %v438
  %v1498 = vunpack.c.l.b16 %v439
  %v1499 = vunpack.c.l.b16 %v440
  %v1500 = vunpack.c.l.b16 %v441
  %v1501 = vunpack.c.l.b16 %v442
  %v1502 = vunpack.c.l.b16 %v443
  %v1503 = vunpack.c.l.b16 %v444
  %v1504 = vunpack.c.l.b16 %v445
  %v1505 = vunpack.c.l.b16 %v446
  %v1506 = vunpack.c.l.b16 %v447
  %v1507 = vunpack.c.l.b16 %v448
  %v1508 = vunpack.c.l.b16 %v449
  %v1509 = vunpack.c.l.b16 %v450
  %v1510 = vunpack.c.l.b16 %v451
  %v1511 = vunpack.c.l.b16 %v452
  %v1512 = vunpack.c.l.b16 %v453
  %v1513 = vunpack.c.l.b16 %v454
  %v1514 = vunpack.c.l.b16 %v455
  %v1515 = vunpack.c.l.b16 %v456
  %v1516 = vunpack.c.l.b16 %v457
  %v1517 = vunpack.c.l.b16 %v458
  %v1518 = vunpack.c.l.b16 %v459
  %v1519 = vunpack.c.l.b16 %v460
  %v1520 = vunpack.c.l.b16 %v461
  %v1521 = vunpack.c.l.b16 %v462
  %v1522 = vunpack.c.l.b16 %v463
  %v1523 = vunpack.c.l.b16 %v464
  %v1524 = vunpack.c.l.b16 %v465
  %v1525 = vunpack.c.l.b16 %v466
  %v1526 = vunpack.c.l.b16 %v467
  %v1527 = vunpack.c.l.b16 %v468
  %v1528 = vunpack.c.l.b16 %v469
  %v1529 = vunpack.c.l.b16 %v470
  %v1530 = vunpack.c.l.b16 %v471
  %v1531 = vunpack.c.l.b16 %v472
  %v1532 = vunpack.c.l.b16 %v473
  %v1533 = vunpack.c.l.b16 %v474
  %v1534 = vunpack.c.l.b16 %v475
  %v1535 = vunpack.c.l.b16 %v476
  %v1536 = vunpack.c.l.b16 %v477
  %v1537 = vunpack.c.l.b16 %v478
  %v1538 = vpack.c.b16 %v1139, %v1138
  %v1539 = vpack.c.b16 %v1141, %v1140
  %v1540 = vpack.c.b16 %v1143, %v1142
  %v1541 = vpack.c.b16 %v1145, %v1144
  %v1542 = vpack.c.b16 %v1147, %v1146
  %v1543 = vpack.c.b16 %v1149, %v1148
  %v1544 = vpack.c.b16 %v1151, %v1150
  %v1545 = vpack.c.b16 %v1153, %v1152
  %v1546 = vpack.c.b16 %v1155, %v1154
  %v1547 = vpack.c.b16 %v1157, %v1156
  %v1548 = vpack.c.b16 %v1159, %v1158
  %v1549 = vpack.c.b16 %v1161, %v1160
  %v1550 = vpack.c.b16 %v1163, %v1162
  %v1551 = vpack.c.b16 %v1165, %v1164
  %v1552 = vpack.c.b16 %v1167, %v1166
  %v1553 = vpack.c.b16 %v1169, %v1168
  %v1554 = vpack.c.b16 %v1171, %v1170
  %v1555 = vpack.c.b16 %v1173, %v1172
  %v1556 = vpack.c.b16 %v1175, %v1174
  %v1557 = vpack.c.b16 %v1177, %v1176
  %v1558 = vpack.c.b16 %v1179, %v1178
  %v1559 = vpack.c.b16 %v1181, %v1180
  %v1560 = vpack.c.b16 %v1183, %v1182
  %v1561 = vpack.c.b16 %v1185, %v1184
  %v1562 = vpack.c.b16 %v1187, %v1186
  %v1563 = vpack.c.b16 %v1189, %v1188
  %v1564 = vpack.c.b16 %v1191, %v1190
  %v1565 = vpack.c.b16 %v1193, %v1192
  %v1566 = vpack.c.b16 %v1195, %v1194
  %v1567 = vpack.c.b16 %v1197, %v1196
  %v1568 = vpack.c.b16 %v1199, %v1198
  %v1569 = vpack.c.b16 %v1201, %v1200
  %v1570 = vpack.c.b16 %v1203, %v1202
  %v1571 = vpack.c.b16 %v1205, %v1204
  %v1572 = vpack.c.b16 %v1207, %v1206
  %v1573 = vpack.c.b16 %v1209, %v1208
  %v1574 = vpack.c.b16 %v1211, %v1210
  %v1575 = vpack.c.b16 %v1213, %v1212
  %v1576 = vpack.c.b16 %v1215, %v1214
  %v1577 = vpack.c.b16 %v1217, %v1216
  %v1578 = vpack.c.b16 %v1219, %v1218
  %v1579 = vpack.c.b16 %v1221, %v1220
  %v1580 = vpack.c.b16 %v1223, %v1222
  %v1581 = vpack.c.b16 %v1225, %v1224
  %v1582 = vpack.c.b16 %v1227, %v1226
  %v1583 = vpack.c.b16 %v1229, %v1228
  %v1584 = vpack.c.b16 %v1231, %v1230
  %v1585 = vpack.c.b16 %v1233, %v1232
  %v1586 = vpack.c.b16 %v1235, %v1234
  %v1587 = vpack.c.b16 %v1237, %v1236
  %v1588 = vpack.c.b16 %v1239, %v1238
  %v1589 = vpack.c.b16 %v1241, %v1240
  %v1590 = vpack.c.b16 %v1243, %v1242
  %v1591 = vpack.c.b16 %v1245, %v1244
  %v1592 = vpack.c.b16 %v1247, %v1246
  %v1593 = vpack.c.b16 %v1249, %v1248
  %v1594 = vpack.c.b16 %v1251, %v1250
  %v1595 = vpack.c.b16 %v1253, %v1252
  %v1596 = vpack.c.b16 %v1255, %v1254
  %v1597 = vpack.c.b16 %v1257, %v1256
  %v1598 = vpack.c.b16 %v1259, %v1258
  %v1599 = vpack.c.b16 %v1261, %v1260
  %v1600 = vpack.c.b16 %v1263, %v1262
  %v1601 = vpack.c.b16 %v1265, %v1264
  %v1602 = vpack.c.b16 %v1267, %v1266
  %v1603 = vpack.c.b16 %v1269, %v1268
  %v1604 = vpack.c.b16 %v1271, %v1270
  %v1605 = vpack.c.b16 %v1273, %v1272
  %v1606 = vpack.c.b16 %v1275, %v1274
  %v1607 = vpack.c.b16 %v1277, %v1276
  %v1608 = vpack.c.b16 %v1279, %v1278
  %v1609 = vpack.c.b16 %v1281, %v1280
  %v1610 = vpack.c.b16 %v1283, %v1282
  %v1611 = vpack.c.b16 %v1285, %v1284
  %v1612 = vpack.c.b16 %v1287, %v1286
  %v1613 = vpack.c.b16 %v1289, %v1288
  %v1614 = vpack.c.b16 %v1291, %v1290
  %v1615 = vpack.c.b16 %v1293, %v1292
  %v1616 = vpack.c.b16 %v1295, %v1294
  %v1617 = vpack.c.b16 %v1297, %v1296
  %v1618 = vpack.c.b16 %v1299, %v1298
  %v1619 = vpack.c.b16 %v1301, %v1300
  %v1620 = vpack.c.b16 %v1303, %v1302
  %v1621 = vpack.c.b16 %v1305, %v1304
  %v1622 = vpack.c.b16 %v1307, %v1306
  %v1623 = vpack.c.b16 %v1309, %v1308
  %v1624 = vpack.c.b16 %v1311, %v1310
  %v1625 = vpack.c.b16 %v1313, %v1312
  %v1626 = vpack.c.b16 %v1315, %v1314
  %v1627 = vpack.c.b16 %v1317, %v1316
  %v1628 = vpack.c.b16 %v1319, %v1318
  %v1629 = vpack.c.b16 %v1321, %v1320
  %v1630 = vpack.c.b16 %v1323, %v1322
  %v1631 = vpack.c.b16 %v1325, %v1324
  %v1632 = vpack.c.b16 %v1327, %v1326
  %v1633 = vpack.c.b16 %v1329, %v1328
  %v1634 = vpack.c.b16 %v1331, %v1330
  %v1635 = vpack.c.b16 %v1333, %v1332
  %v1636 = vpack.c.b16 %v1335, %v1334
  %v1637 = vpack.c.b16 %v1337, %v1336
  %v1638 = vpack.c.b16 %v1339, %v1338
  %v1639 = vpack.c.b16 %v1341, %v1340
  %v1640 = vpack.c.b16 %v1343, %v1342
  %v1641 = vpack.c.b16 %v1345, %v1344
  %v1642 = vpack.c.b16 %v1347, %v1346
  %v1643 = vpack.c.b16 %v1349, %v1348
  %v1644 = vpack.c.b16 %v1351, %v1350
  %v1645 = vpack.c.b16 %v1353, %v1352
  %v1646 = vpack.c.b16 %v1355, %v1354
  %v1647 = vpack.c.b16 %v1357, %v1356
  %v1648 = vpack.c.b16 %v1359, %v1358
  %v1649 = vpack.c.b16 %v1361, %v1360
  %v1650 = vpack.c.b16 %v1363, %v1362
  %v1651 = vpack.c.b16 %v1365, %v1364
  %v1652 = vpack.c.b16 %v1367, %v1366
  %v1653 = vpack.c.b16 %v1369, %v1368
  %v1654 = vpack.c.b16 %v1371, %v1370
  %v1655 = vpack.c.b16 %v1373, %v1372
  %v1656 = vpack.c.b16 %v1375, %v1374
  %v1657 = vpack.c.b16 %v1377, %v1376
  %v1658 = vpack.c.b16 %v1379, %v1378
  %v1659 = vpack.c.b16 %v1381, %v1380
  %v1660 = vpack.c.b16 %v1383, %v1382
  %v1661 = vpack.c.b16 %v1385, %v1384
  %v1662 = vpack.c.b16 %v1387, %v1386
  %v1663 = vpack.c.b16 %v1389, %v1388
  %v1664 = vpack.c.b16 %v1391, %v1390
  %v1665 = vpack.c.b16 %v1393, %v1392
  %v1666 = vpack.c.b16 %v1395, %v1394
  %v1667 = vpack.c.b16 %v1397, %v1396
  %v1668 = vpack.c.b16 %v1399, %v1398
  %v1669 = vpack.c.b16 %v1401, %v1400
  %v1670 = vpack.c.b16 %v1403, %v1402
  %v1671 = vpack.c.b16 %v1405, %v1404
  %v1672 = vpack.c.b16 %v1407, %v1406
  %v1673 = vpack.c.b16 %v1409, %v1408
  %v1674 = vpack.c.b16 %v1411, %v1410
  %v1675 = vpack.c.b16 %v1413, %v1412
  %v1676 = vpack.c.b16 %v1415, %v1414
  %v1677 = vpack.c.b16 %v1417, %v1416
  %v1678 = vpack.c.b16 %v1419, %v1418
  %v1679 = vpack.c.b16 %v1421, %v1420
  %v1680 = vpack.c.b16 %v1423, %v1422
  %v1681 = vpack.c.b16 %v1425, %v1424
  %v1682 = vpack.c.b16 %v1427, %v1426
  %v1683 = vpack.c.b16 %v1429, %v1428
  %v1684 = vpack.c.b16 %v1431, %v1430
  %v1685 = vpack.c.b16 %v1433, %v1432
  %v1686 = vpack.c.b16 %v1435, %v1434
  %v1687 = vpack.c.b16 %v1437, %v1436
  %v1688 = vpack.c.b16 %v1439, %v1438
  %v1689 = vpack.c.b16 %v1441, %v1440
  %v1690 = vpack.c.b16 %v1443, %v1442
  %v1691 = vpack.c.b16 %v1445, %v1444
  %v1692 = vpack.c.b16 %v1447, %v1446
  %v1693 = vpack.c.b16 %v1449, %v1448
  %v1694 = vpack.c.b16 %v1451, %v1450
  %v1695 = vpack.c.b16 %v1453, %v1452
  %v1696 = vpack.c.b16 %v1455, %v1454
  %v1697 = vpack.c.b16 %v1457, %v1456
  %v1698 = vpack.c.b16 %v1459, %v1458
  %v1699 = vpack.c.b16 %v1461, %v1460
  %v1700 = vpack.c.b16 %v1463, %v1462
  %v1701 = vpack.c.b16 %v1465, %v1464
  %v1702 = vpack.c.b16 %v1467, %v1466
  %v1703 = vpack.c.b16 %v1469, %v1468
  %v1704 = vpack.c.b16 %v1471, %v1470
  %v1705 = vpack.c.b16 %v1473, %v1472
  %v1706 = vpack.c.b16 %v1475, %v1474
  %v1707 = vpack.c.b16 %v1477, %v1476
  %v1708 = vpack.c.b16 %v1479, %v1478
  %v1709 = vpack.c.b16 %v1481, %v1480
  %v1710 = vpack.c.b16 %v1483, %v1482
  %v1711 = vpack.c.b16 %v1485, %v1484
  %v1712 = vpack.c.b16 %v1487, %v1486
  %v1713 = vpack.c.b16 %v1489, %v1488
  %v1714 = vpack.c.b16 %v1491, %v1490
  %v1715 = vpack.c.b16 %v1493, %v1492
  %v1716 = vpack.c.b16 %v1495, %v1494
  %v1717 = vpack.c.b16 %v1497, %v1496
  %v1718 = vpack.c.b16 %v1499, %v1498
  %v1719 = vpack.c.b16 %v1501, %v1500
  %v1720 = vpack.c.b16 %v1503, %v1502
  %v1721 = vpack.c.b16 %v1505, %v1504
  %v1722 = vpack.c.b16 %v1507, %v1506
  %v1723 = vpack.c.b16 %v1509, %v1508
  %v1724 = vpack.c.b16 %v1511, %v1510
  %v1725 = vpack.c.b16 %v1513, %v1512
  %v1726 = vpack.c.b16 %v1515, %v1514
  %v1727 = vpack.c.b16 %v1517, %v1516
  %v1728 = vpack.c.b16 %v1519, %v1518
  %v1729 = vpack.c.b16 %v1521, %v1520
  %v1730 = vpack.c.b16 %v1523, %v1522
  %v1731 = vpack.c.b16 %v1525, %v1524
  %v1732 = vpack.c.b16 %v1527, %v1526
  %v1733 = vpack.c.b16 %v1529, %v1528
  %v1734 = vpack.c.b16 %v1531, %v1530
  %v1735 = vpack.c.b16 %v1533, %v1532
  %v1736 = vpack.c.b16 %v1535, %v1534
  %v1737 = vpack.c.b16 %v1537, %v1536
  %1938 = vmatprep.subr.bf16.mxu0 0
  %1939 = vmatpush1.bf16.msra.mxu0 %v1538
  %1940 = vmatprep.subr.bf16.mxu0 0
  %1941 = vmatpush1.bf16.msra.mxu0 %v1539
  %1942 = vmatprep.subr.bf16.mxu0 0
  %1943 = vmatpush1.bf16.msra.mxu0 %v1540
  %1944 = vmatprep.subr.bf16.mxu0 0
  %1945 = vmatpush1.bf16.msra.mxu0 %v1541
  %1946 = vmatprep.subr.bf16.mxu0 0
  %1947 = vmatpush1.bf16.msra.mxu0 %v1542
  %1948 = vmatprep.subr.bf16.mxu0 0
  %1949 = vmatpush1.bf16.msra.mxu0 %v1543
  %1950 = vmatprep.subr.bf16.mxu0 0
  %1951 = vmatpush1.bf16.msra.mxu0 %v1544
  %1952 = vmatprep.subr.bf16.mxu0 0
  %1953 = vmatpush1.bf16.msra.mxu0 %v1545
  %1954 = vmatprep.subr.bf16.mxu0 0
  %1955 = vmatpush1.bf16.msra.mxu0 %v1546
  %1956 = vmatprep.subr.bf16.mxu0 0
  %1957 = vmatpush1.bf16.msra.mxu0 %v1547
  %1958 = vmatprep.subr.bf16.mxu0 0
  %1959 = vmatpush1.bf16.msra.mxu0 %v1548
  %1960 = vmatprep.subr.bf16.mxu0 0
  %1961 = vmatpush1.bf16.msra.mxu0 %v1549
  %1962 = vmatprep.subr.bf16.mxu0 0
  %1963 = vmatpush1.bf16.msra.mxu0 %v1550
  %1964 = vmatprep.subr.bf16.mxu0 0
  %1965 = vmatpush1.bf16.msra.mxu0 %v1551
  %1966 = vmatprep.subr.bf16.mxu0 0
  %1967 = vmatpush1.bf16.msra.mxu0 %v1552
  %1968 = vmatprep.subr.bf16.mxu0 0
  %1969 = vmatpush1.bf16.msra.mxu0 %v1553
  %1970 = vmatprep.mubr.bf16.mxu0 %v639
  %1971 = vmatmul.mubr.bf16.gmra.mrb[0].mxu0 %v638
  %v1972 = vpop.f32.mrb[0].mxu0
  %v1973 = vadd.f32 %v484, %v1972
  %v1974 = vpop.f32.mrb[0].mxu0
  %v1975 = vpop.f32.mrb[0].mxu0
  %v1976 = vadd.f32 %v484, %v1975
  %v1977 = vpop.f32.mrb[0].mxu0
  %1978 = vmatprep.mubr.bf16.mxu0 %v664
  %1979 = vmatmul.mubr.bf16.gmra.mrb[0].mxu0 %v663
  %v1980 = vpop.f32.mrb[0].mxu0
  %v1981 = vadd.f32 %v484, %v1980
  %v1982 = vpop.f32.mrb[0].mxu0
  %v1983 = vpop.f32.mrb[0].mxu0
  %v1984 = vadd.f32 %v484, %v1983
  %v1985 = vpop.f32.mrb[0].mxu0
  %1986 = vdwg.mxu0
  %1987 = vmatprep.subr.bf16.mxu0 0
  %1988 = vmatpush1.bf16.msra.mxu0 %v1554
  %1989 = vmatprep.subr.bf16.mxu0 0
  %1990 = vmatpush1.bf16.msra.mxu0 %v1555
  %1991 = vmatprep.subr.bf16.mxu0 0
  %1992 = vmatpush1.bf16.msra.mxu0 %v1556
  %1993 = vmatprep.subr.bf16.mxu0 0
  %1994 = vmatpush1.bf16.msra.mxu0 %v1557
  %1995 = vmatprep.subr.bf16.mxu0 0
  %1996 = vmatpush1.bf16.msra.mxu0 %v1558
  %1997 = vmatprep.subr.bf16.mxu0 0
  %1998 = vmatpush1.bf16.msra.mxu0 %v1559
  %1999 = vmatprep.subr.bf16.mxu0 0
  %2000 = vmatpush1.bf16.msra.mxu0 %v1560
  %2001 = vmatprep.subr.bf16.mxu0 0
  %2002 = vmatpush1.bf16.msra.mxu0 %v1561
  %2003 = vmatprep.subr.bf16.mxu0 0
  %2004 = vmatpush1.bf16.msra.mxu0 %v1562
  %2005 = vmatprep.subr.bf16.mxu0 0
  %2006 = vmatpush1.bf16.msra.mxu0 %v1563
  %2007 = vmatprep.subr.bf16.mxu0 0
  %2008 = vmatpush1.bf16.msra.mxu0 %v1564
  %2009 = vmatprep.subr.bf16.mxu0 0
  %2010 = vmatpush1.bf16.msra.mxu0 %v1565
  %2011 = vmatprep.subr.bf16.mxu0 0
  %2012 = vmatpush1.bf16.msra.mxu0 %v1566
  %2013 = vmatprep.subr.bf16.mxu0 0
  %2014 = vmatpush1.bf16.msra.mxu0 %v1567
  %2015 = vmatprep.subr.bf16.mxu0 0
  %2016 = vmatpush1.bf16.msra.mxu0 %v1568
  %2017 = vmatprep.subr.bf16.mxu0 0
  %2018 = vmatpush1.bf16.msra.mxu0 %v1569
  %2019 = vmatprep.mubr.bf16.mxu0 %v641
  %2020 = vmatmul.mubr.bf16.gmra.mrb[0].mxu0 %v640
  %v2021 = vpop.f32.mrb[0].mxu0
  %v2022 = vadd.f32 %v1973, %v2021
  %v2023 = vpop.f32.mrb[0].mxu0
  %v2024 = vpop.f32.mrb[0].mxu0
  %v2025 = vadd.f32 %v1976, %v2024
  %v2026 = vpop.f32.mrb[0].mxu0
  %2027 = vmatprep.mubr.bf16.mxu0 %v666
  %2028 = vmatmul.mubr.bf16.gmra.mrb[0].mxu0 %v665
  %v2029 = vpop.f32.mrb[0].mxu0
  %v2030 = vadd.f32 %v1981, %v2029
  %v2031 = vpop.f32.mrb[0].mxu0
  %v2032 = vpop.f32.mrb[0].mxu0
  %v2033 = vadd.f32 %v1984, %v2032
  %v2034 = vpop.f32.mrb[0].mxu0
  %2035 = vdwg.mxu0
  %2036 = vmatprep.subr.bf16.mxu0 0
  %2037 = vmatpush1.bf16.msra.mxu0 %v1570
  %2038 = vmatprep.subr.bf16.mxu0 0
  %2039 = vmatpush1.bf16.msra.mxu0 %v1571
  %2040 = vmatprep.subr.bf16.mxu0 0
  %2041 = vmatpush1.bf16.msra.mxu0 %v1572
  %2042 = vmatprep.subr.bf16.mxu0 0
  %2043 = vmatpush1.bf16.msra.mxu0 %v1573
  %2044 = vmatprep.subr.bf16.mxu0 0
  %2045 = vmatpush1.bf16.msra.mxu0 %v1574
  %2046 = vmatprep.subr.bf16.mxu0 0
  %2047 = vmatpush1.bf16.msra.mxu0 %v1575
  %2048 = vmatprep.subr.bf16.mxu0 0
  %2049 = vmatpush1.bf16.msra.mxu0 %v1576
  %2050 = vmatprep.subr.bf16.mxu0 0
  %2051 = vmatpush1.bf16.msra.mxu0 %v1577
  %2052 = vmatprep.subr.bf16.mxu0 0
  %2053 = vmatpush1.bf16.msra.mxu0 %v1578
  %2054 = vmatprep.subr.bf16.mxu0 0
  %2055 = vmatpush1.bf16.msra.mxu0 %v1579
  %2056 = vmatprep.subr.bf16.mxu0 0
  %2057 = vmatpush1.bf16.msra.mxu0 %v1580
  %2058 = vmatprep.subr.bf16.mxu0 0
  %2059 = vmatpush1.bf16.msra.mxu0 %v1581
  %2060 = vmatprep.subr.bf16.mxu0 0
  %2061 = vmatpush1.bf16.msra.mxu0 %v1582
  %2062 = vmatprep.subr.bf16.mxu0 0
  %2063 = vmatpush1.bf16.msra.mxu0 %v1583
  %2064 = vmatprep.subr.bf16.mxu0 0
  %2065 = vmatpush1.bf16.msra.mxu0 %v1584
  %2066 = vmatprep.subr.bf16.mxu0 0
  %2067 = vmatpush1.bf16.msra.mxu0 %v1585
  %2068 = vmatprep.mubr.bf16.mxu0 %v643
  %2069 = vmatmul.mubr.bf16.gmra.mrb[0].mxu0 %v642
  %v2070 = vpop.f32.mrb[0].mxu0
  %v2071 = vadd.f32 %v2022, %v2070
  %v2072 = vpop.f32.mrb[0].mxu0
  %v2073 = vpop.f32.mrb[0].mxu0
  %v2074 = vadd.f32 %v2025, %v2073
  %v2075 = vpop.f32.mrb[0].mxu0
  %2076 = vmatprep.mubr.bf16.mxu0 %v668
  %2077 = vmatmul.mubr.bf16.gmra.mrb[0].mxu0 %v667
  %v2078 = vpop.f32.mrb[0].mxu0
  %v2079 = vadd.f32 %v2030, %v2078
  %v2080 = vpop.f32.mrb[0].mxu0
  %v2081 = vpop.f32.mrb[0].mxu0
  %v2082 = vadd.f32 %v2033, %v2081
  %v2083 = vpop.f32.mrb[0].mxu0
  %2084 = vdwg.mxu0
  %2085 = vmatprep.subr.bf16.mxu0 0
  %2086 = vmatpush1.bf16.msra.mxu0 %v1586
  %2087 = vmatprep.subr.bf16.mxu0 0
  %2088 = vmatpush1.bf16.msra.mxu0 %v1587
  %2089 = vmatprep.subr.bf16.mxu0 0
  %2090 = vmatpush1.bf16.msra.mxu0 %v1588
  %2091 = vmatprep.subr.bf16.mxu0 0
  %2092 = vmatpush1.bf16.msra.mxu0 %v1589
  %2093 = vmatprep.subr.bf16.mxu0 0
  %2094 = vmatpush1.bf16.msra.mxu0 %v1590
  %2095 = vmatprep.subr.bf16.mxu0 0
  %2096 = vmatpush1.bf16.msra.mxu0 %v1591
  %2097 = vmatprep.subr.bf16.mxu0 0
  %2098 = vmatpush1.bf16.msra.mxu0 %v1592
  %2099 = vmatprep.subr.bf16.mxu0 0
  %2100 = vmatpush1.bf16.msra.mxu0 %v1593
  %2101 = vmatprep.subr.bf16.mxu0 0
  %2102 = vmatpush1.bf16.msra.mxu0 %v1594
  %2103 = vmatprep.subr.bf16.mxu0 0
  %2104 = vmatpush1.bf16.msra.mxu0 %v1595
  %2105 = vmatprep.subr.bf16.mxu0 0
  %2106 = vmatpush1.bf16.msra.mxu0 %v1596
  %2107 = vmatprep.subr.bf16.mxu0 0
  %2108 = vmatpush1.bf16.msra.mxu0 %v1597
  %2109 = vmatprep.subr.bf16.mxu0 0
  %2110 = vmatpush1.bf16.msra.mxu0 %v1598
  %2111 = vmatprep.subr.bf16.mxu0 0
  %2112 = vmatpush1.bf16.msra.mxu0 %v1599
  %2113 = vmatprep.subr.bf16.mxu0 0
  %2114 = vmatpush1.bf16.msra.mxu0 %v1600
  %2115 = vmatprep.subr.bf16.mxu0 0
  %2116 = vmatpush1.bf16.msra.mxu0 %v1601
  %2117 = vmatprep.mubr.bf16.mxu0 %v645
  %2118 = vmatmul.mubr.bf16.gmra.mrb[0].mxu0 %v644
  %v2119 = vpop.f32.mrb[0].mxu0
  %v2120 = vadd.f32 %v2071, %v2119
  %v2121 = vpop.f32.mrb[0].mxu0
  %v2122 = vpop.f32.mrb[0].mxu0
  %v2123 = vadd.f32 %v2074, %v2122
  %v2124 = vpop.f32.mrb[0].mxu0
  %2125 = vmatprep.mubr.bf16.mxu0 %v670
  %2126 = vmatmul.mubr.bf16.gmra.mrb[0].mxu0 %v669
  %v2127 = vpop.f32.mrb[0].mxu0
  %v2128 = vadd.f32 %v2079, %v2127
  %v2129 = vpop.f32.mrb[0].mxu0
  %v2130 = vpop.f32.mrb[0].mxu0
  %v2131 = vadd.f32 %v2082, %v2130
  %v2132 = vpop.f32.mrb[0].mxu0
  %2133 = vdwg.mxu0
  %2134 = vmatprep.subr.bf16.mxu0 0
  %2135 = vmatpush1.bf16.msra.mxu0 %v1602
  %2136 = vmatprep.subr.bf16.mxu0 0
  %2137 = vmatpush1.bf16.msra.mxu0 %v1603
  %2138 = vmatprep.subr.bf16.mxu0 0
  %2139 = vmatpush1.bf16.msra.mxu0 %v1604
  %2140 = vmatprep.subr.bf16.mxu0 0
  %2141 = vmatpush1.bf16.msra.mxu0 %v1605
  %2142 = vmatprep.subr.bf16.mxu0 0
  %2143 = vmatpush1.bf16.msra.mxu0 %v1606
  %2144 = vmatprep.subr.bf16.mxu0 0
  %2145 = vmatpush1.bf16.msra.mxu0 %v1607
  %2146 = vmatprep.subr.bf16.mxu0 0
  %2147 = vmatpush1.bf16.msra.mxu0 %v1608
  %2148 = vmatprep.subr.bf16.mxu0 0
  %2149 = vmatpush1.bf16.msra.mxu0 %v1609
  %2150 = vmatprep.subr.bf16.mxu0 0
  %2151 = vmatpush1.bf16.msra.mxu0 %v1610
  %2152 = vmatprep.subr.bf16.mxu0 0
  %2153 = vmatpush1.bf16.msra.mxu0 %v1611
  %2154 = vmatprep.subr.bf16.mxu0 0
  %2155 = vmatpush1.bf16.msra.mxu0 %v1612
  %2156 = vmatprep.subr.bf16.mxu0 0
  %2157 = vmatpush1.bf16.msra.mxu0 %v1613
  %2158 = vmatprep.subr.bf16.mxu0 0
  %2159 = vmatpush1.bf16.msra.mxu0 %v1614
  %2160 = vmatprep.subr.bf16.mxu0 0
  %2161 = vmatpush1.bf16.msra.mxu0 %v1615
  %2162 = vmatprep.subr.bf16.mxu0 0
  %2163 = vmatpush1.bf16.msra.mxu0 %v1616
  %2164 = vmatprep.subr.bf16.mxu0 0
  %2165 = vmatpush1.bf16.msra.mxu0 %v1617
  %2166 = vmatprep.mubr.bf16.mxu0 %v647
  %2167 = vmatmul.mubr.bf16.gmra.mrb[0].mxu0 %v646
  %v2168 = vpop.f32.mrb[0].mxu0
  %v2169 = vadd.f32 %v2120, %v2168
  %v2170 = vpop.f32.mrb[0].mxu0
  %v2171 = vpop.f32.mrb[0].mxu0
  %v2172 = vadd.f32 %v2123, %v2171
  %v2173 = vpop.f32.mrb[0].mxu0
  %2174 = vmatprep.mubr.bf16.mxu0 %v672
  %2175 = vmatmul.mubr.bf16.gmra.mrb[0].mxu0 %v671
  %v2176 = vpop.f32.mrb[0].mxu0
  %v2177 = vadd.f32 %v2128, %v2176
  %v2178 = vpop.f32.mrb[0].mxu0
  %v2179 = vpop.f32.mrb[0].mxu0
  %v2180 = vadd.f32 %v2131, %v2179
  %v2181 = vpop.f32.mrb[0].mxu0
  %2182 = vdwg.mxu0
  %2183 = vmatprep.subr.bf16.mxu0 0
  %2184 = vmatpush1.bf16.msra.mxu0 %v1618
  %2185 = vmatprep.subr.bf16.mxu0 0
  %2186 = vmatpush1.bf16.msra.mxu0 %v1619
  %2187 = vmatprep.subr.bf16.mxu0 0
  %2188 = vmatpush1.bf16.msra.mxu0 %v1620
  %2189 = vmatprep.subr.bf16.mxu0 0
  %2190 = vmatpush1.bf16.msra.mxu0 %v1621
  %2191 = vmatprep.subr.bf16.mxu0 0
  %2192 = vmatpush1.bf16.msra.mxu0 %v1622
  %2193 = vmatprep.subr.bf16.mxu0 0
  %2194 = vmatpush1.bf16.msra.mxu0 %v1623
  %2195 = vmatprep.subr.bf16.mxu0 0
  %2196 = vmatpush1.bf16.msra.mxu0 %v1624
  %2197 = vmatprep.subr.bf16.mxu0 0
  %2198 = vmatpush1.bf16.msra.mxu0 %v1625
  %2199 = vmatprep.subr.bf16.mxu0 0
  %2200 = vmatpush1.bf16.msra.mxu0 %v1626
  %2201 = vmatprep.subr.bf16.mxu0 0
  %2202 = vmatpush1.bf16.msra.mxu0 %v1627
  %2203 = vmatprep.subr.bf16.mxu0 0
  %2204 = vmatpush1.bf16.msra.mxu0 %v1628
  %2205 = vmatprep.subr.bf16.mxu0 0
  %2206 = vmatpush1.bf16.msra.mxu0 %v1629
  %2207 = vmatprep.subr.bf16.mxu0 0
  %2208 = vmatpush1.bf16.msra.mxu0 %v1630
  %2209 = vmatprep.subr.bf16.mxu0 0
  %2210 = vmatpush1.bf16.msra.mxu0 %v1631
  %2211 = vmatprep.subr.bf16.mxu0 0
  %2212 = vmatpush1.bf16.msra.mxu0 %v1632
  %2213 = vmatprep.subr.bf16.mxu0 0
  %2214 = vmatpush1.bf16.msra.mxu0 %v1633
  %2215 = vmatprep.mubr.bf16.mxu0 %v649
  %2216 = vmatmul.mubr.bf16.gmra.mrb[0].mxu0 %v648
  %v2217 = vpop.f32.mrb[0].mxu0
  %v2218 = vadd.f32 %v2169, %v2217
  %v2219 = vpop.f32.mrb[0].mxu0
  %v2220 = vpop.f32.mrb[0].mxu0
  %v2221 = vadd.f32 %v2172, %v2220
  %v2222 = vpop.f32.mrb[0].mxu0
  %2223 = vmatprep.mubr.bf16.mxu0 %v674
  %2224 = vmatmul.mubr.bf16.gmra.mrb[0].mxu0 %v673
  %v2225 = vpop.f32.mrb[0].mxu0
  %v2226 = vadd.f32 %v2177, %v2225
  %v2227 = vpop.f32.mrb[0].mxu0
  %v2228 = vpop.f32.mrb[0].mxu0
  %v2229 = vadd.f32 %v2180, %v2228
  %v2230 = vpop.f32.mrb[0].mxu0
  %2231 = vdwg.mxu0
  %2232 = vmatprep.subr.bf16.mxu0 0
  %2233 = vmatpush1.bf16.msra.mxu0 %v1634
  %2234 = vmatprep.subr.bf16.mxu0 0
  %2235 = vmatpush1.bf16.msra.mxu0 %v1635
  %2236 = vmatprep.subr.bf16.mxu0 0
  %2237 = vmatpush1.bf16.msra.mxu0 %v1636
  %2238 = vmatprep.subr.bf16.mxu0 0
  %2239 = vmatpush1.bf16.msra.mxu0 %v1637
  %2240 = vmatprep.subr.bf16.mxu0 0
  %2241 = vmatpush1.bf16.msra.mxu0 %v1638
  %2242 = vmatprep.subr.bf16.mxu0 0
  %2243 = vmatpush1.bf16.msra.mxu0 %v1639
  %2244 = vmatprep.subr.bf16.mxu0 0
  %2245 = vmatpush1.bf16.msra.mxu0 %v1640
  %2246 = vmatprep.subr.bf16.mxu0 0
  %2247 = vmatpush1.bf16.msra.mxu0 %v1641
  %2248 = vmatprep.subr.bf16.mxu0 0
  %2249 = vmatpush1.bf16.msra.mxu0 %v1642
  %2250 = vmatprep.subr.bf16.mxu0 0
  %2251 = vmatpush1.bf16.msra.mxu0 %v1643
  %2252 = vmatprep.subr.bf16.mxu0 0
  %2253 = vmatpush1.bf16.msra.mxu0 %v1644
  %2254 = vmatprep.subr.bf16.mxu0 0
  %2255 = vmatpush1.bf16.msra.mxu0 %v1645
  %2256 = vmatprep.subr.bf16.mxu0 0
  %2257 = vmatpush1.bf16.msra.mxu0 %v1646
  %2258 = vmatprep.subr.bf16.mxu0 0
  %2259 = vmatpush1.bf16.msra.mxu0 %v1647
  %2260 = vmatprep.subr.bf16.mxu0 0
  %2261 = vmatpush1.bf16.msra.mxu0 %v1648
  %2262 = vmatprep.subr.bf16.mxu0 0
  %2263 = vmatpush1.bf16.msra.mxu0 %v1649
  %2264 = vmatprep.mubr.bf16.mxu0 %v651
  %2265 = vmatmul.mubr.bf16.gmra.mrb[0].mxu0 %v650
  %v2266 = vpop.f32.mrb[0].mxu0
  %v2267 = vadd.f32 %v2218, %v2266
  %v2268 = vpop.f32.mrb[0].mxu0
  %v2269 = vpop.f32.mrb[0].mxu0
  %v2270 = vadd.f32 %v2221, %v2269
  %v2271 = vpop.f32.mrb[0].mxu0
  %2272 = vmatprep.mubr.bf16.mxu0 %v676
  %2273 = vmatmul.mubr.bf16.gmra.mrb[0].mxu0 %v675
  %v2274 = vpop.f32.mrb[0].mxu0
  %v2275 = vadd.f32 %v2226, %v2274
  %v2276 = vpop.f32.mrb[0].mxu0
  %v2277 = vpop.f32.mrb[0].mxu0
  %v2278 = vadd.f32 %v2229, %v2277
  %v2279 = vpop.f32.mrb[0].mxu0
  %2280 = vdwg.mxu0
  %2281 = vmatprep.subr.bf16.mxu0 0
  %2282 = vmatpush1.bf16.msra.mxu0 %v1650
  %2283 = vmatprep.subr.bf16.mxu0 0
  %2284 = vmatpush1.bf16.msra.mxu0 %v1651
  %2285 = vmatprep.subr.bf16.mxu0 0
  %2286 = vmatpush1.bf16.msra.mxu0 %v1652
  %2287 = vmatprep.subr.bf16.mxu0 0
  %2288 = vmatpush1.bf16.msra.mxu0 %v1653
  %2289 = vmatprep.subr.bf16.mxu0 0
  %2290 = vmatpush1.bf16.msra.mxu0 %v1654
  %2291 = vmatprep.subr.bf16.mxu0 0
  %2292 = vmatpush1.bf16.msra.mxu0 %v1655
  %2293 = vmatprep.subr.bf16.mxu0 0
  %2294 = vmatpush1.bf16.msra.mxu0 %v1656
  %2295 = vmatprep.subr.bf16.mxu0 0
  %2296 = vmatpush1.bf16.msra.mxu0 %v1657
  %2297 = vmatprep.subr.bf16.mxu0 0
  %2298 = vmatpush1.bf16.msra.mxu0 %v1658
  %2299 = vmatprep.subr.bf16.mxu0 0
  %2300 = vmatpush1.bf16.msra.mxu0 %v1659
  %2301 = vmatprep.subr.bf16.mxu0 0
  %2302 = vmatpush1.bf16.msra.mxu0 %v1660
  %2303 = vmatprep.subr.bf16.mxu0 0
  %2304 = vmatpush1.bf16.msra.mxu0 %v1661
  %2305 = vmatprep.subr.bf16.mxu0 0
  %2306 = vmatpush1.bf16.msra.mxu0 %v1662
  %2307 = vmatprep.subr.bf16.mxu0 0
  %2308 = vmatpush1.bf16.msra.mxu0 %v1663
  %2309 = vmatprep.subr.bf16.mxu0 0
  %2310 = vmatpush1.bf16.msra.mxu0 %v1664
  %2311 = vmatprep.subr.bf16.mxu0 0
  %2312 = vmatpush1.bf16.msra.mxu0 %v1665
  %2313 = vmatprep.mubr.bf16.mxu0 %v653
  %2314 = vmatmul.mubr.bf16.gmra.mrb[0].mxu0 %v652
  %v2315 = vpop.f32.mrb[0].mxu0
  %v2316 = vadd.f32 %v2267, %v2315
  %v2317 = vpop.f32.mrb[0].mxu0
  %v2318 = vpop.f32.mrb[0].mxu0
  %v2319 = vadd.f32 %v2270, %v2318
  %v2320 = vpop.f32.mrb[0].mxu0
  %2321 = vmatprep.mubr.bf16.mxu0 %v678
  %2322 = vmatmul.mubr.bf16.gmra.mrb[0].mxu0 %v677
  %v2323 = vpop.f32.mrb[0].mxu0
  %v2324 = vadd.f32 %v2275, %v2323
  %v2325 = vpop.f32.mrb[0].mxu0
  %v2326 = vpop.f32.mrb[0].mxu0
  %v2327 = vadd.f32 %v2278, %v2326
  %v2328 = vpop.f32.mrb[0].mxu0
  %2329 = vdwg.mxu0
  %2330 = vmatprep.subr.bf16.mxu0 0
  %2331 = vmatpush1.bf16.msra.mxu0 %v1666
  %2332 = vmatprep.subr.bf16.mxu0 0
  %2333 = vmatpush1.bf16.msra.mxu0 %v1667
  %2334 = vmatprep.subr.bf16.mxu0 0
  %2335 = vmatpush1.bf16.msra.mxu0 %v1668
  %2336 = vmatprep.subr.bf16.mxu0 0
  %2337 = vmatpush1.bf16.msra.mxu0 %v1669
  %2338 = vmatprep.subr.bf16.mxu0 0
  %2339 = vmatpush1.bf16.msra.mxu0 %v1670
  %2340 = vmatprep.subr.bf16.mxu0 0
  %2341 = vmatpush1.bf16.msra.mxu0 %v1671
  %2342 = vmatprep.subr.bf16.mxu0 0
  %2343 = vmatpush1.bf16.msra.mxu0 %v1672
  %2344 = vmatprep.subr.bf16.mxu0 0
  %2345 = vmatpush1.bf16.msra.mxu0 %v1673
  %2346 = vmatprep.subr.bf16.mxu0 0
  %2347 = vmatpush1.bf16.msra.mxu0 %v1674
  %2348 = vmatprep.subr.bf16.mxu0 0
  %2349 = vmatpush1.bf16.msra.mxu0 %v1675
  %2350 = vmatprep.subr.bf16.mxu0 0
  %2351 = vmatpush1.bf16.msra.mxu0 %v1676
  %2352 = vmatprep.subr.bf16.mxu0 0
  %2353 = vmatpush1.bf16.msra.mxu0 %v1677
  %2354 = vmatprep.subr.bf16.mxu0 0
  %2355 = vmatpush1.bf16.msra.mxu0 %v1678
  %2356 = vmatprep.subr.bf16.mxu0 0
  %2357 = vmatpush1.bf16.msra.mxu0 %v1679
  %2358 = vmatprep.subr.bf16.mxu0 0
  %2359 = vmatpush1.bf16.msra.mxu0 %v1680
  %2360 = vmatprep.subr.bf16.mxu0 0
  %2361 = vmatpush1.bf16.msra.mxu0 %v1681
  %2362 = vmatprep.mubr.bf16.mxu0 %v655
  %2363 = vmatmul.mubr.bf16.gmra.mrb[0].mxu0 %v654
  %v2364 = vpop.f32.mrb[0].mxu0
  %v2365 = vadd.f32 %v2316, %v2364
  %v2366 = vpop.f32.mrb[0].mxu0
  %v2367 = vpop.f32.mrb[0].mxu0
  %v2368 = vadd.f32 %v2319, %v2367
  %v2369 = vpop.f32.mrb[0].mxu0
  %2370 = vmatprep.mubr.bf16.mxu0 %v680
  %2371 = vmatmul.mubr.bf16.gmra.mrb[0].mxu0 %v679
  %v2372 = vpop.f32.mrb[0].mxu0
  %v2373 = vadd.f32 %v2324, %v2372
  %v2374 = vpop.f32.mrb[0].mxu0
  %v2375 = vpop.f32.mrb[0].mxu0
  %v2376 = vadd.f32 %v2327, %v2375
  %v2377 = vpop.f32.mrb[0].mxu0
  %2378 = vdwg.mxu0
  %2379 = vmatprep.subr.bf16.mxu0 0
  %2380 = vmatpush1.bf16.msra.mxu0 %v1682
  %2381 = vmatprep.subr.bf16.mxu0 0
  %2382 = vmatpush1.bf16.msra.mxu0 %v1683
  %2383 = vmatprep.subr.bf16.mxu0 0
  %2384 = vmatpush1.bf16.msra.mxu0 %v1684
  %2385 = vmatprep.subr.bf16.mxu0 0
  %2386 = vmatpush1.bf16.msra.mxu0 %v1685
  %2387 = vmatprep.subr.bf16.mxu0 0
  %2388 = vmatpush1.bf16.msra.mxu0 %v1686
  %2389 = vmatprep.subr.bf16.mxu0 0
  %2390 = vmatpush1.bf16.msra.mxu0 %v1687
  %2391 = vmatprep.subr.bf16.mxu0 0
  %2392 = vmatpush1.bf16.msra.mxu0 %v1688
  %2393 = vmatprep.subr.bf16.mxu0 0
  %2394 = vmatpush1.bf16.msra.mxu0 %v1689
  %2395 = vmatprep.subr.bf16.mxu0 0
  %2396 = vmatpush1.bf16.msra.mxu0 %v1690
  %2397 = vmatprep.subr.bf16.mxu0 0
  %2398 = vmatpush1.bf16.msra.mxu0 %v1691
  %2399 = vmatprep.subr.bf16.mxu0 0
  %2400 = vmatpush1.bf16.msra.mxu0 %v1692
  %2401 = vmatprep.subr.bf16.mxu0 0
  %2402 = vmatpush1.bf16.msra.mxu0 %v1693
  %2403 = vmatprep.subr.bf16.mxu0 0
  %2404 = vmatpush1.bf16.msra.mxu0 %v1694
  %2405 = vmatprep.subr.bf16.mxu0 0
  %2406 = vmatpush1.bf16.msra.mxu0 %v1695
  %2407 = vmatprep.subr.bf16.mxu0 0
  %2408 = vmatpush1.bf16.msra.mxu0 %v1696
  %2409 = vmatprep.subr.bf16.mxu0 0
  %2410 = vmatpush1.bf16.msra.mxu0 %v1697
  %2411 = vmatprep.mubr.bf16.mxu0 %v657
  %2412 = vmatmul.mubr.bf16.gmra.mrb[0].mxu0 %v656
  %v2413 = vpop.f32.mrb[0].mxu0
  %v2414 = vadd.f32 %v2365, %v2413
  %v2415 = vpop.f32.mrb[0].mxu0
  %v2416 = vpop.f32.mrb[0].mxu0
  %v2417 = vadd.f32 %v2368, %v2416
  %v2418 = vpop.f32.mrb[0].mxu0
  %2419 = vmatprep.mubr.bf16.mxu0 %v682
  %2420 = vmatmul.mubr.bf16.gmra.mrb[0].mxu0 %v681
  %v2421 = vpop.f32.mrb[0].mxu0
  %v2422 = vadd.f32 %v2373, %v2421
  %v2423 = vpop.f32.mrb[0].mxu0
  %v2424 = vpop.f32.mrb[0].mxu0
  %v2425 = vadd.f32 %v2376, %v2424
  %v2426 = vpop.f32.mrb[0].mxu0
  %2427 = vdwg.mxu0
  %2428 = vmatprep.subr.bf16.mxu0 0
  %2429 = vmatpush1.bf16.msra.mxu0 %v1698
  %2430 = vmatprep.subr.bf16.mxu0 0
  %2431 = vmatpush1.bf16.msra.mxu0 %v1699
  %2432 = vmatprep.subr.bf16.mxu0 0
  %2433 = vmatpush1.bf16.msra.mxu0 %v1700
  %2434 = vmatprep.subr.bf16.mxu0 0
  %2435 = vmatpush1.bf16.msra.mxu0 %v1701
  %2436 = vmatprep.subr.bf16.mxu0 0
  %2437 = vmatpush1.bf16.msra.mxu0 %v1702
  %2438 = vmatprep.subr.bf16.mxu0 0
  %2439 = vmatpush1.bf16.msra.mxu0 %v1703
  %2440 = vmatprep.subr.bf16.mxu0 0
  %2441 = vmatpush1.bf16.msra.mxu0 %v1704
  %2442 = vmatprep.subr.bf16.mxu0 0
  %2443 = vmatpush1.bf16.msra.mxu0 %v1705
  %2444 = vmatprep.subr.bf16.mxu0 0
  %2445 = vmatpush1.bf16.msra.mxu0 %v1706
  %2446 = vmatprep.subr.bf16.mxu0 0
  %2447 = vmatpush1.bf16.msra.mxu0 %v1707
  %2448 = vmatprep.subr.bf16.mxu0 0
  %2449 = vmatpush1.bf16.msra.mxu0 %v1708
  %2450 = vmatprep.subr.bf16.mxu0 0
  %2451 = vmatpush1.bf16.msra.mxu0 %v1709
  %2452 = vmatprep.subr.bf16.mxu0 0
  %2453 = vmatpush1.bf16.msra.mxu0 %v1710
  %2454 = vmatprep.subr.bf16.mxu0 0
  %2455 = vmatpush1.bf16.msra.mxu0 %v1711
  %2456 = vmatprep.subr.bf16.mxu0 0
  %2457 = vmatpush1.bf16.msra.mxu0 %v1712
  %2458 = vmatprep.subr.bf16.mxu0 0
  %2459 = vmatpush1.bf16.msra.mxu0 %v1713
  %2460 = vmatprep.mubr.bf16.mxu0 %v659
  %2461 = vmatmul.mubr.bf16.gmra.mrb[0].mxu0 %v658
  %v2462 = vpop.f32.mrb[0].mxu0
  %v2463 = vadd.f32 %v2414, %v2462
  %v2464 = vpop.f32.mrb[0].mxu0
  %v2465 = vpop.f32.mrb[0].mxu0
  %v2466 = vadd.f32 %v2417, %v2465
  %v2467 = vpop.f32.mrb[0].mxu0
  %2468 = vmatprep.mubr.bf16.mxu0 %v684
  %2469 = vmatmul.mubr.bf16.gmra.mrb[0].mxu0 %v683
  %v2470 = vpop.f32.mrb[0].mxu0
  %v2471 = vadd.f32 %v2422, %v2470
  %v2472 = vpop.f32.mrb[0].mxu0
  %v2473 = vpop.f32.mrb[0].mxu0
  %v2474 = vadd.f32 %v2425, %v2473
  %v2475 = vpop.f32.mrb[0].mxu0
  %2476 = vdwg.mxu0
  %2477 = vmatprep.subr.bf16.mxu0 0
  %2478 = vmatpush1.bf16.msra.mxu0 %v1714
  %2479 = vmatprep.subr.bf16.mxu0 0
  %2480 = vmatpush1.bf16.msra.mxu0 %v1715
  %2481 = vmatprep.subr.bf16.mxu0 0
  %2482 = vmatpush1.bf16.msra.mxu0 %v1716
  %2483 = vmatprep.subr.bf16.mxu0 0
  %2484 = vmatpush1.bf16.msra.mxu0 %v1717
  %2485 = vmatprep.subr.bf16.mxu0 0
  %2486 = vmatpush1.bf16.msra.mxu0 %v1718
  %2487 = vmatprep.subr.bf16.mxu0 0
  %2488 = vmatpush1.bf16.msra.mxu0 %v1719
  %2489 = vmatprep.subr.bf16.mxu0 0
  %2490 = vmatpush1.bf16.msra.mxu0 %v1720
  %2491 = vmatprep.subr.bf16.mxu0 0
  %2492 = vmatpush1.bf16.msra.mxu0 %v1721
  %2493 = vmatprep.subr.bf16.mxu0 0
  %2494 = vmatpush1.bf16.msra.mxu0 %v1722
  %2495 = vmatprep.subr.bf16.mxu0 0
  %2496 = vmatpush1.bf16.msra.mxu0 %v1723
  %2497 = vmatprep.subr.bf16.mxu0 0
  %2498 = vmatpush1.bf16.msra.mxu0 %v1724
  %2499 = vmatprep.subr.bf16.mxu0 0
  %2500 = vmatpush1.bf16.msra.mxu0 %v1725
  %2501 = vmatprep.subr.bf16.mxu0 0
  %2502 = vmatpush1.bf16.msra.mxu0 %v1726
  %2503 = vmatprep.subr.bf16.mxu0 0
  %2504 = vmatpush1.bf16.msra.mxu0 %v1727
  %2505 = vmatprep.subr.bf16.mxu0 0
  %2506 = vmatpush1.bf16.msra.mxu0 %v1728
  %2507 = vmatprep.subr.bf16.mxu0 0
  %2508 = vmatpush1.bf16.msra.mxu0 %v1729
  %2509 = vmatprep.mubr.bf16.mxu0 %v661
  %2510 = vmatmul.mubr.bf16.gmra.mrb[0].mxu0 %v660
  %v2511 = vpop.f32.mrb[0].mxu0
  %v2512 = vadd.f32 %v2463, %v2511
  %v2513 = vpop.f32.mrb[0].mxu0
  %v2514 = vpop.f32.mrb[0].mxu0
  %v2515 = vadd.f32 %v2466, %v2514
  %v2516 = vpop.f32.mrb[0].mxu0
  %2517 = vmatprep.mubr.bf16.mxu0 %v686
  %2518 = vmatmul.mubr.bf16.gmra.mrb[0].mxu0 %v685
  %v2519 = vpop.f32.mrb[0].mxu0
  %v2520 = vadd.f32 %v2471, %v2519
  %v2521 = vpop.f32.mrb[0].mxu0
  %v2522 = vpop.f32.mrb[0].mxu0
  %v2523 = vadd.f32 %v2474, %v2522
  %v2524 = vpop.f32.mrb[0].mxu0
  %2525 = vdwg.mxu0
  %2526 = vmatprep.subr.bf16.mxu0 0
  %2527 = vmatpush1.bf16.msra.mxu0 %v1730
  %2528 = vmatprep.subr.bf16.mxu0 0
  %2529 = vmatpush1.bf16.msra.mxu0 %v1731
  %2530 = vmatprep.subr.bf16.mxu0 0
  %2531 = vmatpush1.bf16.msra.mxu0 %v1732
  %2532 = vmatprep.subr.bf16.mxu0 0
  %2533 = vmatpush1.bf16.msra.mxu0 %v1733
  %2534 = vmatprep.subr.bf16.mxu0 0
  %2535 = vmatpush1.bf16.msra.mxu0 %v1734
  %2536 = vmatprep.subr.bf16.mxu0 0
  %2537 = vmatpush1.bf16.msra.mxu0 %v1735
  %2538 = vmatprep.subr.bf16.mxu0 0
  %2539 = vmatpush1.bf16.msra.mxu0 %v1736
  %2540 = vmatprep.subr.bf16.mxu0 0
  %2541 = vmatpush1.bf16.msra.mxu0 %v1737
  %2542 = vmatprep.subr.bf16.mxu0 0
  %2543 = vmatpush1.bf16.msra.mxu0 0
  %2544 = vmatprep.subr.bf16.mxu0 0
  %2545 = vmatpush1.bf16.msra.mxu0 0
  %2546 = vmatprep.subr.bf16.mxu0 0
  %2547 = vmatpush1.bf16.msra.mxu0 0
  %2548 = vmatprep.subr.bf16.mxu0 0
  %2549 = vmatpush1.bf16.msra.mxu0 0
  %2550 = vmatprep.subr.bf16.mxu0 0
  %2551 = vmatpush1.bf16.msra.mxu0 0
  %2552 = vmatprep.subr.bf16.mxu0 0
  %2553 = vmatpush1.bf16.msra.mxu0 0
  %2554 = vmatprep.subr.bf16.mxu0 0
  %2555 = vmatpush1.bf16.msra.mxu0 0
  %2556 = vmatprep.subr.bf16.mxu0 0
  %2557 = vmatpush1.bf16.msra.mxu0 0
  %2558 = vmatprep.mubr.bf16.mxu0 0
  %2559 = vmatmul.mubr.bf16.gmra.mrb[0].mxu0 %v662
  %v2560 = vpop.f32.mrb[0].mxu0
  %v2561 = vadd.f32 %v2512, %v2560
  %v2562 = vpop.f32.mrb[0].mxu0
  %v2563 = vpop.f32.mrb[0].mxu0
  %v2564 = vadd.f32 %v2515, %v2563
  %v2565 = vpop.f32.mrb[0].mxu0
  %2566 = vmatprep.mubr.bf16.mxu0 0
  %2567 = vmatmul.mubr.bf16.gmra.mrb[0].mxu0 %v687
  %v2568 = vpop.f32.mrb[0].mxu0
  %v2569 = vadd.f32 %v2520, %v2568
  %v2570 = vpop.f32.mrb[0].mxu0
  %v2571 = vpop.f32.mrb[0].mxu0
  %v2572 = vadd.f32 %v2523, %v2571
  %v2573 = vpop.f32.mrb[0].mxu0
  %2574 = vdwg.mxu0
  %v2575 = vmax.f32 %v2561, 0.0
  %v2576 = vmax.f32 %v2564, 0.0
  %v2577 = vmax.f32 %v2569, 0.0
  %v2578 = vmax.f32 %v2572, 0.0
  %v2579 = vpack.c.bf16 %v2576, %v2575
  %v2580 = vpack.c.bf16 %v2578, %v2577
  %v2581 = vld [vmem:[%s3] sm:$0xf]
  %v2582 = vld [vmem:[%s3 + $0x4] sm:$0xf]
  %v2583 = vld [vmem:[%s3 + $0x8] sm:$0xf]
  %v2584 = vld [vmem:[%s3 + $0xc] sm:$0xf]
  %v2585 = vld [vmem:[%s3 + $0x10] sm:$0xf]
  %v2586 = vld [vmem:[%s3 + $0x14] sm:$0xf]
  %v2587 = vld [vmem:[%s3 + $0x18] sm:$0xf]
  %v2588 = vld [vmem:[%s3 + $0x1c] sm:$0xf]
  %v2589 = vld [vmem:[%s3 + $0x20] sm:$0xf]
  %v2590 = vld [vmem:[%s3 + $0x24] sm:$0xf]
  %v2591 = vld [vmem:[%s3 + $0x28] sm:$0xf]
  %v2592 = vld [vmem:[%s3 + $0x2c] sm:$0xf]
  %v2593 = vld [vmem:[%s3 + $0x30] sm:$0xf]
  %v2594 = vld [vmem:[%s3 + $0x34] sm:$0xf]
  %v2595 = vld [vmem:[%s3 + $0x38] sm:$0xf]
  %v2596 = vld [vmem:[%s3 + $0x3c] sm:$0xf]
  %v2597 = vld [vmem:[%s4] sm:$0x1]
  %v2599 = vlaneseq
  %v2600 = vshrl.u32 %v2599, 7
  %v2601 = vsub.s32 0, %v2600
  %v2602 = vrot.slane %v2597, %v2601
  %v2620 = vunpack.c.l.b16 %v2581
  %v2621 = vunpack.c.l.b16 %v2582
  %v2622 = vunpack.c.l.b16 %v2583
  %v2623 = vunpack.c.l.b16 %v2584
  %v2624 = vunpack.c.l.b16 %v2585
  %v2625 = vunpack.c.l.b16 %v2586
  %v2626 = vunpack.c.l.b16 %v2587
  %v2627 = vunpack.c.l.b16 %v2588
  %v2628 = vunpack.c.l.b16 %v2589
  %v2629 = vunpack.c.l.b16 %v2590
  %v2630 = vunpack.c.l.b16 %v2591
  %v2631 = vunpack.c.l.b16 %v2592
  %v2632 = vunpack.c.l.b16 %v2593
  %v2633 = vunpack.c.l.b16 %v2594
  %v2634 = vunpack.c.l.b16 %v2595
  %v2635 = vunpack.c.l.b16 %v2596
  %v2636 = vpack.c.b16 %v2621, %v2620
  %v2637 = vpack.c.b16 %v2623, %v2622
  %v2638 = vpack.c.b16 %v2625, %v2624
  %v2639 = vpack.c.b16 %v2627, %v2626
  %v2640 = vpack.c.b16 %v2629, %v2628
  %v2641 = vpack.c.b16 %v2631, %v2630
  %v2642 = vpack.c.b16 %v2633, %v2632
  %v2643 = vpack.c.b16 %v2635, %v2634
  %2652 = vmatprep.subr.bf16.mxu0 0
  %2653 = vmatpush1.bf16.msra.mxu0 %v2636
  %2654 = vmatprep.subr.bf16.mxu0 0
  %2655 = vmatpush1.bf16.msra.mxu0 %v2637
  %2656 = vmatprep.subr.bf16.mxu0 0
  %2657 = vmatpush1.bf16.msra.mxu0 %v2638
  %2658 = vmatprep.subr.bf16.mxu0 0
  %2659 = vmatpush1.bf16.msra.mxu0 %v2639
  %2660 = vmatprep.subr.bf16.mxu0 0
  %2661 = vmatpush1.bf16.msra.mxu0 %v2640
  %2662 = vmatprep.subr.bf16.mxu0 0
  %2663 = vmatpush1.bf16.msra.mxu0 %v2641
  %2664 = vmatprep.subr.bf16.mxu0 0
  %2665 = vmatpush1.bf16.msra.mxu0 %v2642
  %2666 = vmatprep.subr.bf16.mxu0 0
  %2667 = vmatpush1.bf16.msra.mxu0 %v2643
  %2668 = vmatprep.subr.bf16.mxu0 0
  %2669 = vmatpush1.bf16.msra.mxu0 0
  %2670 = vmatprep.subr.bf16.mxu0 0
  %2671 = vmatpush1.bf16.msra.mxu0 0
  %2672 = vmatprep.subr.bf16.mxu0 0
  %2673 = vmatpush1.bf16.msra.mxu0 0
  %2674 = vmatprep.subr.bf16.mxu0 0
  %2675 = vmatpush1.bf16.msra.mxu0 0
  %2676 = vmatprep.subr.bf16.mxu0 0
  %2677 = vmatpush1.bf16.msra.mxu0 0
  %2678 = vmatprep.subr.bf16.mxu0 0
  %2679 = vmatpush1.bf16.msra.mxu0 0
  %2680 = vmatprep.subr.bf16.mxu0 0
  %2681 = vmatpush1.bf16.msra.mxu0 0
  %2682 = vmatprep.subr.bf16.mxu0 0
  %2683 = vmatpush1.bf16.msra.mxu0 0
  %2684 = vmatprep.mubr.bf16.mxu0 0
  %2685 = vmatmul.mubr.bf16.gmra.mrb[0].mxu0 %v2579
  %v2686 = vpop.f32.mrb[0].mxu0
  %v2687 = vadd.f32 %v2602, %v2686
  %v2688 = vpop.f32.mrb[0].mxu0
  %v2689 = vpop.f32.mrb[0].mxu0
  %v2690 = vadd.f32 %v2602, %v2689
  %v2691 = vpop.f32.mrb[0].mxu0
  %2692 = vmatprep.mubr.bf16.mxu0 0
  %2693 = vmatmul.mubr.bf16.gmra.mrb[0].mxu0 %v2580
  %v2694 = vpop.f32.mrb[0].mxu0
  %v2695 = vadd.f32 %v2602, %v2694
  %v2696 = vpop.f32.mrb[0].mxu0
  %v2697 = vpop.f32.mrb[0].mxu0
  %v2698 = vadd.f32 %v2602, %v2697
  %v2699 = vpop.f32.mrb[0].mxu0
  %2700 = vdwg.mxu0
  %v2701 = vmax.f32 %v2687, 0.0
  %v2702 = vmax.f32 %v2690, 0.0
  %v2703 = vmax.f32 %v2695, 0.0
  %v2704 = vmax.f32 %v2698, 0.0
  %v2705 = vpack.c.bf16 %v2702, %v2701
  %v2706 = vpack.c.bf16 %v2704, %v2703
  %v2707 = vld [vmem:[%s5] sm:$0xf]
  %v2708 = vld [vmem:[%s5 + $0x4] sm:$0xf]
  %v2709 = vld [vmem:[%s5 + $0x8] sm:$0xf]
  %v2710 = vld [vmem:[%s5 + $0xc] sm:$0xf]
  %v2711 = vld [vmem:[%s5 + $0x10] sm:$0xf]
  %v2712 = vld [vmem:[%s5 + $0x14] sm:$0xf]
  %v2713 = vld [vmem:[%s5 + $0x18] sm:$0xf]
  %v2714 = vld [vmem:[%s5 + $0x1c] sm:$0xf]
  %v2715 = vld [vmem:[%s5 + $0x20] sm:$0xf]
  %v2716 = vld [vmem:[%s5 + $0x24] sm:$0xf]
  %v2717 = vld [vmem:[%s5 + $0x28] sm:$0xf]
  %v2718 = vld [vmem:[%s5 + $0x2c] sm:$0xf]
  %v2719 = vld [vmem:[%s5 + $0x30] sm:$0xf]
  %v2720 = vld [vmem:[%s5 + $0x34] sm:$0xf]
  %v2721 = vld [vmem:[%s5 + $0x38] sm:$0xf]
  %v2722 = vld [vmem:[%s5 + $0x3c] sm:$0xf]
  %v2723 = vld [vmem:[%s6] sm:$0x1]
  %v2725 = vlaneseq
  %v2726 = vshrl.u32 %v2725, 7
  %v2727 = vsub.s32 0, %v2726
  %v2728 = vrot.slane %v2723, %v2727
  %v2746 = vunpack.c.l.b16 %v2707
  %v2747 = vunpack.c.l.b16 %v2708
  %v2748 = vunpack.c.l.b16 %v2709
  %v2749 = vunpack.c.l.b16 %v2710
  %v2750 = vunpack.c.l.b16 %v2711
  %v2751 = vunpack.c.l.b16 %v2712
  %v2752 = vunpack.c.l.b16 %v2713
  %v2753 = vunpack.c.l.b16 %v2714
  %v2754 = vunpack.c.l.b16 %v2715
  %v2755 = vunpack.c.l.b16 %v2716
  %v2756 = vunpack.c.l.b16 %v2717
  %v2757 = vunpack.c.l.b16 %v2718
  %v2758 = vunpack.c.l.b16 %v2719
  %v2759 = vunpack.c.l.b16 %v2720
  %v2760 = vunpack.c.l.b16 %v2721
  %v2761 = vunpack.c.l.b16 %v2722
  %v2762 = vpack.c.b16 %v2747, %v2746
  %v2763 = vpack.c.b16 %v2749, %v2748
  %v2764 = vpack.c.b16 %v2751, %v2750
  %v2765 = vpack.c.b16 %v2753, %v2752
  %v2766 = vpack.c.b16 %v2755, %v2754
  %v2767 = vpack.c.b16 %v2757, %v2756
  %v2768 = vpack.c.b16 %v2759, %v2758
  %v2769 = vpack.c.b16 %v2761, %v2760
  %2778 = vmatprep.subr.bf16.mxu0 0
  %2779 = vmatpush1.bf16.msra.mxu0 %v2762
  %2780 = vmatprep.subr.bf16.mxu0 0
  %2781 = vmatpush1.bf16.msra.mxu0 %v2763
  %2782 = vmatprep.subr.bf16.mxu0 0
  %2783 = vmatpush1.bf16.msra.mxu0 %v2764
  %2784 = vmatprep.subr.bf16.mxu0 0
  %2785 = vmatpush1.bf16.msra.mxu0 %v2765
  %2786 = vmatprep.subr.bf16.mxu0 0
  %2787 = vmatpush1.bf16.msra.mxu0 %v2766
  %2788 = vmatprep.subr.bf16.mxu0 0
  %2789 = vmatpush1.bf16.msra.mxu0 %v2767
  %2790 = vmatprep.subr.bf16.mxu0 0
  %2791 = vmatpush1.bf16.msra.mxu0 %v2768
  %2792 = vmatprep.subr.bf16.mxu0 0
  %2793 = vmatpush1.bf16.msra.mxu0 %v2769
  %2794 = vmatprep.subr.bf16.mxu0 0
  %2795 = vmatpush1.bf16.msra.mxu0 0
  %2796 = vmatprep.subr.bf16.mxu0 0
  %2797 = vmatpush1.bf16.msra.mxu0 0
  %2798 = vmatprep.subr.bf16.mxu0 0
  %2799 = vmatpush1.bf16.msra.mxu0 0
  %2800 = vmatprep.subr.bf16.mxu0 0
  %2801 = vmatpush1.bf16.msra.mxu0 0
  %2802 = vmatprep.subr.bf16.mxu0 0
  %2803 = vmatpush1.bf16.msra.mxu0 0
  %2804 = vmatprep.subr.bf16.mxu0 0
  %2805 = vmatpush1.bf16.msra.mxu0 0
  %2806 = vmatprep.subr.bf16.mxu0 0
  %2807 = vmatpush1.bf16.msra.mxu0 0
  %2808 = vmatprep.subr.bf16.mxu0 0
  %2809 = vmatpush1.bf16.msra.mxu0 0
  %2810 = vmatprep.mubr.bf16.mxu0 0
  %2811 = vmatmul.mubr.bf16.gmra.mrb[0].mxu0 %v2705
  %v2812 = vpop.f32.mrb[0].mxu0
  %v2813 = vadd.f32 %v2728, %v2812
  %v2814 = vpop.f32.mrb[0].mxu0
  %v2815 = vpop.f32.mrb[0].mxu0
  %v2816 = vadd.f32 %v2728, %v2815
  %v2817 = vpop.f32.mrb[0].mxu0
  %2818 = vmatprep.mubr.bf16.mxu0 0
  %2819 = vmatmul.mubr.bf16.gmra.mrb[0].mxu0 %v2706
  %v2820 = vpop.f32.mrb[0].mxu0
  %v2821 = vadd.f32 %v2728, %v2820
  %v2822 = vpop.f32.mrb[0].mxu0
  %v2823 = vpop.f32.mrb[0].mxu0
  %v2824 = vadd.f32 %v2728, %v2823
  %v2825 = vpop.f32.mrb[0].mxu0
  %2826 = vdwg.mxu0
  %2827 = vst [vmem:[%s7] sm:$0xff] %v2813
  %2828 = vst [vmem:[%s7 + $0x8] sm:$0xff] %v2816
  %2829 = vst [vmem:[%s7 + $0x10] sm:$0xff] %v2821
  %2830 = vst [vmem:[%s7 + $0x18] sm:$0xff] %v2824
  // Predicated region
  $region30: #{net_forward.5} parent=0 // pred_check
    _
  $region31: #{net_forward.5} parent=0 // pred_check_branch
    %2832 = sbr.rel (0) target = $region33
  $region32: #{net_forward.5} parent=0 // pred_region
    _
  $region33: #{net_forward.5} parent=0 // pred_fallthru
    _
  // Predicated region
  $region34: #{net_forward.5} parent=0 // pred_check
    _
  $region35: #{net_forward.5} parent=0 // pred_check_branch
    %2834 = sbr.rel (0) target = $region37
  $region36: #{net_forward.5} parent=0 // pred_region
    _
  $region37: #{net_forward.5} parent=0 // pred_fallthru
    _

</llo_original>
